<compile_context>
chip_gen: v7x
topology: tpu7x:2x2x1
jax: 0.10.0
libtpu: 0.0.40
codegen_flags: <defaults>
</compile_context>

<pallas_src>
import jax
import jax.numpy as jnp
from jax.experimental import pallas as pl
from jax.experimental.pallas import tpu as pltpu

KH = 5
KW = 5
PAD = 2
EPS = 1e-3
LANE = 128  # channels per grid step -> (1,14,14,128) f32 acc ~ 24.5 vregs


def dwconv_bn_kernel(x_ref, w_ref, gamma_ref, beta_ref, o_ref):
    # x_ref:     (N, H+4, W+4, 128)  pre-padded input slab (channels on lanes)
    # w_ref:     (KH*KW, 128)        depthwise taps
    # gamma_ref: (1, 128)            BN scale
    # beta_ref:  (1, 128)            BN shift
    # o_ref:     (N, H, W, 128)      output slab
    N, Hp, Wp, Ct = x_ref.shape
    H = Hp - (KH - 1)
    W = Wp - (KW - 1)

    # Load all 25 taps once from VMEM.
    w_all = w_ref[...].astype(jnp.float32)  # (25, Ct)

    # Depthwise 5x5 conv: each tap's window is sliced directly from x_ref
    # (no materialized shifted copies); acc is initialized from tap (0,0).
    # acc stays in vregs for the whole loop -> pure VPU work, no spill stores.
    acc = x_ref[:, 0:H, 0:W, :].astype(jnp.float32) * w_all[0][None, None, None, :]
    for k in range(1, KH * KW):
        dy, dx = divmod(k, KW)
        patch = x_ref[:, dy:dy + H, dx:dx + W, :].astype(jnp.float32)
        acc = acc + patch * w_all[k][None, None, None, :]

    # BatchNorm2d (training mode, biased batch variance), computed while acc is
    # still register-resident. Centered two-pass form for numerical robustness.
    count = float(N * H * W)
    mean = jnp.sum(acc, axis=(0, 1, 2), keepdims=True) / count        # (1,1,1,Ct)
    centered = acc - mean
    var = jnp.sum(centered * centered, axis=(0, 1, 2), keepdims=True) / count
    inv = jax.lax.rsqrt(var + EPS)

    gamma = gamma_ref[0, :][None, None, None, :]
    beta = beta_ref[0, :][None, None, None, :]
    # Single fused normalize + affine + store (lane-dense 128-wide output).
    o_ref[...] = (centered * (gamma * inv) + beta).astype(o_ref.dtype)


@jax.jit
def dwconv_bn(x_nchw, w_oihw, gamma, beta):
    """x_nchw: (N, C, H, W); w_oihw: (C, 1, KH, KW) depthwise; returns (N, C, H, W)."""
    N, C, H, W = x_nchw.shape

    # Pad channels to an even number of 128-lane tiles (even -> clean
    # 2-TensorCore megacore split on v7x). 1344 -> 1536 = 12 * 128.
    n_tiles = pl.cdiv(C, LANE)
    if n_tiles % 2:
        n_tiles += 1
    Cp = n_tiles * LANE
    pad_c = Cp - C

    # NCHW -> NHWC, spatial + channel zero-pad (fused under this jit).
    x_nhwc = jnp.transpose(x_nchw, (0, 2, 3, 1))
    x_pad = jnp.pad(x_nhwc, ((0, 0), (PAD, PAD), (PAD, PAD), (0, pad_c)))

    # (C,1,KH,KW) -> (KH*KW, Cp) so channels live on lanes.
    w_kc = jnp.transpose(w_oihw.reshape(C, KH * KW), (1, 0))
    w_kc = jnp.pad(w_kc, ((0, 0), (0, pad_c)))

    gamma2 = jnp.pad(gamma.reshape(1, C), ((0, 0), (0, pad_c)), constant_values=1.0)
    beta2 = jnp.pad(beta.reshape(1, C), ((0, 0), (0, pad_c)))

    Hp, Wp = H + 2 * PAD, W + 2 * PAD
    out_nhwc = pl.pallas_call(
        dwconv_bn_kernel,
        out_shape=jax.ShapeDtypeStruct((N, H, W, Cp), x_nchw.dtype),
        grid=(n_tiles,),
        in_specs=[
            pl.BlockSpec((N, Hp, Wp, LANE), lambda i: (0, 0, 0, i)),
            pl.BlockSpec((KH * KW, LANE), lambda i: (0, i)),
            pl.BlockSpec((1, LANE), lambda i: (0, i)),
            pl.BlockSpec((1, LANE), lambda i: (0, i)),
        ],
        out_specs=pl.BlockSpec((N, H, W, LANE), lambda i: (0, 0, 0, i)),
        compiler_params=pltpu.CompilerParams(
            dimension_semantics=("parallel",),
            vmem_limit_bytes=16 << 20,
        ),
    )(x_pad, w_kc, gamma2, beta2)

    # Drop padded channels, back to NCHW (fused under this jit).
    return jnp.transpose(out_nhwc[..., :C], (0, 3, 1, 2))


def ref_forward(x_nchw, w_oihw, gamma, beta):
    """Pure-JAX reference (lax depthwise conv + training-mode BN)."""
    C = x_nchw.shape[1]
    y = jax.lax.conv_general_dilated(
        x_nchw, w_oihw,
        window_strides=(1, 1),
        padding=((PAD, PAD), (PAD, PAD)),
        dimension_numbers=("NCHW", "OIHW", "NCHW"),
        feature_group_count=C,
    )
    mean = jnp.mean(y, axis=(0, 2, 3), keepdims=True)
    var = jnp.var(y, axis=(0, 2, 3), keepdims=True)  # biased, matches BN normalization
    return (y - mean) * jax.lax.rsqrt(var + EPS) * gamma.reshape(1, -1, 1, 1) \
        + beta.reshape(1, -1, 1, 1)


if __name__ == "__main__":
    # Module-consistent shapes: x544 = randn(1, 1344, 14, 14).
    N, C, H, W = 1, 1344, 14, 14

    key = jax.random.PRNGKey(0)
    kx, kw = jax.random.split(key)

    x = jax.random.normal(kx, (N, C, H, W), dtype=jnp.float32)
    # Depthwise conv weight (C, 1, KH, KW); deterministic init.
    w = jax.random.normal(kw, (C, 1, KH, KW), dtype=jnp.float32) * 0.05
    # BatchNorm affine params at PyTorch defaults (weight=1, bias=0).
    gamma = jnp.ones((C,), dtype=jnp.float32)
    beta = jnp.zeros((C,), dtype=jnp.float32)

    out = dwconv_bn(x, w, gamma, beta)
    out = jax.block_until_ready(out)

    ref = jax.block_until_ready(ref_forward(x, w, gamma, beta))
    assert out.shape == (N, C, H, W)
    assert jnp.allclose(out, ref, atol=1e-3, rtol=1e-3), \
        f"max abs err = {jnp.max(jnp.abs(out - ref))}"

    print("KERNEL_OK")
</pallas_src>

<mosaic_0001>
module attributes {stable_mosaic.version = 11 : i64} {
  func.func @dwconv_bn_kernel(%arg0: i32, %arg1: memref<1x18x18x128xf32, #tpu.memory_space<vmem>>, %arg2: memref<25x128xf32, #tpu.memory_space<vmem>>, %arg3: memref<1x128xf32, #tpu.memory_space<vmem>>, %arg4: memref<1x128xf32, #tpu.memory_space<vmem>>, %arg5: memref<1x14x14x128xf32, #tpu.memory_space<vmem>>) attributes {dimension_semantics = [#tpu.dimension_semantics<parallel>], iteration_bounds = array<i64: 12>, scalar_prefetch = 0 : i64, scratch_operands = 0 : i64, tpu.core_type = #tpu.core_type<tc>, window_params = [{transform_indices = @transform_0, window_bounds = array<i64: 1, 18, 18, 128>}, {transform_indices = @transform_1, window_bounds = array<i64: 25, 128>}, {transform_indices = @transform_2, window_bounds = array<i64: 1, 128>}, {transform_indices = @transform_3, window_bounds = array<i64: 1, 128>}, {transform_indices = @transform_4, window_bounds = array<i64: 1, 14, 14, 128>}]} {
    %c0 = arith.constant 0 : index
    %c0_0 = arith.constant 0 : index
    %0 = vector.load %arg2[%c0, %c0_0] : memref<25x128xf32, #tpu.memory_space<vmem>>, vector<25x128xf32>
    %c0_1 = arith.constant 0 : index
    %c0_2 = arith.constant 0 : index
    %c0_3 = arith.constant 0 : index
    %c0_4 = arith.constant 0 : index
    %1 = vector.load %arg1[%c0_1, %c0_2, %c0_3, %c0_4] : memref<1x18x18x128xf32, #tpu.memory_space<vmem>>, vector<1x14x14x128xf32>
    %2 = vector.extract_strided_slice %0 {offsets = [0, 0], sizes = [1, 128], strides = [1, 1]} : vector<25x128xf32> to vector<1x128xf32>
    %3 = vector.shape_cast %2 : vector<1x128xf32> to vector<128xf32>
    %4 = vector.shape_cast %3 : vector<128xf32> to vector<1x1x1x128xf32>
    %5 = vector.broadcast %4 : vector<1x1x1x128xf32> to vector<1x14x14x128xf32>
    %6 = arith.mulf %1, %5 : vector<1x14x14x128xf32>
    %c0_5 = arith.constant 0 : index
    %c0_6 = arith.constant 0 : index
    %c1 = arith.constant 1 : index
    %c0_7 = arith.constant 0 : index
    %7 = vector.load %arg1[%c0_5, %c0_6, %c1, %c0_7] : memref<1x18x18x128xf32, #tpu.memory_space<vmem>>, vector<1x14x14x128xf32>
    %8 = vector.extract_strided_slice %0 {offsets = [1, 0], sizes = [1, 128], strides = [1, 1]} : vector<25x128xf32> to vector<1x128xf32>
    %9 = vector.shape_cast %8 : vector<1x128xf32> to vector<128xf32>
    %10 = vector.shape_cast %9 : vector<128xf32> to vector<1x1x1x128xf32>
    %11 = vector.broadcast %10 : vector<1x1x1x128xf32> to vector<1x14x14x128xf32>
    %12 = arith.mulf %7, %11 : vector<1x14x14x128xf32>
    %13 = arith.addf %6, %12 : vector<1x14x14x128xf32>
    %c0_8 = arith.constant 0 : index
    %c0_9 = arith.constant 0 : index
    %c2 = arith.constant 2 : index
    %c0_10 = arith.constant 0 : index
    %14 = vector.load %arg1[%c0_8, %c0_9, %c2, %c0_10] : memref<1x18x18x128xf32, #tpu.memory_space<vmem>>, vector<1x14x14x128xf32>
    %15 = vector.extract_strided_slice %0 {offsets = [2, 0], sizes = [1, 128], strides = [1, 1]} : vector<25x128xf32> to vector<1x128xf32>
    %16 = vector.shape_cast %15 : vector<1x128xf32> to vector<128xf32>
    %17 = vector.shape_cast %16 : vector<128xf32> to vector<1x1x1x128xf32>
    %18 = vector.broadcast %17 : vector<1x1x1x128xf32> to vector<1x14x14x128xf32>
    %19 = arith.mulf %14, %18 : vector<1x14x14x128xf32>
    %20 = arith.addf %13, %19 : vector<1x14x14x128xf32>
    %c0_11 = arith.constant 0 : index
    %c0_12 = arith.constant 0 : index
    %c3 = arith.constant 3 : index
    %c0_13 = arith.constant 0 : index
    %21 = vector.load %arg1[%c0_11, %c0_12, %c3, %c0_13] : memref<1x18x18x128xf32, #tpu.memory_space<vmem>>, vector<1x14x14x128xf32>
    %22 = vector.extract_strided_slice %0 {offsets = [3, 0], sizes = [1, 128], strides = [1, 1]} : vector<25x128xf32> to vector<1x128xf32>
    %23 = vector.shape_cast %22 : vector<1x128xf32> to vector<128xf32>
    %24 = vector.shape_cast %23 : vector<128xf32> to vector<1x1x1x128xf32>
    %25 = vector.broadcast %24 : vector<1x1x1x128xf32> to vector<1x14x14x128xf32>
    %26 = arith.mulf %21, %25 : vector<1x14x14x128xf32>
    %27 = arith.addf %20, %26 : vector<1x14x14x128xf32>
    %c0_14 = arith.constant 0 : index
    %c0_15 = arith.constant 0 : index
    %c4 = arith.constant 4 : index
    %c0_16 = arith.constant 0 : index
    %28 = vector.load %arg1[%c0_14, %c0_15, %c4, %c0_16] : memref<1x18x18x128xf32, #tpu.memory_space<vmem>>, vector<1x14x14x128xf32>
    %29 = vector.extract_strided_slice %0 {offsets = [4, 0], sizes = [1, 128], strides = [1, 1]} : vector<25x128xf32> to vector<1x128xf32>
    %30 = vector.shape_cast %29 : vector<1x128xf32> to vector<128xf32>
    %31 = vector.shape_cast %30 : vector<128xf32> to vector<1x1x1x128xf32>
    %32 = vector.broadcast %31 : vector<1x1x1x128xf32> to vector<1x14x14x128xf32>
    %33 = arith.mulf %28, %32 : vector<1x14x14x128xf32>
    %34 = arith.addf %27, %33 : vector<1x14x14x128xf32>
    %c0_17 = arith.constant 0 : index
    %c1_18 = arith.constant 1 : index
    %c0_19 = arith.constant 0 : index
    %c0_20 = arith.constant 0 : index
    %35 = vector.load %arg1[%c0_17, %c1_18, %c0_19, %c0_20] : memref<1x18x18x128xf32, #tpu.memory_space<vmem>>, vector<1x14x14x128xf32>
    %36 = vector.extract_strided_slice %0 {offsets = [5, 0], sizes = [1, 128], strides = [1, 1]} : vector<25x128xf32> to vector<1x128xf32>
    %37 = vector.shape_cast %36 : vector<1x128xf32> to vector<128xf32>
    %38 = vector.shape_cast %37 : vector<128xf32> to vector<1x1x1x128xf32>
    %39 = vector.broadcast %38 : vector<1x1x1x128xf32> to vector<1x14x14x128xf32>
    %40 = arith.mulf %35, %39 : vector<1x14x14x128xf32>
    %41 = arith.addf %34, %40 : vector<1x14x14x128xf32>
    %c0_21 = arith.constant 0 : index
    %c1_22 = arith.constant 1 : index
    %c1_23 = arith.constant 1 : index
    %c0_24 = arith.constant 0 : index
    %42 = vector.load %arg1[%c0_21, %c1_22, %c1_23, %c0_24] : memref<1x18x18x128xf32, #tpu.memory_space<vmem>>, vector<1x14x14x128xf32>
    %43 = vector.extract_strided_slice %0 {offsets = [6, 0], sizes = [1, 128], strides = [1, 1]} : vector<25x128xf32> to vector<1x128xf32>
    %44 = vector.shape_cast %43 : vector<1x128xf32> to vector<128xf32>
    %45 = vector.shape_cast %44 : vector<128xf32> to vector<1x1x1x128xf32>
    %46 = vector.broadcast %45 : vector<1x1x1x128xf32> to vector<1x14x14x128xf32>
    %47 = arith.mulf %42, %46 : vector<1x14x14x128xf32>
    %48 = arith.addf %41, %47 : vector<1x14x14x128xf32>
    %c0_25 = arith.constant 0 : index
    %c1_26 = arith.constant 1 : index
    %c2_27 = arith.constant 2 : index
    %c0_28 = arith.constant 0 : index
    %49 = vector.load %arg1[%c0_25, %c1_26, %c2_27, %c0_28] : memref<1x18x18x128xf32, #tpu.memory_space<vmem>>, vector<1x14x14x128xf32>
    %50 = vector.extract_strided_slice %0 {offsets = [7, 0], sizes = [1, 128], strides = [1, 1]} : vector<25x128xf32> to vector<1x128xf32>
    %51 = vector.shape_cast %50 : vector<1x128xf32> to vector<128xf32>
    %52 = vector.shape_cast %51 : vector<128xf32> to vector<1x1x1x128xf32>
    %53 = vector.broadcast %52 : vector<1x1x1x128xf32> to vector<1x14x14x128xf32>
    %54 = arith.mulf %49, %53 : vector<1x14x14x128xf32>
    %55 = arith.addf %48, %54 : vector<1x14x14x128xf32>
    %c0_29 = arith.constant 0 : index
    %c1_30 = arith.constant 1 : index
    %c3_31 = arith.constant 3 : index
    %c0_32 = arith.constant 0 : index
    %56 = vector.load %arg1[%c0_29, %c1_30, %c3_31, %c0_32] : memref<1x18x18x128xf32, #tpu.memory_space<vmem>>, vector<1x14x14x128xf32>
    %57 = vector.extract_strided_slice %0 {offsets = [8, 0], sizes = [1, 128], strides = [1, 1]} : vector<25x128xf32> to vector<1x128xf32>
    %58 = vector.shape_cast %57 : vector<1x128xf32> to vector<128xf32>
    %59 = vector.shape_cast %58 : vector<128xf32> to vector<1x1x1x128xf32>
    %60 = vector.broadcast %59 : vector<1x1x1x128xf32> to vector<1x14x14x128xf32>
    %61 = arith.mulf %56, %60 : vector<1x14x14x128xf32>
    %62 = arith.addf %55, %61 : vector<1x14x14x128xf32>
    %c0_33 = arith.constant 0 : index
    %c1_34 = arith.constant 1 : index
    %c4_35 = arith.constant 4 : index
    %c0_36 = arith.constant 0 : index
    %63 = vector.load %arg1[%c0_33, %c1_34, %c4_35, %c0_36] : memref<1x18x18x128xf32, #tpu.memory_space<vmem>>, vector<1x14x14x128xf32>
    %64 = vector.extract_strided_slice %0 {offsets = [9, 0], sizes = [1, 128], strides = [1, 1]} : vector<25x128xf32> to vector<1x128xf32>
    %65 = vector.shape_cast %64 : vector<1x128xf32> to vector<128xf32>
    %66 = vector.shape_cast %65 : vector<128xf32> to vector<1x1x1x128xf32>
    %67 = vector.broadcast %66 : vector<1x1x1x128xf32> to vector<1x14x14x128xf32>
    %68 = arith.mulf %63, %67 : vector<1x14x14x128xf32>
    %69 = arith.addf %62, %68 : vector<1x14x14x128xf32>
    %c0_37 = arith.constant 0 : index
    %c2_38 = arith.constant 2 : index
    %c0_39 = arith.constant 0 : index
    %c0_40 = arith.constant 0 : index
    %70 = vector.load %arg1[%c0_37, %c2_38, %c0_39, %c0_40] : memref<1x18x18x128xf32, #tpu.memory_space<vmem>>, vector<1x14x14x128xf32>
    %71 = vector.extract_strided_slice %0 {offsets = [10, 0], sizes = [1, 128], strides = [1, 1]} : vector<25x128xf32> to vector<1x128xf32>
    %72 = vector.shape_cast %71 : vector<1x128xf32> to vector<128xf32>
    %73 = vector.shape_cast %72 : vector<128xf32> to vector<1x1x1x128xf32>
    %74 = vector.broadcast %73 : vector<1x1x1x128xf32> to vector<1x14x14x128xf32>
    %75 = arith.mulf %70, %74 : vector<1x14x14x128xf32>
    %76 = arith.addf %69, %75 : vector<1x14x14x128xf32>
    %c0_41 = arith.constant 0 : index
    %c2_42 = arith.constant 2 : index
    %c1_43 = arith.constant 1 : index
    %c0_44 = arith.constant 0 : index
    %77 = vector.load %arg1[%c0_41, %c2_42, %c1_43, %c0_44] : memref<1x18x18x128xf32, #tpu.memory_space<vmem>>, vector<1x14x14x128xf32>
    %78 = vector.extract_strided_slice %0 {offsets = [11, 0], sizes = [1, 128], strides = [1, 1]} : vector<25x128xf32> to vector<1x128xf32>
    %79 = vector.shape_cast %78 : vector<1x128xf32> to vector<128xf32>
    %80 = vector.shape_cast %79 : vector<128xf32> to vector<1x1x1x128xf32>
    %81 = vector.broadcast %80 : vector<1x1x1x128xf32> to vector<1x14x14x128xf32>
    %82 = arith.mulf %77, %81 : vector<1x14x14x128xf32>
    %83 = arith.addf %76, %82 : vector<1x14x14x128xf32>
    %c0_45 = arith.constant 0 : index
    %c2_46 = arith.constant 2 : index
    %c2_47 = arith.constant 2 : index
    %c0_48 = arith.constant 0 : index
    %84 = vector.load %arg1[%c0_45, %c2_46, %c2_47, %c0_48] : memref<1x18x18x128xf32, #tpu.memory_space<vmem>>, vector<1x14x14x128xf32>
    %85 = vector.extract_strided_slice %0 {offsets = [12, 0], sizes = [1, 128], strides = [1, 1]} : vector<25x128xf32> to vector<1x128xf32>
    %86 = vector.shape_cast %85 : vector<1x128xf32> to vector<128xf32>
    %87 = vector.shape_cast %86 : vector<128xf32> to vector<1x1x1x128xf32>
    %88 = vector.broadcast %87 : vector<1x1x1x128xf32> to vector<1x14x14x128xf32>
    %89 = arith.mulf %84, %88 : vector<1x14x14x128xf32>
    %90 = arith.addf %83, %89 : vector<1x14x14x128xf32>
    %c0_49 = arith.constant 0 : index
    %c2_50 = arith.constant 2 : index
    %c3_51 = arith.constant 3 : index
    %c0_52 = arith.constant 0 : index
    %91 = vector.load %arg1[%c0_49, %c2_50, %c3_51, %c0_52] : memref<1x18x18x128xf32, #tpu.memory_space<vmem>>, vector<1x14x14x128xf32>
    %92 = vector.extract_strided_slice %0 {offsets = [13, 0], sizes = [1, 128], strides = [1, 1]} : vector<25x128xf32> to vector<1x128xf32>
    %93 = vector.shape_cast %92 : vector<1x128xf32> to vector<128xf32>
    %94 = vector.shape_cast %93 : vector<128xf32> to vector<1x1x1x128xf32>
    %95 = vector.broadcast %94 : vector<1x1x1x128xf32> to vector<1x14x14x128xf32>
    %96 = arith.mulf %91, %95 : vector<1x14x14x128xf32>
    %97 = arith.addf %90, %96 : vector<1x14x14x128xf32>
    %c0_53 = arith.constant 0 : index
    %c2_54 = arith.constant 2 : index
    %c4_55 = arith.constant 4 : index
    %c0_56 = arith.constant 0 : index
    %98 = vector.load %arg1[%c0_53, %c2_54, %c4_55, %c0_56] : memref<1x18x18x128xf32, #tpu.memory_space<vmem>>, vector<1x14x14x128xf32>
    %99 = vector.extract_strided_slice %0 {offsets = [14, 0], sizes = [1, 128], strides = [1, 1]} : vector<25x128xf32> to vector<1x128xf32>
    %100 = vector.shape_cast %99 : vector<1x128xf32> to vector<128xf32>
    %101 = vector.shape_cast %100 : vector<128xf32> to vector<1x1x1x128xf32>
    %102 = vector.broadcast %101 : vector<1x1x1x128xf32> to vector<1x14x14x128xf32>
    %103 = arith.mulf %98, %102 : vector<1x14x14x128xf32>
    %104 = arith.addf %97, %103 : vector<1x14x14x128xf32>
    %c0_57 = arith.constant 0 : index
    %c3_58 = arith.constant 3 : index
    %c0_59 = arith.constant 0 : index
    %c0_60 = arith.constant 0 : index
    %105 = vector.load %arg1[%c0_57, %c3_58, %c0_59, %c0_60] : memref<1x18x18x128xf32, #tpu.memory_space<vmem>>, vector<1x14x14x128xf32>
    %106 = vector.extract_strided_slice %0 {offsets = [15, 0], sizes = [1, 128], strides = [1, 1]} : vector<25x128xf32> to vector<1x128xf32>
    %107 = vector.shape_cast %106 : vector<1x128xf32> to vector<128xf32>
    %108 = vector.shape_cast %107 : vector<128xf32> to vector<1x1x1x128xf32>
    %109 = vector.broadcast %108 : vector<1x1x1x128xf32> to vector<1x14x14x128xf32>
    %110 = arith.mulf %105, %109 : vector<1x14x14x128xf32>
    %111 = arith.addf %104, %110 : vector<1x14x14x128xf32>
    %c0_61 = arith.constant 0 : index
    %c3_62 = arith.constant 3 : index
    %c1_63 = arith.constant 1 : index
    %c0_64 = arith.constant 0 : index
    %112 = vector.load %arg1[%c0_61, %c3_62, %c1_63, %c0_64] : memref<1x18x18x128xf32, #tpu.memory_space<vmem>>, vector<1x14x14x128xf32>
    %113 = vector.extract_strided_slice %0 {offsets = [16, 0], sizes = [1, 128], strides = [1, 1]} : vector<25x128xf32> to vector<1x128xf32>
    %114 = vector.shape_cast %113 : vector<1x128xf32> to vector<128xf32>
    %115 = vector.shape_cast %114 : vector<128xf32> to vector<1x1x1x128xf32>
    %116 = vector.broadcast %115 : vector<1x1x1x128xf32> to vector<1x14x14x128xf32>
    %117 = arith.mulf %112, %116 : vector<1x14x14x128xf32>
    %118 = arith.addf %111, %117 : vector<1x14x14x128xf32>
    %c0_65 = arith.constant 0 : index
    %c3_66 = arith.constant 3 : index
    %c2_67 = arith.constant 2 : index
    %c0_68 = arith.constant 0 : index
    %119 = vector.load %arg1[%c0_65, %c3_66, %c2_67, %c0_68] : memref<1x18x18x128xf32, #tpu.memory_space<vmem>>, vector<1x14x14x128xf32>
    %120 = vector.extract_strided_slice %0 {offsets = [17, 0], sizes = [1, 128], strides = [1, 1]} : vector<25x128xf32> to vector<1x128xf32>
    %121 = vector.shape_cast %120 : vector<1x128xf32> to vector<128xf32>
    %122 = vector.shape_cast %121 : vector<128xf32> to vector<1x1x1x128xf32>
    %123 = vector.broadcast %122 : vector<1x1x1x128xf32> to vector<1x14x14x128xf32>
    %124 = arith.mulf %119, %123 : vector<1x14x14x128xf32>
    %125 = arith.addf %118, %124 : vector<1x14x14x128xf32>
    %c0_69 = arith.constant 0 : index
    %c3_70 = arith.constant 3 : index
    %c3_71 = arith.constant 3 : index
    %c0_72 = arith.constant 0 : index
    %126 = vector.load %arg1[%c0_69, %c3_70, %c3_71, %c0_72] : memref<1x18x18x128xf32, #tpu.memory_space<vmem>>, vector<1x14x14x128xf32>
    %127 = vector.extract_strided_slice %0 {offsets = [18, 0], sizes = [1, 128], strides = [1, 1]} : vector<25x128xf32> to vector<1x128xf32>
    %128 = vector.shape_cast %127 : vector<1x128xf32> to vector<128xf32>
    %129 = vector.shape_cast %128 : vector<128xf32> to vector<1x1x1x128xf32>
    %130 = vector.broadcast %129 : vector<1x1x1x128xf32> to vector<1x14x14x128xf32>
    %131 = arith.mulf %126, %130 : vector<1x14x14x128xf32>
    %132 = arith.addf %125, %131 : vector<1x14x14x128xf32>
    %c0_73 = arith.constant 0 : index
    %c3_74 = arith.constant 3 : index
    %c4_75 = arith.constant 4 : index
    %c0_76 = arith.constant 0 : index
    %133 = vector.load %arg1[%c0_73, %c3_74, %c4_75, %c0_76] : memref<1x18x18x128xf32, #tpu.memory_space<vmem>>, vector<1x14x14x128xf32>
    %134 = vector.extract_strided_slice %0 {offsets = [19, 0], sizes = [1, 128], strides = [1, 1]} : vector<25x128xf32> to vector<1x128xf32>
    %135 = vector.shape_cast %134 : vector<1x128xf32> to vector<128xf32>
    %136 = vector.shape_cast %135 : vector<128xf32> to vector<1x1x1x128xf32>
    %137 = vector.broadcast %136 : vector<1x1x1x128xf32> to vector<1x14x14x128xf32>
    %138 = arith.mulf %133, %137 : vector<1x14x14x128xf32>
    %139 = arith.addf %132, %138 : vector<1x14x14x128xf32>
    %c0_77 = arith.constant 0 : index
    %c4_78 = arith.constant 4 : index
    %c0_79 = arith.constant 0 : index
    %c0_80 = arith.constant 0 : index
    %140 = vector.load %arg1[%c0_77, %c4_78, %c0_79, %c0_80] : memref<1x18x18x128xf32, #tpu.memory_space<vmem>>, vector<1x14x14x128xf32>
    %141 = vector.extract_strided_slice %0 {offsets = [20, 0], sizes = [1, 128], strides = [1, 1]} : vector<25x128xf32> to vector<1x128xf32>
    %142 = vector.shape_cast %141 : vector<1x128xf32> to vector<128xf32>
    %143 = vector.shape_cast %142 : vector<128xf32> to vector<1x1x1x128xf32>
    %144 = vector.broadcast %143 : vector<1x1x1x128xf32> to vector<1x14x14x128xf32>
    %145 = arith.mulf %140, %144 : vector<1x14x14x128xf32>
    %146 = arith.addf %139, %145 : vector<1x14x14x128xf32>
    %c0_81 = arith.constant 0 : index
    %c4_82 = arith.constant 4 : index
    %c1_83 = arith.constant 1 : index
    %c0_84 = arith.constant 0 : index
    %147 = vector.load %arg1[%c0_81, %c4_82, %c1_83, %c0_84] : memref<1x18x18x128xf32, #tpu.memory_space<vmem>>, vector<1x14x14x128xf32>
    %148 = vector.extract_strided_slice %0 {offsets = [21, 0], sizes = [1, 128], strides = [1, 1]} : vector<25x128xf32> to vector<1x128xf32>
    %149 = vector.shape_cast %148 : vector<1x128xf32> to vector<128xf32>
    %150 = vector.shape_cast %149 : vector<128xf32> to vector<1x1x1x128xf32>
    %151 = vector.broadcast %150 : vector<1x1x1x128xf32> to vector<1x14x14x128xf32>
    %152 = arith.mulf %147, %151 : vector<1x14x14x128xf32>
    %153 = arith.addf %146, %152 : vector<1x14x14x128xf32>
    %c0_85 = arith.constant 0 : index
    %c4_86 = arith.constant 4 : index
    %c2_87 = arith.constant 2 : index
    %c0_88 = arith.constant 0 : index
    %154 = vector.load %arg1[%c0_85, %c4_86, %c2_87, %c0_88] : memref<1x18x18x128xf32, #tpu.memory_space<vmem>>, vector<1x14x14x128xf32>
    %155 = vector.extract_strided_slice %0 {offsets = [22, 0], sizes = [1, 128], strides = [1, 1]} : vector<25x128xf32> to vector<1x128xf32>
    %156 = vector.shape_cast %155 : vector<1x128xf32> to vector<128xf32>
    %157 = vector.shape_cast %156 : vector<128xf32> to vector<1x1x1x128xf32>
    %158 = vector.broadcast %157 : vector<1x1x1x128xf32> to vector<1x14x14x128xf32>
    %159 = arith.mulf %154, %158 : vector<1x14x14x128xf32>
    %160 = arith.addf %153, %159 : vector<1x14x14x128xf32>
    %c0_89 = arith.constant 0 : index
    %c4_90 = arith.constant 4 : index
    %c3_91 = arith.constant 3 : index
    %c0_92 = arith.constant 0 : index
    %161 = vector.load %arg1[%c0_89, %c4_90, %c3_91, %c0_92] : memref<1x18x18x128xf32, #tpu.memory_space<vmem>>, vector<1x14x14x128xf32>
    %162 = vector.extract_strided_slice %0 {offsets = [23, 0], sizes = [1, 128], strides = [1, 1]} : vector<25x128xf32> to vector<1x128xf32>
    %163 = vector.shape_cast %162 : vector<1x128xf32> to vector<128xf32>
    %164 = vector.shape_cast %163 : vector<128xf32> to vector<1x1x1x128xf32>
    %165 = vector.broadcast %164 : vector<1x1x1x128xf32> to vector<1x14x14x128xf32>
    %166 = arith.mulf %161, %165 : vector<1x14x14x128xf32>
    %167 = arith.addf %160, %166 : vector<1x14x14x128xf32>
    %c0_93 = arith.constant 0 : index
    %c4_94 = arith.constant 4 : index
    %c4_95 = arith.constant 4 : index
    %c0_96 = arith.constant 0 : index
    %168 = vector.load %arg1[%c0_93, %c4_94, %c4_95, %c0_96] : memref<1x18x18x128xf32, #tpu.memory_space<vmem>>, vector<1x14x14x128xf32>
    %169 = vector.extract_strided_slice %0 {offsets = [24, 0], sizes = [1, 128], strides = [1, 1]} : vector<25x128xf32> to vector<1x128xf32>
    %170 = vector.shape_cast %169 : vector<1x128xf32> to vector<128xf32>
    %171 = vector.shape_cast %170 : vector<128xf32> to vector<1x1x1x128xf32>
    %172 = vector.broadcast %171 : vector<1x1x1x128xf32> to vector<1x14x14x128xf32>
    %173 = arith.mulf %168, %172 : vector<1x14x14x128xf32>
    %174 = arith.addf %167, %173 : vector<1x14x14x128xf32>
    %cst = arith.constant dense<0.000000e+00> : vector<128xf32>
    %175 = vector.multi_reduction <add>, %174, %cst [0, 1, 2] : vector<1x14x14x128xf32> to vector<128xf32>
    %176 = vector.shape_cast %175 : vector<128xf32> to vector<1x1x1x128xf32>
    %cst_97 = arith.constant 1.960000e+02 : f32
    %177 = vector.broadcast %cst_97 : f32 to vector<1x1x1x128xf32>
    %178 = arith.divf %176, %177 : vector<1x1x1x128xf32>
    %179 = vector.broadcast %178 : vector<1x1x1x128xf32> to vector<1x14x14x128xf32>
    %180 = arith.subf %174, %179 : vector<1x14x14x128xf32>
    %181 = arith.mulf %180, %180 : vector<1x14x14x128xf32>
    %cst_98 = arith.constant dense<0.000000e+00> : vector<128xf32>
    %182 = vector.multi_reduction <add>, %181, %cst_98 [0, 1, 2] : vector<1x14x14x128xf32> to vector<128xf32>
    %183 = vector.shape_cast %182 : vector<128xf32> to vector<1x1x1x128xf32>
    %cst_99 = arith.constant 1.960000e+02 : f32
    %184 = vector.broadcast %cst_99 : f32 to vector<1x1x1x128xf32>
    %185 = arith.divf %183, %184 : vector<1x1x1x128xf32>
    %cst_100 = arith.constant 1.000000e-03 : f32
    %186 = vector.broadcast %cst_100 : f32 to vector<1x1x1x128xf32>
    %187 = arith.addf %185, %186 : vector<1x1x1x128xf32>
    %188 = math.rsqrt %187 : vector<1x1x1x128xf32>
    %c0_101 = arith.constant 0 : index
    %c0_102 = arith.constant 0 : index
    %189 = vector.load %arg3[%c0_101, %c0_102] : memref<1x128xf32, #tpu.memory_space<vmem>>, vector<1x128xf32>
    %190 = vector.shape_cast %189 : vector<1x128xf32> to vector<128xf32>
    %191 = vector.shape_cast %190 : vector<128xf32> to vector<1x1x1x128xf32>
    %c0_103 = arith.constant 0 : index
    %c0_104 = arith.constant 0 : index
    %192 = vector.load %arg4[%c0_103, %c0_104] : memref<1x128xf32, #tpu.memory_space<vmem>>, vector<1x128xf32>
    %193 = vector.shape_cast %192 : vector<1x128xf32> to vector<128xf32>
    %194 = vector.shape_cast %193 : vector<128xf32> to vector<1x1x1x128xf32>
    %195 = arith.mulf %191, %188 : vector<1x1x1x128xf32>
    %196 = vector.broadcast %195 : vector<1x1x1x128xf32> to vector<1x14x14x128xf32>
    %197 = arith.mulf %180, %196 : vector<1x14x14x128xf32>
    %198 = vector.broadcast %194 : vector<1x1x1x128xf32> to vector<1x14x14x128xf32>
    %199 = arith.addf %197, %198 : vector<1x14x14x128xf32>
    %c0_105 = arith.constant 0 : index
    %c0_106 = arith.constant 0 : index
    %c0_107 = arith.constant 0 : index
    %c0_108 = arith.constant 0 : index
    %200 = vector.load %arg5[%c0_105, %c0_106, %c0_107, %c0_108] : memref<1x14x14x128xf32, #tpu.memory_space<vmem>>, vector<1x14x14x128xf32>
    tpu.vector_store %arg5[%c0_105, %c0_106, %c0_107, %c0_108], %199 {strides = array<i32>} : memref<1x14x14x128xf32, #tpu.memory_space<vmem>>, vector<1x14x14x128xf32>,
    return
  }
  func.func @transform_0(%arg0: i32) -> (i32, i32, i32, i32) {
    %c0_i32 = arith.constant 0 : i32
    %c0_i32_0 = arith.constant 0 : i32
    %c0_i32_1 = arith.constant 0 : i32
    %c0_i32_2 = arith.constant 0 : i32
    return %c0_i32, %c0_i32_0, %c0_i32_1, %arg0 : i32, i32, i32, i32
  }
  func.func @transform_1(%arg0: i32) -> (i32, i32) {
    %c0_i32 = arith.constant 0 : i32
    %c0_i32_0 = arith.constant 0 : i32
    return %c0_i32, %arg0 : i32, i32
  }
  func.func @transform_2(%arg0: i32) -> (i32, i32) {
    %c0_i32 = arith.constant 0 : i32
    %c0_i32_0 = arith.constant 0 : i32
    return %c0_i32, %arg0 : i32, i32
  }
  func.func @transform_3(%arg0: i32) -> (i32, i32) {
    %c0_i32 = arith.constant 0 : i32
    %c0_i32_0 = arith.constant 0 : i32
    return %c0_i32, %arg0 : i32, i32
  }
  func.func @transform_4(%arg0: i32) -> (i32, i32, i32, i32) {
    %c0_i32 = arith.constant 0 : i32
    %c0_i32_0 = arith.constant 0 : i32
    %c0_i32_1 = arith.constant 0 : i32
    %c0_i32_2 = arith.constant 0 : i32
    return %c0_i32, %c0_i32_0, %c0_i32_1, %arg0 : i32, i32, i32, i32
  }
}

</mosaic_0001>

<llo_original>
// kernel: dwconv_bn.1
$region0: #{dwconv_bn.1}
  #allocation0 [shape = 'u32[]', space=smem, size = 0x4, offset = 0x4, fixed_abs, tag = 'smem constant byte address 0x4 - core index']
  #allocation1 [shape = 'u32[144,128]{1,0:T(1,128)}', space=vmem, size = 0x12000, scoped, tag = 'internal scratch']
  %s0 = inlined_call_operand.vmem [shape: f32[1,18,18,1536], index: 0, kind: input, shape index: {}]
  %s1 = inlined_call_operand.vmem [shape: f32[25,1536], index: 1, kind: input, shape index: {}]
  %s2 = inlined_call_operand.vmem [shape: f32[1,1536], index: 2, kind: input, shape index: {}]
  %s3 = inlined_call_operand.vmem [shape: f32[1,1536], index: 3, kind: input, shape index: {}]
  %s4 = inlined_call_operand.vmem [shape: f32[1,14,14,1536], index: 4, kind: output, shape index: {}]
  %s5 = sld [smem:[#allocation0]]
  $region159: #{dwconv_bn.1} parent=0
    _
  %s7 = ssub.s32 1, %s5
  %s8 = scalar_select 0, %s7, %s5
  $region1: #{dwconv_bn.1} parent=0
    #allocation2 [shape = 'u8[442368]{0}', space=vmem, size = 0x6c000, scoped, tag = 'input window, operand 0']
    #allocation3 [shape = 'u8[32768]{0}', space=vmem, size = 0x8000, scoped, tag = 'input window, operand 1']
    #allocation4 [shape = 'u8[229376]{0}', space=vmem, size = 0x38000, scoped, tag = 'output window, operand 0']
    loop: start=0, step=1, limit=14
    $region2: #{dwconv_bn.1} parent=1 // loop_pre_header
      _
    $region3: #{dwconv_bn.1} parent=1 // loop_header
      %s10 = sphi 0, %s14
      %p11 = scmp.ge.s32.totalorder %s10, 14
      %s20 = sphi 0, %s22
      %s23 = sphi 0, %s20
      %s24 = sphi 0, %s23
      %s40 = sphi 0, %s24
      %s46 = sphi 0, %s48
      %s49 = sphi 0, %s46
      %s50 = sphi 0, %s49
      %s66 = sphi 0, %s50
      %s72 = sphi 0, %s74
      %s75 = sphi 0, %s72
      %s76 = sphi 0, %s75
      %s92 = sphi 0, %s76
      %s98 = sphi 0, %s100
      %s101 = sphi 0, %s98
      %s102 = sphi 0, %s101
      %s118 = sphi 0, %s102
      %s124 = sphi 0, %s126
      %s127 = sphi 0, %s124
      %s128 = sphi 0, %s127
      %s144 = sphi 0, %s128
    $region4: #{dwconv_bn.1} parent=1 // loop_header_branch
      %13 = sbr.rel (%p11) target = $region8
    $region5: #{dwconv_bn.1} parent=1 // loop_body
      %s15 = ssub.s32 %s10, 1
      %s16 = ssub.s32 %s10, 2
      %s17 = sadd.s32 %s10, 1
      %s18 = ssub.s32 %s10, %s17
      %p19 = scmp.eq.s32.totalorder %s18, 0
      %s21 = sadd.s32 %s20, 1
      %s22 = scalar_select %p19, %s20, %s21
      %p25 = pneg %p19
      %p26 = scmp.eq.s32.totalorder %s10, 11
      %p27 = por %p25, %p26
      %p28 = scmp.ne.s32.totalorder %s20, %s23
      %p29 = scmp.eq.s32.totalorder %s10, 0
      %p30 = por %p28, %p29
      %p31 = scmp.ne.s32.totalorder %s20, %s23
      %p32 = scmp.eq.s32.totalorder %s15, 11
      %p33 = por %p31, %p32
      %p34 = scmp.ne.s32.totalorder %s23, %s24
      %p35 = scmp.eq.s32.totalorder %s15, 0
      %p36 = por %p34, %p35
      %p37 = scmp.ne.s32.totalorder %s23, %s24
      %p38 = scmp.eq.s32.totalorder %s16, 11
      %p39 = por %p37, %p38
      %p41 = scmp.ne.s32.totalorder %s24, %s40
      %p42 = scmp.eq.s32.totalorder %s16, 0
      %p43 = por %p41, %p42
      %s44 = ssub.s32 %s10, %s17
      %p45 = scmp.eq.s32.totalorder %s44, 0
      %s47 = sadd.s32 %s46, 1
      %s48 = scalar_select %p45, %s46, %s47
      %p51 = pneg %p45
      %p52 = scmp.eq.s32.totalorder %s10, 11
      %p53 = por %p51, %p52
      %p54 = scmp.ne.s32.totalorder %s46, %s49
      %p55 = scmp.eq.s32.totalorder %s10, 0
      %p56 = por %p54, %p55
      %p57 = scmp.ne.s32.totalorder %s46, %s49
      %p58 = scmp.eq.s32.totalorder %s15, 11
      %p59 = por %p57, %p58
      %p60 = scmp.ne.s32.totalorder %s49, %s50
      %p61 = scmp.eq.s32.totalorder %s15, 0
      %p62 = por %p60, %p61
      %p63 = scmp.ne.s32.totalorder %s49, %s50
      %p64 = scmp.eq.s32.totalorder %s16, 11
      %p65 = por %p63, %p64
      %p67 = scmp.ne.s32.totalorder %s50, %s66
      %p68 = scmp.eq.s32.totalorder %s16, 0
      %p69 = por %p67, %p68
      %s70 = ssub.s32 %s10, %s17
      %p71 = scmp.eq.s32.totalorder %s70, 0
      %s73 = sadd.s32 %s72, 1
      %s74 = scalar_select %p71, %s72, %s73
      %p77 = pneg %p71
      %p78 = scmp.eq.s32.totalorder %s10, 11
      %p79 = por %p77, %p78
      %p80 = scmp.ne.s32.totalorder %s72, %s75
      %p81 = scmp.eq.s32.totalorder %s10, 0
      %p82 = por %p80, %p81
      %p83 = scmp.ne.s32.totalorder %s72, %s75
      %p84 = scmp.eq.s32.totalorder %s15, 11
      %p85 = por %p83, %p84
      %p86 = scmp.ne.s32.totalorder %s75, %s76
      %p87 = scmp.eq.s32.totalorder %s15, 0
      %p88 = por %p86, %p87
      %p89 = scmp.ne.s32.totalorder %s75, %s76
      %p90 = scmp.eq.s32.totalorder %s16, 11
      %p91 = por %p89, %p90
      %p93 = scmp.ne.s32.totalorder %s76, %s92
      %p94 = scmp.eq.s32.totalorder %s16, 0
      %p95 = por %p93, %p94
      %s96 = ssub.s32 %s10, %s17
      %p97 = scmp.eq.s32.totalorder %s96, 0
      %s99 = sadd.s32 %s98, 1
      %s100 = scalar_select %p97, %s98, %s99
      %p103 = pneg %p97
      %p104 = scmp.eq.s32.totalorder %s10, 11
      %p105 = por %p103, %p104
      %p106 = scmp.ne.s32.totalorder %s98, %s101
      %p107 = scmp.eq.s32.totalorder %s10, 0
      %p108 = por %p106, %p107
      %p109 = scmp.ne.s32.totalorder %s98, %s101
      %p110 = scmp.eq.s32.totalorder %s15, 11
      %p111 = por %p109, %p110
      %p112 = scmp.ne.s32.totalorder %s101, %s102
      %p113 = scmp.eq.s32.totalorder %s15, 0
      %p114 = por %p112, %p113
      %p115 = scmp.ne.s32.totalorder %s101, %s102
      %p116 = scmp.eq.s32.totalorder %s16, 11
      %p117 = por %p115, %p116
      %p119 = scmp.ne.s32.totalorder %s102, %s118
      %p120 = scmp.eq.s32.totalorder %s16, 0
      %p121 = por %p119, %p120
      %s122 = ssub.s32 %s10, %s17
      %p123 = scmp.eq.s32.totalorder %s122, 0
      %s125 = sadd.s32 %s124, 1
      %s126 = scalar_select %p123, %s124, %s125
      %p129 = pneg %p123
      %p130 = scmp.eq.s32.totalorder %s10, 11
      %p131 = por %p129, %p130
      %p132 = scmp.ne.s32.totalorder %s124, %s127
      %p133 = scmp.eq.s32.totalorder %s10, 0
      %p134 = por %p132, %p133
      %p135 = scmp.ne.s32.totalorder %s124, %s127
      %p136 = scmp.eq.s32.totalorder %s15, 11
      %p137 = por %p135, %p136
      %p138 = scmp.ne.s32.totalorder %s127, %s128
      %p139 = scmp.eq.s32.totalorder %s15, 0
      %p140 = por %p138, %p139
      %p141 = scmp.ne.s32.totalorder %s127, %s128
      %p142 = scmp.eq.s32.totalorder %s16, 11
      %p143 = por %p141, %p142
      %p145 = scmp.ne.s32.totalorder %s128, %s144
      %p146 = scmp.eq.s32.totalorder %s16, 0
      %p147 = por %p145, %p146
      %p148 = scmp.le.s32.totalorder 1, %s10
      %p149 = scmp.lt.s32.totalorder %s10, 13
      %p150 = pnand %p148, %p149
      %p151 = pneg %p150
      // Predicated region
      $region9: #{dwconv_bn.1} parent=5 // pred_check
        _
      $region10: #{dwconv_bn.1} parent=5 // pred_check_branch
        %153 = sbr.rel (%p150) target = $region12
      $region11: #{dwconv_bn.1} parent=5 // pred_region
        %s154 = ssub.s32 %s10, 1
      $region12: #{dwconv_bn.1} parent=5 // pred_fallthru
        _
      %p155 = scmp.lt.s32.totalorder %s10, 12
      // Predicated region
      $region13: #{dwconv_bn.1} parent=5 // pred_check
        %p156 = pneg %p155
      $region14: #{dwconv_bn.1} parent=5 // pred_check_branch
        %158 = sbr.rel (%p156) target = $region16
      $region15: #{dwconv_bn.1} parent=5 // pred_region
        // Predicated region
        $region17: #{dwconv_bn.1} parent=15 // pred_check
          %p159 = pneg %p30
        $region18: #{dwconv_bn.1} parent=15 // pred_check_branch
          %161 = sbr.rel (%p159) target = $region20
        $region19: #{dwconv_bn.1} parent=15 // pred_region
          %s162 = sand.u32 %s20, 1
          %s163 = sand.u32 %s20, 1
          %s164 = smul.addr %s163, 432
          %s165 = scalar_lea.vmem [#allocation2], %s164
          %s166 = smul.addr %s10, 8
          %s167 = scalar_lea.vmem %s0, %s166
          // Predicated region
          $region21: #{dwconv_bn.1} parent=19 // pred_check
            _
          $region22: #{dwconv_bn.1} parent=19 // pred_check_branch
            %169 = sbr.rel (0) target = $region24
          $region23: #{dwconv_bn.1} parent=19 // pred_region
            // Predicated region
            $region25: #{dwconv_bn.1} parent=23 // pred_check
              _
            $region26: #{dwconv_bn.1} parent=23 // pred_check_branch
              %171 = sbr.rel (0) target = $region28
            $region27: #{dwconv_bn.1} parent=23 // pred_region
              // Predicated region
              $region40: #{dwconv_bn.1} parent=27 // pred_check
                _
              $region41: #{dwconv_bn.1} parent=27 // pred_check_branch
                %292 = sbr.rel (0) target = $region43
              $region42: #{dwconv_bn.1} parent=27 // pred_region
                loop: start=0, step=1, limit=1
                $region44: #{dwconv_bn.1} parent=42 // loop_pre_header
                  _
                $region45: #{dwconv_bn.1} parent=42 // loop_header
                  %s294 = sphi 0, %s298
                  %p295 = scmp.ge.s32.totalorder %s294, 1
                  %s299 = sphi %s167, %s167
                  %s300 = sphi %s165, %s165
                $region46: #{dwconv_bn.1} parent=42 // loop_header_branch
                  %297 = sbr.rel (%p295) target = $region50
                $region47: #{dwconv_bn.1} parent=42 // loop_body
                  %v301 = vld [vmem:[%s299] sm:$0xff]
                  %302 = vst [vmem:[%s300] sm:$0xff] %v301
                  %v303 = vld [vmem:[%s299 + $0x60] sm:$0xff]
                  %304 = vst [vmem:[%s300 + $0x8] sm:$0xff] %v303
                  %v305 = vld [vmem:[%s299 + $0xc0] sm:$0xff]
                  %306 = vst [vmem:[%s300 + $0x10] sm:$0xff] %v305
                  %v307 = vld [vmem:[%s299 + $0x120] sm:$0xff]
                  %308 = vst [vmem:[%s300 + $0x18] sm:$0xff] %v307
                  %v309 = vld [vmem:[%s299 + $0x180] sm:$0xff]
                  %310 = vst [vmem:[%s300 + $0x20] sm:$0xff] %v309
                  %v311 = vld [vmem:[%s299 + $0x1e0] sm:$0xff]
                  %312 = vst [vmem:[%s300 + $0x28] sm:$0xff] %v311
                  %v313 = vld [vmem:[%s299 + $0x240] sm:$0xff]
                  %314 = vst [vmem:[%s300 + $0x30] sm:$0xff] %v313
                  %v315 = vld [vmem:[%s299 + $0x2a0] sm:$0xff]
                  %316 = vst [vmem:[%s300 + $0x38] sm:$0xff] %v315
                  %v317 = vld [vmem:[%s299 + $0x300] sm:$0xff]
                  %318 = vst [vmem:[%s300 + $0x40] sm:$0xff] %v317
                  %v319 = vld [vmem:[%s299 + $0x360] sm:$0xff]
                  %320 = vst [vmem:[%s300 + $0x48] sm:$0xff] %v319
                  %v321 = vld [vmem:[%s299 + $0x3c0] sm:$0xff]
                  %322 = vst [vmem:[%s300 + $0x50] sm:$0xff] %v321
                  %v323 = vld [vmem:[%s299 + $0x420] sm:$0xff]
                  %324 = vst [vmem:[%s300 + $0x58] sm:$0xff] %v323
                  %v325 = vld [vmem:[%s299 + $0x480] sm:$0xff]
                  %326 = vst [vmem:[%s300 + $0x60] sm:$0xff] %v325
                  %v327 = vld [vmem:[%s299 + $0x4e0] sm:$0xff]
                  %328 = vst [vmem:[%s300 + $0x68] sm:$0xff] %v327
                  %v329 = vld [vmem:[%s299 + $0x540] sm:$0xff]
                  %330 = vst [vmem:[%s300 + $0x70] sm:$0xff] %v329
                  %v331 = vld [vmem:[%s299 + $0x5a0] sm:$0xff]
                  %332 = vst [vmem:[%s300 + $0x78] sm:$0xff] %v331
                  %v333 = vld [vmem:[%s299 + $0x600] sm:$0xff]
                  %334 = vst [vmem:[%s300 + $0x80] sm:$0xff] %v333
                  %v335 = vld [vmem:[%s299 + $0x660] sm:$0xff]
                  %336 = vst [vmem:[%s300 + $0x88] sm:$0xff] %v335
                  %v337 = vld [vmem:[%s299 + $0x6c0] sm:$0xff]
                  %338 = vst [vmem:[%s300 + $0x90] sm:$0xff] %v337
                  %v339 = vld [vmem:[%s299 + $0x720] sm:$0xff]
                  %340 = vst [vmem:[%s300 + $0x98] sm:$0xff] %v339
                  %v341 = vld [vmem:[%s299 + $0x780] sm:$0xff]
                  %342 = vst [vmem:[%s300 + $0xa0] sm:$0xff] %v341
                  %v343 = vld [vmem:[%s299 + $0x7e0] sm:$0xff]
                  %344 = vst [vmem:[%s300 + $0xa8] sm:$0xff] %v343
                  %v345 = vld [vmem:[%s299 + $0x840] sm:$0xff]
                  %346 = vst [vmem:[%s300 + $0xb0] sm:$0xff] %v345
                  %v347 = vld [vmem:[%s299 + $0x8a0] sm:$0xff]
                  %348 = vst [vmem:[%s300 + $0xb8] sm:$0xff] %v347
                  %v349 = vld [vmem:[%s299 + $0x900] sm:$0xff]
                  %350 = vst [vmem:[%s300 + $0xc0] sm:$0xff] %v349
                  %v351 = vld [vmem:[%s299 + $0x960] sm:$0xff]
                  %352 = vst [vmem:[%s300 + $0xc8] sm:$0xff] %v351
                  %v353 = vld [vmem:[%s299 + $0x9c0] sm:$0xff]
                  %354 = vst [vmem:[%s300 + $0xd0] sm:$0xff] %v353
                  %v355 = vld [vmem:[%s299 + $0xa20] sm:$0xff]
                  %356 = vst [vmem:[%s300 + $0xd8] sm:$0xff] %v355
                  %v357 = vld [vmem:[%s299 + $0xa80] sm:$0xff]
                  %358 = vst [vmem:[%s300 + $0xe0] sm:$0xff] %v357
                  %v359 = vld [vmem:[%s299 + $0xae0] sm:$0xff]
                  %360 = vst [vmem:[%s300 + $0xe8] sm:$0xff] %v359
                  %v361 = vld [vmem:[%s299 + $0xb40] sm:$0xff]
                  %362 = vst [vmem:[%s300 + $0xf0] sm:$0xff] %v361
                  %v363 = vld [vmem:[%s299 + $0xba0] sm:$0xff]
                  %364 = vst [vmem:[%s300 + $0xf8] sm:$0xff] %v363
                  %v365 = vld [vmem:[%s299 + $0xc00] sm:$0xff]
                  %366 = vst [vmem:[%s300 + $0x100] sm:$0xff] %v365
                  %v367 = vld [vmem:[%s299 + $0xc60] sm:$0xff]
                  %368 = vst [vmem:[%s300 + $0x108] sm:$0xff] %v367
                  %v369 = vld [vmem:[%s299 + $0xcc0] sm:$0xff]
                  %370 = vst [vmem:[%s300 + $0x110] sm:$0xff] %v369
                  %v371 = vld [vmem:[%s299 + $0xd20] sm:$0xff]
                  %372 = vst [vmem:[%s300 + $0x118] sm:$0xff] %v371
                  %v373 = vld [vmem:[%s299 + $0xd80] sm:$0xff]
                  %374 = vst [vmem:[%s300 + $0x120] sm:$0xff] %v373
                  %v375 = vld [vmem:[%s299 + $0xde0] sm:$0xff]
                  %376 = vst [vmem:[%s300 + $0x128] sm:$0xff] %v375
                  %v377 = vld [vmem:[%s299 + $0xe40] sm:$0xff]
                  %378 = vst [vmem:[%s300 + $0x130] sm:$0xff] %v377
                  %v379 = vld [vmem:[%s299 + $0xea0] sm:$0xff]
                  %380 = vst [vmem:[%s300 + $0x138] sm:$0xff] %v379
                  %v381 = vld [vmem:[%s299 + $0xf00] sm:$0xff]
                  %382 = vst [vmem:[%s300 + $0x140] sm:$0xff] %v381
                  %v383 = vld [vmem:[%s299 + $0xf60] sm:$0xff]
                  %384 = vst [vmem:[%s300 + $0x148] sm:$0xff] %v383
                  %v385 = vld [vmem:[%s299 + $0xfc0] sm:$0xff]
                  %386 = vst [vmem:[%s300 + $0x150] sm:$0xff] %v385
                  %v387 = vld [vmem:[%s299 + $0x1020] sm:$0xff]
                  %388 = vst [vmem:[%s300 + $0x158] sm:$0xff] %v387
                  %v389 = vld [vmem:[%s299 + $0x1080] sm:$0xff]
                  %390 = vst [vmem:[%s300 + $0x160] sm:$0xff] %v389
                  %v391 = vld [vmem:[%s299 + $0x10e0] sm:$0xff]
                  %392 = vst [vmem:[%s300 + $0x168] sm:$0xff] %v391
                  %v393 = vld [vmem:[%s299 + $0x1140] sm:$0xff]
                  %394 = vst [vmem:[%s300 + $0x170] sm:$0xff] %v393
                  %v395 = vld [vmem:[%s299 + $0x11a0] sm:$0xff]
                  %396 = vst [vmem:[%s300 + $0x178] sm:$0xff] %v395
                  %v397 = vld [vmem:[%s299 + $0x1200] sm:$0xff]
                  %398 = vst [vmem:[%s300 + $0x180] sm:$0xff] %v397
                  %v399 = vld [vmem:[%s299 + $0x1260] sm:$0xff]
                  %400 = vst [vmem:[%s300 + $0x188] sm:$0xff] %v399
                  %v401 = vld [vmem:[%s299 + $0x12c0] sm:$0xff]
                  %402 = vst [vmem:[%s300 + $0x190] sm:$0xff] %v401
                  %v403 = vld [vmem:[%s299 + $0x1320] sm:$0xff]
                  %404 = vst [vmem:[%s300 + $0x198] sm:$0xff] %v403
                  %v405 = vld [vmem:[%s299 + $0x1380] sm:$0xff]
                  %406 = vst [vmem:[%s300 + $0x1a0] sm:$0xff] %v405
                  %v407 = vld [vmem:[%s299 + $0x13e0] sm:$0xff]
                  %408 = vst [vmem:[%s300 + $0x1a8] sm:$0xff] %v407
                $region48: #{dwconv_bn.1} parent=42 // loop_footer
                  %s298 = sadd.s32 1, %s294
                $region49: #{dwconv_bn.1} parent=42 // loop_footer_branch
                  %293 = sbr.rel target = $region45
                $region50: #{dwconv_bn.1} parent=42 // loop_exit
                  _
              $region43: #{dwconv_bn.1} parent=27 // pred_fallthru
                _
              // Predicated region
              $region51: #{dwconv_bn.1} parent=27 // pred_check
                _
              $region52: #{dwconv_bn.1} parent=27 // pred_check_branch
                %410 = sbr.rel target = $region54
              $region53: #{dwconv_bn.1} parent=27 // pred_region
                _
              $region54: #{dwconv_bn.1} parent=27 // pred_fallthru
                _
            $region28: #{dwconv_bn.1} parent=23 // pred_fallthru
              _
            // Predicated region
            $region29: #{dwconv_bn.1} parent=23 // pred_check
              _
            $region30: #{dwconv_bn.1} parent=23 // pred_check_branch
              %173 = sbr.rel target = $region32
            $region31: #{dwconv_bn.1} parent=23 // pred_region
              loop: start=0, step=1, limit=1
              $region33: #{dwconv_bn.1} parent=31 // loop_pre_header
                _
              $region34: #{dwconv_bn.1} parent=31 // loop_header
                %s176 = sphi 0, %s180
                %p177 = scmp.ge.s32.totalorder %s176, 1
                %s181 = sphi %s167, %s167
                %s182 = sphi %s165, %s165
              $region35: #{dwconv_bn.1} parent=31 // loop_header_branch
                %179 = sbr.rel (%p177) target = $region39
              $region36: #{dwconv_bn.1} parent=31 // loop_body
                %v183 = vld [vmem:[%s181] sm:$0xff]
                %184 = vst [vmem:[%s182] sm:$0xff] %v183
                %v185 = vld [vmem:[%s181 + $0x60] sm:$0xff]
                %186 = vst [vmem:[%s182 + $0x8] sm:$0xff] %v185
                %v187 = vld [vmem:[%s181 + $0xc0] sm:$0xff]
                %188 = vst [vmem:[%s182 + $0x10] sm:$0xff] %v187
                %v189 = vld [vmem:[%s181 + $0x120] sm:$0xff]
                %190 = vst [vmem:[%s182 + $0x18] sm:$0xff] %v189
                %v191 = vld [vmem:[%s181 + $0x180] sm:$0xff]
                %192 = vst [vmem:[%s182 + $0x20] sm:$0xff] %v191
                %v193 = vld [vmem:[%s181 + $0x1e0] sm:$0xff]
                %194 = vst [vmem:[%s182 + $0x28] sm:$0xff] %v193
                %v195 = vld [vmem:[%s181 + $0x240] sm:$0xff]
                %196 = vst [vmem:[%s182 + $0x30] sm:$0xff] %v195
                %v197 = vld [vmem:[%s181 + $0x2a0] sm:$0xff]
                %198 = vst [vmem:[%s182 + $0x38] sm:$0xff] %v197
                %v199 = vld [vmem:[%s181 + $0x300] sm:$0xff]
                %200 = vst [vmem:[%s182 + $0x40] sm:$0xff] %v199
                %v201 = vld [vmem:[%s181 + $0x360] sm:$0xff]
                %202 = vst [vmem:[%s182 + $0x48] sm:$0xff] %v201
                %v203 = vld [vmem:[%s181 + $0x3c0] sm:$0xff]
                %204 = vst [vmem:[%s182 + $0x50] sm:$0xff] %v203
                %v205 = vld [vmem:[%s181 + $0x420] sm:$0xff]
                %206 = vst [vmem:[%s182 + $0x58] sm:$0xff] %v205
                %v207 = vld [vmem:[%s181 + $0x480] sm:$0xff]
                %208 = vst [vmem:[%s182 + $0x60] sm:$0xff] %v207
                %v209 = vld [vmem:[%s181 + $0x4e0] sm:$0xff]
                %210 = vst [vmem:[%s182 + $0x68] sm:$0xff] %v209
                %v211 = vld [vmem:[%s181 + $0x540] sm:$0xff]
                %212 = vst [vmem:[%s182 + $0x70] sm:$0xff] %v211
                %v213 = vld [vmem:[%s181 + $0x5a0] sm:$0xff]
                %214 = vst [vmem:[%s182 + $0x78] sm:$0xff] %v213
                %v215 = vld [vmem:[%s181 + $0x600] sm:$0xff]
                %216 = vst [vmem:[%s182 + $0x80] sm:$0xff] %v215
                %v217 = vld [vmem:[%s181 + $0x660] sm:$0xff]
                %218 = vst [vmem:[%s182 + $0x88] sm:$0xff] %v217
                %v219 = vld [vmem:[%s181 + $0x6c0] sm:$0xff]
                %220 = vst [vmem:[%s182 + $0x90] sm:$0xff] %v219
                %v221 = vld [vmem:[%s181 + $0x720] sm:$0xff]
                %222 = vst [vmem:[%s182 + $0x98] sm:$0xff] %v221
                %v223 = vld [vmem:[%s181 + $0x780] sm:$0xff]
                %224 = vst [vmem:[%s182 + $0xa0] sm:$0xff] %v223
                %v225 = vld [vmem:[%s181 + $0x7e0] sm:$0xff]
                %226 = vst [vmem:[%s182 + $0xa8] sm:$0xff] %v225
                %v227 = vld [vmem:[%s181 + $0x840] sm:$0xff]
                %228 = vst [vmem:[%s182 + $0xb0] sm:$0xff] %v227
                %v229 = vld [vmem:[%s181 + $0x8a0] sm:$0xff]
                %230 = vst [vmem:[%s182 + $0xb8] sm:$0xff] %v229
                %v231 = vld [vmem:[%s181 + $0x900] sm:$0xff]
                %232 = vst [vmem:[%s182 + $0xc0] sm:$0xff] %v231
                %v233 = vld [vmem:[%s181 + $0x960] sm:$0xff]
                %234 = vst [vmem:[%s182 + $0xc8] sm:$0xff] %v233
                %v235 = vld [vmem:[%s181 + $0x9c0] sm:$0xff]
                %236 = vst [vmem:[%s182 + $0xd0] sm:$0xff] %v235
                %v237 = vld [vmem:[%s181 + $0xa20] sm:$0xff]
                %238 = vst [vmem:[%s182 + $0xd8] sm:$0xff] %v237
                %v239 = vld [vmem:[%s181 + $0xa80] sm:$0xff]
                %240 = vst [vmem:[%s182 + $0xe0] sm:$0xff] %v239
                %v241 = vld [vmem:[%s181 + $0xae0] sm:$0xff]
                %242 = vst [vmem:[%s182 + $0xe8] sm:$0xff] %v241
                %v243 = vld [vmem:[%s181 + $0xb40] sm:$0xff]
                %244 = vst [vmem:[%s182 + $0xf0] sm:$0xff] %v243
                %v245 = vld [vmem:[%s181 + $0xba0] sm:$0xff]
                %246 = vst [vmem:[%s182 + $0xf8] sm:$0xff] %v245
                %v247 = vld [vmem:[%s181 + $0xc00] sm:$0xff]
                %248 = vst [vmem:[%s182 + $0x100] sm:$0xff] %v247
                %v249 = vld [vmem:[%s181 + $0xc60] sm:$0xff]
                %250 = vst [vmem:[%s182 + $0x108] sm:$0xff] %v249
                %v251 = vld [vmem:[%s181 + $0xcc0] sm:$0xff]
                %252 = vst [vmem:[%s182 + $0x110] sm:$0xff] %v251
                %v253 = vld [vmem:[%s181 + $0xd20] sm:$0xff]
                %254 = vst [vmem:[%s182 + $0x118] sm:$0xff] %v253
                %v255 = vld [vmem:[%s181 + $0xd80] sm:$0xff]
                %256 = vst [vmem:[%s182 + $0x120] sm:$0xff] %v255
                %v257 = vld [vmem:[%s181 + $0xde0] sm:$0xff]
                %258 = vst [vmem:[%s182 + $0x128] sm:$0xff] %v257
                %v259 = vld [vmem:[%s181 + $0xe40] sm:$0xff]
                %260 = vst [vmem:[%s182 + $0x130] sm:$0xff] %v259
                %v261 = vld [vmem:[%s181 + $0xea0] sm:$0xff]
                %262 = vst [vmem:[%s182 + $0x138] sm:$0xff] %v261
                %v263 = vld [vmem:[%s181 + $0xf00] sm:$0xff]
                %264 = vst [vmem:[%s182 + $0x140] sm:$0xff] %v263
                %v265 = vld [vmem:[%s181 + $0xf60] sm:$0xff]
                %266 = vst [vmem:[%s182 + $0x148] sm:$0xff] %v265
                %v267 = vld [vmem:[%s181 + $0xfc0] sm:$0xff]
                %268 = vst [vmem:[%s182 + $0x150] sm:$0xff] %v267
                %v269 = vld [vmem:[%s181 + $0x1020] sm:$0xff]
                %270 = vst [vmem:[%s182 + $0x158] sm:$0xff] %v269
                %v271 = vld [vmem:[%s181 + $0x1080] sm:$0xff]
                %272 = vst [vmem:[%s182 + $0x160] sm:$0xff] %v271
                %v273 = vld [vmem:[%s181 + $0x10e0] sm:$0xff]
                %274 = vst [vmem:[%s182 + $0x168] sm:$0xff] %v273
                %v275 = vld [vmem:[%s181 + $0x1140] sm:$0xff]
                %276 = vst [vmem:[%s182 + $0x170] sm:$0xff] %v275
                %v277 = vld [vmem:[%s181 + $0x11a0] sm:$0xff]
                %278 = vst [vmem:[%s182 + $0x178] sm:$0xff] %v277
                %v279 = vld [vmem:[%s181 + $0x1200] sm:$0xff]
                %280 = vst [vmem:[%s182 + $0x180] sm:$0xff] %v279
                %v281 = vld [vmem:[%s181 + $0x1260] sm:$0xff]
                %282 = vst [vmem:[%s182 + $0x188] sm:$0xff] %v281
                %v283 = vld [vmem:[%s181 + $0x12c0] sm:$0xff]
                %284 = vst [vmem:[%s182 + $0x190] sm:$0xff] %v283
                %v285 = vld [vmem:[%s181 + $0x1320] sm:$0xff]
                %286 = vst [vmem:[%s182 + $0x198] sm:$0xff] %v285
                %v287 = vld [vmem:[%s181 + $0x1380] sm:$0xff]
                %288 = vst [vmem:[%s182 + $0x1a0] sm:$0xff] %v287
                %v289 = vld [vmem:[%s181 + $0x13e0] sm:$0xff]
                %290 = vst [vmem:[%s182 + $0x1a8] sm:$0xff] %v289
              $region37: #{dwconv_bn.1} parent=31 // loop_footer
                %s180 = sadd.s32 1, %s176
              $region38: #{dwconv_bn.1} parent=31 // loop_footer_branch
                %175 = sbr.rel target = $region34
              $region39: #{dwconv_bn.1} parent=31 // loop_exit
                _
            $region32: #{dwconv_bn.1} parent=23 // pred_fallthru
              _
          $region24: #{dwconv_bn.1} parent=19 // pred_fallthru
            _
          %411 = vnop
        $region20: #{dwconv_bn.1} parent=15 // pred_fallthru
          _
        // Predicated region
        $region55: #{dwconv_bn.1} parent=15 // pred_check
          %p412 = pneg %p56
        $region56: #{dwconv_bn.1} parent=15 // pred_check_branch
          %414 = sbr.rel (%p412) target = $region58
        $region57: #{dwconv_bn.1} parent=15 // pred_region
          %s415 = sand.u32 %s46, 1
          %s416 = sand.u32 %s46, 1
          %s417 = smul.addr %s416, 32
          %s418 = scalar_lea.vmem [#allocation3], %s417
          %s419 = smul.addr %s10, 8
          %s420 = scalar_lea.vmem %s1, %s419
          // Predicated region
          $region59: #{dwconv_bn.1} parent=57 // pred_check
            _
          $region60: #{dwconv_bn.1} parent=57 // pred_check_branch
            %422 = sbr.rel (0) target = $region62
          $region61: #{dwconv_bn.1} parent=57 // pred_region
            // Predicated region
            $region63: #{dwconv_bn.1} parent=61 // pred_check
              _
            $region64: #{dwconv_bn.1} parent=61 // pred_check_branch
              %424 = sbr.rel (0) target = $region66
            $region65: #{dwconv_bn.1} parent=61 // pred_region
              // Predicated region
              $region78: #{dwconv_bn.1} parent=65 // pred_check
                _
              $region79: #{dwconv_bn.1} parent=65 // pred_check_branch
                %445 = sbr.rel (0) target = $region81
              $region80: #{dwconv_bn.1} parent=65 // pred_region
                loop: start=0, step=1, limit=1
                $region82: #{dwconv_bn.1} parent=80 // loop_pre_header
                  _
                $region83: #{dwconv_bn.1} parent=80 // loop_header
                  %s447 = sphi 0, %s451
                  %p448 = scmp.ge.s32.totalorder %s447, 1
                  %s452 = sphi %s420, %s420
                  %s453 = sphi %s418, %s418
                $region84: #{dwconv_bn.1} parent=80 // loop_header_branch
                  %450 = sbr.rel (%p448) target = $region88
                $region85: #{dwconv_bn.1} parent=80 // loop_body
                  %v454 = vld [vmem:[%s452] sm:$0xff]
                  %455 = vst [vmem:[%s453] sm:$0xff] %v454
                  %v456 = vld [vmem:[%s452 + $0x60] sm:$0xff]
                  %457 = vst [vmem:[%s453 + $0x8] sm:$0xff] %v456
                  %v458 = vld [vmem:[%s452 + $0xc0] sm:$0xff]
                  %459 = vst [vmem:[%s453 + $0x10] sm:$0xff] %v458
                  %v460 = vld [vmem:[%s452 + $0x120] sm:$0xff]
                  %461 = vst [vmem:[%s453 + $0x18] sm:$0xff] %v460
                $region86: #{dwconv_bn.1} parent=80 // loop_footer
                  %s451 = sadd.s32 1, %s447
                $region87: #{dwconv_bn.1} parent=80 // loop_footer_branch
                  %446 = sbr.rel target = $region83
                $region88: #{dwconv_bn.1} parent=80 // loop_exit
                  _
              $region81: #{dwconv_bn.1} parent=65 // pred_fallthru
                _
              // Predicated region
              $region89: #{dwconv_bn.1} parent=65 // pred_check
                _
              $region90: #{dwconv_bn.1} parent=65 // pred_check_branch
                %463 = sbr.rel target = $region92
              $region91: #{dwconv_bn.1} parent=65 // pred_region
                _
              $region92: #{dwconv_bn.1} parent=65 // pred_fallthru
                _
            $region66: #{dwconv_bn.1} parent=61 // pred_fallthru
              _
            // Predicated region
            $region67: #{dwconv_bn.1} parent=61 // pred_check
              _
            $region68: #{dwconv_bn.1} parent=61 // pred_check_branch
              %426 = sbr.rel target = $region70
            $region69: #{dwconv_bn.1} parent=61 // pred_region
              loop: start=0, step=1, limit=1
              $region71: #{dwconv_bn.1} parent=69 // loop_pre_header
                _
              $region72: #{dwconv_bn.1} parent=69 // loop_header
                %s429 = sphi 0, %s433
                %p430 = scmp.ge.s32.totalorder %s429, 1
                %s434 = sphi %s420, %s420
                %s435 = sphi %s418, %s418
              $region73: #{dwconv_bn.1} parent=69 // loop_header_branch
                %432 = sbr.rel (%p430) target = $region77
              $region74: #{dwconv_bn.1} parent=69 // loop_body
                %v436 = vld [vmem:[%s434] sm:$0xff]
                %437 = vst [vmem:[%s435] sm:$0xff] %v436
                %v438 = vld [vmem:[%s434 + $0x60] sm:$0xff]
                %439 = vst [vmem:[%s435 + $0x8] sm:$0xff] %v438
                %v440 = vld [vmem:[%s434 + $0xc0] sm:$0xff]
                %441 = vst [vmem:[%s435 + $0x10] sm:$0xff] %v440
                %v442 = vld [vmem:[%s434 + $0x120] sm:$0xff]
                %443 = vst [vmem:[%s435 + $0x18] sm:$0xff] %v442
              $region75: #{dwconv_bn.1} parent=69 // loop_footer
                %s433 = sadd.s32 1, %s429
              $region76: #{dwconv_bn.1} parent=69 // loop_footer_branch
                %428 = sbr.rel target = $region72
              $region77: #{dwconv_bn.1} parent=69 // loop_exit
                _
            $region70: #{dwconv_bn.1} parent=61 // pred_fallthru
              _
          $region62: #{dwconv_bn.1} parent=57 // pred_fallthru
            _
          %464 = vnop
        $region58: #{dwconv_bn.1} parent=15 // pred_fallthru
          _
        // Predicated region
        $region93: #{dwconv_bn.1} parent=15 // pred_check
          %p465 = pneg %p82
        $region94: #{dwconv_bn.1} parent=15 // pred_check_branch
          %467 = sbr.rel (%p465) target = $region96
        $region95: #{dwconv_bn.1} parent=15 // pred_region
          %p468 = scmp.lt.s32.totalorder %s10, 11
          %s469 = scalar_select %p468, %s10, 11
          %s470 = scalar_lea.vmem %s2, %s469
        $region96: #{dwconv_bn.1} parent=15 // pred_fallthru
          _
        // Predicated region
        $region97: #{dwconv_bn.1} parent=15 // pred_check
          %p471 = pneg %p108
        $region98: #{dwconv_bn.1} parent=15 // pred_check_branch
          %473 = sbr.rel (%p471) target = $region100
        $region99: #{dwconv_bn.1} parent=15 // pred_region
          %p474 = scmp.lt.s32.totalorder %s10, 11
          %s475 = scalar_select %p474, %s10, 11
          %s476 = scalar_lea.vmem %s3, %s475
        $region100: #{dwconv_bn.1} parent=15 // pred_fallthru
          _
      $region16: #{dwconv_bn.1} parent=5 // pred_fallthru
        _
      %p477 = scmp.le.s32.totalorder 1, %s10
      %p478 = scmp.lt.s32.totalorder %s10, 13
      %p479 = pnand %p477, %p478
      %p480 = pneg %p479
      // Predicated region
      $region101: #{dwconv_bn.1} parent=5 // pred_check
        _
      $region102: #{dwconv_bn.1} parent=5 // pred_check_branch
        %482 = sbr.rel (%p479) target = $region104
      $region103: #{dwconv_bn.1} parent=5 // pred_region
        %s483 = ssub.s32 %s10, 1
        %s484 = sand.u32 %s23, 1
        %s485 = sand.u32 %s23, 1
        %s486 = smul.addr %s485, 432
        %s487 = scalar_lea.vmem [#allocation2], %s486
        // Predicated region
        $region105: #{dwconv_bn.1} parent=103 // pred_check
          %p488 = pneg %p36
        $region106: #{dwconv_bn.1} parent=103 // pred_check_branch
          %490 = sbr.rel (%p488) target = $region108
        $region107: #{dwconv_bn.1} parent=103 // pred_region
          _
        $region108: #{dwconv_bn.1} parent=103 // pred_fallthru
          _
        %s491 = sand.u32 %s49, 1
        %s492 = sand.u32 %s49, 1
        %s493 = smul.addr %s492, 32
        %s494 = scalar_lea.vmem [#allocation3], %s493
        // Predicated region
        $region109: #{dwconv_bn.1} parent=103 // pred_check
          %p495 = pneg %p62
        $region110: #{dwconv_bn.1} parent=103 // pred_check_branch
          %497 = sbr.rel (%p495) target = $region112
        $region111: #{dwconv_bn.1} parent=103 // pred_region
          _
        $region112: #{dwconv_bn.1} parent=103 // pred_fallthru
          _
        %s498 = sand.u32 %s23, 1
        %s499 = sand.u32 %s23, 1
        %s500 = smul.addr %s499, 432
        %s501 = scalar_lea.vmem [#allocation2], %s500
        %p502 = pneg %p36
        %p503 = pneg %p33
        %s504 = sand.u32 %s49, 1
        %s505 = sand.u32 %s49, 1
        %s506 = smul.addr %s505, 32
        %s507 = scalar_lea.vmem [#allocation3], %s506
        %p508 = pneg %p62
        %p509 = pneg %p59
        %p510 = scmp.lt.s32.totalorder %s15, 11
        %s511 = scalar_select %p510, %s15, 11
        %s512 = scalar_lea.vmem %s2, %s511
        %p513 = pneg %p88
        %p514 = pneg %p85
        %p515 = scmp.lt.s32.totalorder %s15, 11
        %s516 = scalar_select %p515, %s15, 11
        %s517 = scalar_lea.vmem %s3, %s516
        %p518 = pneg %p114
        %p519 = pneg %p111
        %p520 = pneg %p140
        %p521 = pneg %p137
        %s522 = sand.u32 %s127, 1
        %s523 = sand.u32 %s127, 1
        %s524 = smul.addr %s523, 224
        %s525 = scalar_lea.vmem [#allocation4], %s524
        %p526 = scmp.lt.s32.totalorder %s15, 11
        %s527 = scalar_select %p526, %s15, 11
        %s528 = scalar_lea.vmem %s2, %s527
        %p529 = scmp.lt.s32.totalorder %s15, 11
        %s530 = scalar_select %p529, %s15, 11
        %s531 = scalar_lea.vmem %s3, %s530
        %v532 = vld [vmem:[%s494] sm:$0xff]
        %v533 = vld [vmem:[%s494 + $0x8] sm:$0xff]
        %v534 = vld [vmem:[%s494 + $0x10] sm:$0xff]
        %v535 = vld [vmem:[%s494 + $0x18] sm:$0x1]
        %v536 = vld [vmem:[%s487] sm:$0xff]
        %v537 = vld [vmem:[%s487 + $0x8] sm:$0x3f]
        %v538 = vld [vmem:[%s487 + $0x18] sm:$0xff]
        %v539 = vld [vmem:[%s487 + $0x20] sm:$0x3f]
        %v540 = vld [vmem:[%s487 + $0x30] sm:$0xff]
        %v541 = vld [vmem:[%s487 + $0x38] sm:$0x3f]
        %v542 = vld [vmem:[%s487 + $0x48] sm:$0xff]
        %v543 = vld [vmem:[%s487 + $0x50] sm:$0x3f]
        %v544 = vld [vmem:[%s487 + $0x60] sm:$0xff]
        %v545 = vld [vmem:[%s487 + $0x68] sm:$0x3f]
        %v546 = vld [vmem:[%s487 + $0x78] sm:$0xff]
        %v547 = vld [vmem:[%s487 + $0x80] sm:$0x3f]
        %v548 = vld [vmem:[%s487 + $0x90] sm:$0xff]
        %v549 = vld [vmem:[%s487 + $0x98] sm:$0x3f]
        %v550 = vld [vmem:[%s487 + $0xa8] sm:$0xff]
        %v551 = vld [vmem:[%s487 + $0xb0] sm:$0x3f]
        %v552 = vld [vmem:[%s487 + $0xc0] sm:$0xff]
        %v553 = vld [vmem:[%s487 + $0xc8] sm:$0x3f]
        %v554 = vld [vmem:[%s487 + $0xd8] sm:$0xff]
        %v555 = vld [vmem:[%s487 + $0xe0] sm:$0x3f]
        %v556 = vld [vmem:[%s487 + $0xf0] sm:$0xff]
        %v557 = vld [vmem:[%s487 + $0xf8] sm:$0x3f]
        %v558 = vld [vmem:[%s487 + $0x108] sm:$0xff]
        %v559 = vld [vmem:[%s487 + $0x110] sm:$0x3f]
        %v560 = vld [vmem:[%s487 + $0x120] sm:$0xff]
        %v561 = vld [vmem:[%s487 + $0x128] sm:$0x3f]
        %v562 = vld [vmem:[%s487 + $0x138] sm:$0xff]
        %v563 = vld [vmem:[%s487 + $0x140] sm:$0x3f]
        %v564 = vlaneseq
        %v565 = vshrl.u32 %v564, 7
        %v566 = vsub.s32 0, %v565
        %v567 = vrot.slane %v532, %v566
        %v568 = vmul.f32 %v536, %v567
        %v569 = vmul.f32 %v537, %v567
        %v570 = vmul.f32 %v538, %v567
        %v571 = vmul.f32 %v539, %v567
        %v572 = vmul.f32 %v540, %v567
        %v573 = vmul.f32 %v541, %v567
        %v574 = vmul.f32 %v542, %v567
        %v575 = vmul.f32 %v543, %v567
        %v576 = vmul.f32 %v544, %v567
        %v577 = vmul.f32 %v545, %v567
        %v578 = vmul.f32 %v546, %v567
        %v579 = vmul.f32 %v547, %v567
        %v580 = vmul.f32 %v548, %v567
        %v581 = vmul.f32 %v549, %v567
        %v582 = vmul.f32 %v550, %v567
        %v583 = vmul.f32 %v551, %v567
        %v584 = vmul.f32 %v552, %v567
        %v585 = vmul.f32 %v553, %v567
        %v586 = vmul.f32 %v554, %v567
        %v587 = vmul.f32 %v555, %v567
        %v588 = vmul.f32 %v556, %v567
        %v589 = vmul.f32 %v557, %v567
        %v590 = vmul.f32 %v558, %v567
        %v591 = vmul.f32 %v559, %v567
        %v592 = vmul.f32 %v560, %v567
        %v593 = vmul.f32 %v561, %v567
        %v594 = vmul.f32 %v562, %v567
        %v595 = vmul.f32 %v563, %v567
        %v596 = vld [vmem:[%s487 + $0x1] sm:$0xff]
        %v597 = vld [vmem:[%s487 + $0x9] sm:$0x3f]
        %v598 = vld [vmem:[%s487 + $0x19] sm:$0xff]
        %v599 = vld [vmem:[%s487 + $0x21] sm:$0x3f]
        %v600 = vld [vmem:[%s487 + $0x31] sm:$0xff]
        %v601 = vld [vmem:[%s487 + $0x39] sm:$0x3f]
        %v602 = vld [vmem:[%s487 + $0x49] sm:$0xff]
        %v603 = vld [vmem:[%s487 + $0x51] sm:$0x3f]
        %v604 = vld [vmem:[%s487 + $0x61] sm:$0xff]
        %v605 = vld [vmem:[%s487 + $0x69] sm:$0x3f]
        %v606 = vld [vmem:[%s487 + $0x79] sm:$0xff]
        %v607 = vld [vmem:[%s487 + $0x81] sm:$0x3f]
        %v608 = vld [vmem:[%s487 + $0x91] sm:$0xff]
        %v609 = vld [vmem:[%s487 + $0x99] sm:$0x3f]
        %v610 = vld [vmem:[%s487 + $0xa9] sm:$0xff]
        %v611 = vld [vmem:[%s487 + $0xb1] sm:$0x3f]
        %v612 = vld [vmem:[%s487 + $0xc1] sm:$0xff]
        %v613 = vld [vmem:[%s487 + $0xc9] sm:$0x3f]
        %v614 = vld [vmem:[%s487 + $0xd9] sm:$0xff]
        %v615 = vld [vmem:[%s487 + $0xe1] sm:$0x3f]
        %v616 = vld [vmem:[%s487 + $0xf1] sm:$0xff]
        %v617 = vld [vmem:[%s487 + $0xf9] sm:$0x3f]
        %v618 = vld [vmem:[%s487 + $0x109] sm:$0xff]
        %v619 = vld [vmem:[%s487 + $0x111] sm:$0x3f]
        %v620 = vld [vmem:[%s487 + $0x121] sm:$0xff]
        %v621 = vld [vmem:[%s487 + $0x129] sm:$0x3f]
        %v622 = vld [vmem:[%s487 + $0x139] sm:$0xff]
        %v623 = vld [vmem:[%s487 + $0x141] sm:$0x3f]
        %v624 = vlaneseq
        %v625 = vshrl.u32 %v624, 7
        %v626 = vsub.s32 1, %v625
        %v627 = vrot.slane %v532, %v626
        %v628 = vmul.f32 %v596, %v627
        %v629 = vmul.f32 %v597, %v627
        %v630 = vmul.f32 %v598, %v627
        %v631 = vmul.f32 %v599, %v627
        %v632 = vmul.f32 %v600, %v627
        %v633 = vmul.f32 %v601, %v627
        %v634 = vmul.f32 %v602, %v627
        %v635 = vmul.f32 %v603, %v627
        %v636 = vmul.f32 %v604, %v627
        %v637 = vmul.f32 %v605, %v627
        %v638 = vmul.f32 %v606, %v627
        %v639 = vmul.f32 %v607, %v627
        %v640 = vmul.f32 %v608, %v627
        %v641 = vmul.f32 %v609, %v627
        %v642 = vmul.f32 %v610, %v627
        %v643 = vmul.f32 %v611, %v627
        %v644 = vmul.f32 %v612, %v627
        %v645 = vmul.f32 %v613, %v627
        %v646 = vmul.f32 %v614, %v627
        %v647 = vmul.f32 %v615, %v627
        %v648 = vmul.f32 %v616, %v627
        %v649 = vmul.f32 %v617, %v627
        %v650 = vmul.f32 %v618, %v627
        %v651 = vmul.f32 %v619, %v627
        %v652 = vmul.f32 %v620, %v627
        %v653 = vmul.f32 %v621, %v627
        %v654 = vmul.f32 %v622, %v627
        %v655 = vmul.f32 %v623, %v627
        %v656 = vadd.f32 %v568, %v628
        %v657 = vadd.f32 %v569, %v629
        %v658 = vadd.f32 %v570, %v630
        %v659 = vadd.f32 %v571, %v631
        %v660 = vadd.f32 %v572, %v632
        %v661 = vadd.f32 %v573, %v633
        %v662 = vadd.f32 %v574, %v634
        %v663 = vadd.f32 %v575, %v635
        %v664 = vadd.f32 %v576, %v636
        %v665 = vadd.f32 %v577, %v637
        %v666 = vadd.f32 %v578, %v638
        %v667 = vadd.f32 %v579, %v639
        %v668 = vadd.f32 %v580, %v640
        %v669 = vadd.f32 %v581, %v641
        %v670 = vadd.f32 %v582, %v642
        %v671 = vadd.f32 %v583, %v643
        %v672 = vadd.f32 %v584, %v644
        %v673 = vadd.f32 %v585, %v645
        %v674 = vadd.f32 %v586, %v646
        %v675 = vadd.f32 %v587, %v647
        %v676 = vadd.f32 %v588, %v648
        %v677 = vadd.f32 %v589, %v649
        %v678 = vadd.f32 %v590, %v650
        %v679 = vadd.f32 %v591, %v651
        %v680 = vadd.f32 %v592, %v652
        %v681 = vadd.f32 %v593, %v653
        %v682 = vadd.f32 %v594, %v654
        %v683 = vadd.f32 %v595, %v655
        %v684 = vld [vmem:[%s487 + $0x2] sm:$0xff]
        %v685 = vld [vmem:[%s487 + $0xa] sm:$0x3f]
        %v686 = vld [vmem:[%s487 + $0x1a] sm:$0xff]
        %v687 = vld [vmem:[%s487 + $0x22] sm:$0x3f]
        %v688 = vld [vmem:[%s487 + $0x32] sm:$0xff]
        %v689 = vld [vmem:[%s487 + $0x3a] sm:$0x3f]
        %v690 = vld [vmem:[%s487 + $0x4a] sm:$0xff]
        %v691 = vld [vmem:[%s487 + $0x52] sm:$0x3f]
        %v692 = vld [vmem:[%s487 + $0x62] sm:$0xff]
        %v693 = vld [vmem:[%s487 + $0x6a] sm:$0x3f]
        %v694 = vld [vmem:[%s487 + $0x7a] sm:$0xff]
        %v695 = vld [vmem:[%s487 + $0x82] sm:$0x3f]
        %v696 = vld [vmem:[%s487 + $0x92] sm:$0xff]
        %v697 = vld [vmem:[%s487 + $0x9a] sm:$0x3f]
        %v698 = vld [vmem:[%s487 + $0xaa] sm:$0xff]
        %v699 = vld [vmem:[%s487 + $0xb2] sm:$0x3f]
        %v700 = vld [vmem:[%s487 + $0xc2] sm:$0xff]
        %v701 = vld [vmem:[%s487 + $0xca] sm:$0x3f]
        %v702 = vld [vmem:[%s487 + $0xda] sm:$0xff]
        %v703 = vld [vmem:[%s487 + $0xe2] sm:$0x3f]
        %v704 = vld [vmem:[%s487 + $0xf2] sm:$0xff]
        %v705 = vld [vmem:[%s487 + $0xfa] sm:$0x3f]
        %v706 = vld [vmem:[%s487 + $0x10a] sm:$0xff]
        %v707 = vld [vmem:[%s487 + $0x112] sm:$0x3f]
        %v708 = vld [vmem:[%s487 + $0x122] sm:$0xff]
        %v709 = vld [vmem:[%s487 + $0x12a] sm:$0x3f]
        %v710 = vld [vmem:[%s487 + $0x13a] sm:$0xff]
        %v711 = vld [vmem:[%s487 + $0x142] sm:$0x3f]
        %v712 = vlaneseq
        %v713 = vshrl.u32 %v712, 7
        %v714 = vsub.s32 2, %v713
        %v715 = vrot.slane %v532, %v714
        %v716 = vmul.f32 %v684, %v715
        %v717 = vmul.f32 %v685, %v715
        %v718 = vmul.f32 %v686, %v715
        %v719 = vmul.f32 %v687, %v715
        %v720 = vmul.f32 %v688, %v715
        %v721 = vmul.f32 %v689, %v715
        %v722 = vmul.f32 %v690, %v715
        %v723 = vmul.f32 %v691, %v715
        %v724 = vmul.f32 %v692, %v715
        %v725 = vmul.f32 %v693, %v715
        %v726 = vmul.f32 %v694, %v715
        %v727 = vmul.f32 %v695, %v715
        %v728 = vmul.f32 %v696, %v715
        %v729 = vmul.f32 %v697, %v715
        %v730 = vmul.f32 %v698, %v715
        %v731 = vmul.f32 %v699, %v715
        %v732 = vmul.f32 %v700, %v715
        %v733 = vmul.f32 %v701, %v715
        %v734 = vmul.f32 %v702, %v715
        %v735 = vmul.f32 %v703, %v715
        %v736 = vmul.f32 %v704, %v715
        %v737 = vmul.f32 %v705, %v715
        %v738 = vmul.f32 %v706, %v715
        %v739 = vmul.f32 %v707, %v715
        %v740 = vmul.f32 %v708, %v715
        %v741 = vmul.f32 %v709, %v715
        %v742 = vmul.f32 %v710, %v715
        %v743 = vmul.f32 %v711, %v715
        %v744 = vadd.f32 %v656, %v716
        %v745 = vadd.f32 %v657, %v717
        %v746 = vadd.f32 %v658, %v718
        %v747 = vadd.f32 %v659, %v719
        %v748 = vadd.f32 %v660, %v720
        %v749 = vadd.f32 %v661, %v721
        %v750 = vadd.f32 %v662, %v722
        %v751 = vadd.f32 %v663, %v723
        %v752 = vadd.f32 %v664, %v724
        %v753 = vadd.f32 %v665, %v725
        %v754 = vadd.f32 %v666, %v726
        %v755 = vadd.f32 %v667, %v727
        %v756 = vadd.f32 %v668, %v728
        %v757 = vadd.f32 %v669, %v729
        %v758 = vadd.f32 %v670, %v730
        %v759 = vadd.f32 %v671, %v731
        %v760 = vadd.f32 %v672, %v732
        %v761 = vadd.f32 %v673, %v733
        %v762 = vadd.f32 %v674, %v734
        %v763 = vadd.f32 %v675, %v735
        %v764 = vadd.f32 %v676, %v736
        %v765 = vadd.f32 %v677, %v737
        %v766 = vadd.f32 %v678, %v738
        %v767 = vadd.f32 %v679, %v739
        %v768 = vadd.f32 %v680, %v740
        %v769 = vadd.f32 %v681, %v741
        %v770 = vadd.f32 %v682, %v742
        %v771 = vadd.f32 %v683, %v743
        %v772 = vld [vmem:[%s487 + $0x3] sm:$0xff]
        %v773 = vld [vmem:[%s487 + $0xb] sm:$0x3f]
        %v774 = vld [vmem:[%s487 + $0x1b] sm:$0xff]
        %v775 = vld [vmem:[%s487 + $0x23] sm:$0x3f]
        %v776 = vld [vmem:[%s487 + $0x33] sm:$0xff]
        %v777 = vld [vmem:[%s487 + $0x3b] sm:$0x3f]
        %v778 = vld [vmem:[%s487 + $0x4b] sm:$0xff]
        %v779 = vld [vmem:[%s487 + $0x53] sm:$0x3f]
        %v780 = vld [vmem:[%s487 + $0x63] sm:$0xff]
        %v781 = vld [vmem:[%s487 + $0x6b] sm:$0x3f]
        %v782 = vld [vmem:[%s487 + $0x7b] sm:$0xff]
        %v783 = vld [vmem:[%s487 + $0x83] sm:$0x3f]
        %v784 = vld [vmem:[%s487 + $0x93] sm:$0xff]
        %v785 = vld [vmem:[%s487 + $0x9b] sm:$0x3f]
        %v786 = vld [vmem:[%s487 + $0xab] sm:$0xff]
        %v787 = vld [vmem:[%s487 + $0xb3] sm:$0x3f]
        %v788 = vld [vmem:[%s487 + $0xc3] sm:$0xff]
        %v789 = vld [vmem:[%s487 + $0xcb] sm:$0x3f]
        %v790 = vld [vmem:[%s487 + $0xdb] sm:$0xff]
        %v791 = vld [vmem:[%s487 + $0xe3] sm:$0x3f]
        %v792 = vld [vmem:[%s487 + $0xf3] sm:$0xff]
        %v793 = vld [vmem:[%s487 + $0xfb] sm:$0x3f]
        %v794 = vld [vmem:[%s487 + $0x10b] sm:$0xff]
        %v795 = vld [vmem:[%s487 + $0x113] sm:$0x3f]
        %v796 = vld [vmem:[%s487 + $0x123] sm:$0xff]
        %v797 = vld [vmem:[%s487 + $0x12b] sm:$0x3f]
        %v798 = vld [vmem:[%s487 + $0x13b] sm:$0xff]
        %v799 = vld [vmem:[%s487 + $0x143] sm:$0x3f]
        %v800 = vlaneseq
        %v801 = vshrl.u32 %v800, 7
        %v802 = vsub.s32 3, %v801
        %v803 = vrot.slane %v532, %v802
        %v804 = vmul.f32 %v772, %v803
        %v805 = vmul.f32 %v773, %v803
        %v806 = vmul.f32 %v774, %v803
        %v807 = vmul.f32 %v775, %v803
        %v808 = vmul.f32 %v776, %v803
        %v809 = vmul.f32 %v777, %v803
        %v810 = vmul.f32 %v778, %v803
        %v811 = vmul.f32 %v779, %v803
        %v812 = vmul.f32 %v780, %v803
        %v813 = vmul.f32 %v781, %v803
        %v814 = vmul.f32 %v782, %v803
        %v815 = vmul.f32 %v783, %v803
        %v816 = vmul.f32 %v784, %v803
        %v817 = vmul.f32 %v785, %v803
        %v818 = vmul.f32 %v786, %v803
        %v819 = vmul.f32 %v787, %v803
        %v820 = vmul.f32 %v788, %v803
        %v821 = vmul.f32 %v789, %v803
        %v822 = vmul.f32 %v790, %v803
        %v823 = vmul.f32 %v791, %v803
        %v824 = vmul.f32 %v792, %v803
        %v825 = vmul.f32 %v793, %v803
        %v826 = vmul.f32 %v794, %v803
        %v827 = vmul.f32 %v795, %v803
        %v828 = vmul.f32 %v796, %v803
        %v829 = vmul.f32 %v797, %v803
        %v830 = vmul.f32 %v798, %v803
        %v831 = vmul.f32 %v799, %v803
        %v832 = vadd.f32 %v744, %v804
        %v833 = vadd.f32 %v745, %v805
        %v834 = vadd.f32 %v746, %v806
        %v835 = vadd.f32 %v747, %v807
        %v836 = vadd.f32 %v748, %v808
        %v837 = vadd.f32 %v749, %v809
        %v838 = vadd.f32 %v750, %v810
        %v839 = vadd.f32 %v751, %v811
        %v840 = vadd.f32 %v752, %v812
        %v841 = vadd.f32 %v753, %v813
        %v842 = vadd.f32 %v754, %v814
        %v843 = vadd.f32 %v755, %v815
        %v844 = vadd.f32 %v756, %v816
        %v845 = vadd.f32 %v757, %v817
        %v846 = vadd.f32 %v758, %v818
        %v847 = vadd.f32 %v759, %v819
        %v848 = vadd.f32 %v760, %v820
        %v849 = vadd.f32 %v761, %v821
        %v850 = vadd.f32 %v762, %v822
        %v851 = vadd.f32 %v763, %v823
        %v852 = vadd.f32 %v764, %v824
        %v853 = vadd.f32 %v765, %v825
        %v854 = vadd.f32 %v766, %v826
        %v855 = vadd.f32 %v767, %v827
        %v856 = vadd.f32 %v768, %v828
        %v857 = vadd.f32 %v769, %v829
        %v858 = vadd.f32 %v770, %v830
        %v859 = vadd.f32 %v771, %v831
        %v860 = vld [vmem:[%s487 + $0x4] sm:$0xff]
        %v861 = vld [vmem:[%s487 + $0xc] sm:$0x3f]
        %v862 = vld [vmem:[%s487 + $0x1c] sm:$0xff]
        %v863 = vld [vmem:[%s487 + $0x24] sm:$0x3f]
        %v864 = vld [vmem:[%s487 + $0x34] sm:$0xff]
        %v865 = vld [vmem:[%s487 + $0x3c] sm:$0x3f]
        %v866 = vld [vmem:[%s487 + $0x4c] sm:$0xff]
        %v867 = vld [vmem:[%s487 + $0x54] sm:$0x3f]
        %v868 = vld [vmem:[%s487 + $0x64] sm:$0xff]
        %v869 = vld [vmem:[%s487 + $0x6c] sm:$0x3f]
        %v870 = vld [vmem:[%s487 + $0x7c] sm:$0xff]
        %v871 = vld [vmem:[%s487 + $0x84] sm:$0x3f]
        %v872 = vld [vmem:[%s487 + $0x94] sm:$0xff]
        %v873 = vld [vmem:[%s487 + $0x9c] sm:$0x3f]
        %v874 = vld [vmem:[%s487 + $0xac] sm:$0xff]
        %v875 = vld [vmem:[%s487 + $0xb4] sm:$0x3f]
        %v876 = vld [vmem:[%s487 + $0xc4] sm:$0xff]
        %v877 = vld [vmem:[%s487 + $0xcc] sm:$0x3f]
        %v878 = vld [vmem:[%s487 + $0xdc] sm:$0xff]
        %v879 = vld [vmem:[%s487 + $0xe4] sm:$0x3f]
        %v880 = vld [vmem:[%s487 + $0xf4] sm:$0xff]
        %v881 = vld [vmem:[%s487 + $0xfc] sm:$0x3f]
        %v882 = vld [vmem:[%s487 + $0x10c] sm:$0xff]
        %v883 = vld [vmem:[%s487 + $0x114] sm:$0x3f]
        %v884 = vld [vmem:[%s487 + $0x124] sm:$0xff]
        %v885 = vld [vmem:[%s487 + $0x12c] sm:$0x3f]
        %v886 = vld [vmem:[%s487 + $0x13c] sm:$0xff]
        %v887 = vld [vmem:[%s487 + $0x144] sm:$0x3f]
        %v888 = vlaneseq
        %v889 = vshrl.u32 %v888, 7
        %v890 = vsub.s32 4, %v889
        %v891 = vrot.slane %v532, %v890
        %v892 = vmul.f32 %v860, %v891
        %v893 = vmul.f32 %v861, %v891
        %v894 = vmul.f32 %v862, %v891
        %v895 = vmul.f32 %v863, %v891
        %v896 = vmul.f32 %v864, %v891
        %v897 = vmul.f32 %v865, %v891
        %v898 = vmul.f32 %v866, %v891
        %v899 = vmul.f32 %v867, %v891
        %v900 = vmul.f32 %v868, %v891
        %v901 = vmul.f32 %v869, %v891
        %v902 = vmul.f32 %v870, %v891
        %v903 = vmul.f32 %v871, %v891
        %v904 = vmul.f32 %v872, %v891
        %v905 = vmul.f32 %v873, %v891
        %v906 = vmul.f32 %v874, %v891
        %v907 = vmul.f32 %v875, %v891
        %v908 = vmul.f32 %v876, %v891
        %v909 = vmul.f32 %v877, %v891
        %v910 = vmul.f32 %v878, %v891
        %v911 = vmul.f32 %v879, %v891
        %v912 = vmul.f32 %v880, %v891
        %v913 = vmul.f32 %v881, %v891
        %v914 = vmul.f32 %v882, %v891
        %v915 = vmul.f32 %v883, %v891
        %v916 = vmul.f32 %v884, %v891
        %v917 = vmul.f32 %v885, %v891
        %v918 = vmul.f32 %v886, %v891
        %v919 = vmul.f32 %v887, %v891
        %v920 = vadd.f32 %v832, %v892
        %v921 = vadd.f32 %v833, %v893
        %v922 = vadd.f32 %v834, %v894
        %v923 = vadd.f32 %v835, %v895
        %v924 = vadd.f32 %v836, %v896
        %v925 = vadd.f32 %v837, %v897
        %v926 = vadd.f32 %v838, %v898
        %v927 = vadd.f32 %v839, %v899
        %v928 = vadd.f32 %v840, %v900
        %v929 = vadd.f32 %v841, %v901
        %v930 = vadd.f32 %v842, %v902
        %v931 = vadd.f32 %v843, %v903
        %v932 = vadd.f32 %v844, %v904
        %v933 = vadd.f32 %v845, %v905
        %v934 = vadd.f32 %v846, %v906
        %v935 = vadd.f32 %v847, %v907
        %v936 = vadd.f32 %v848, %v908
        %v937 = vadd.f32 %v849, %v909
        %v938 = vadd.f32 %v850, %v910
        %v939 = vadd.f32 %v851, %v911
        %v940 = vadd.f32 %v852, %v912
        %v941 = vadd.f32 %v853, %v913
        %v942 = vadd.f32 %v854, %v914
        %v943 = vadd.f32 %v855, %v915
        %v944 = vadd.f32 %v856, %v916
        %v945 = vadd.f32 %v857, %v917
        %v946 = vadd.f32 %v858, %v918
        %v947 = vadd.f32 %v859, %v919
        %s948 = scalar_lea.vmem %s487, 24 [#allocation2]
        %v949 = vld [vmem:[%s948] sm:$0xff]
        %v950 = vld [vmem:[%s948 + $0x8] sm:$0x3f]
        %v951 = vld [vmem:[%s948 + $0x18] sm:$0xff]
        %v952 = vld [vmem:[%s948 + $0x20] sm:$0x3f]
        %v953 = vld [vmem:[%s948 + $0x30] sm:$0xff]
        %v954 = vld [vmem:[%s948 + $0x38] sm:$0x3f]
        %v955 = vld [vmem:[%s948 + $0x48] sm:$0xff]
        %v956 = vld [vmem:[%s948 + $0x50] sm:$0x3f]
        %v957 = vld [vmem:[%s948 + $0x60] sm:$0xff]
        %v958 = vld [vmem:[%s948 + $0x68] sm:$0x3f]
        %v959 = vld [vmem:[%s948 + $0x78] sm:$0xff]
        %v960 = vld [vmem:[%s948 + $0x80] sm:$0x3f]
        %v961 = vld [vmem:[%s948 + $0x90] sm:$0xff]
        %v962 = vld [vmem:[%s948 + $0x98] sm:$0x3f]
        %v963 = vld [vmem:[%s948 + $0xa8] sm:$0xff]
        %v964 = vld [vmem:[%s948 + $0xb0] sm:$0x3f]
        %v965 = vld [vmem:[%s948 + $0xc0] sm:$0xff]
        %v966 = vld [vmem:[%s948 + $0xc8] sm:$0x3f]
        %v967 = vld [vmem:[%s948 + $0xd8] sm:$0xff]
        %v968 = vld [vmem:[%s948 + $0xe0] sm:$0x3f]
        %v969 = vld [vmem:[%s948 + $0xf0] sm:$0xff]
        %v970 = vld [vmem:[%s948 + $0xf8] sm:$0x3f]
        %v971 = vld [vmem:[%s948 + $0x108] sm:$0xff]
        %v972 = vld [vmem:[%s948 + $0x110] sm:$0x3f]
        %v973 = vld [vmem:[%s948 + $0x120] sm:$0xff]
        %v974 = vld [vmem:[%s948 + $0x128] sm:$0x3f]
        %v975 = vld [vmem:[%s948 + $0x138] sm:$0xff]
        %v976 = vld [vmem:[%s948 + $0x140] sm:$0x3f]
        %v977 = vlaneseq
        %v978 = vshrl.u32 %v977, 7
        %v979 = vsub.s32 5, %v978
        %v980 = vrot.slane %v532, %v979
        %v981 = vmul.f32 %v949, %v980
        %v982 = vmul.f32 %v950, %v980
        %v983 = vmul.f32 %v951, %v980
        %v984 = vmul.f32 %v952, %v980
        %v985 = vmul.f32 %v953, %v980
        %v986 = vmul.f32 %v954, %v980
        %v987 = vmul.f32 %v955, %v980
        %v988 = vmul.f32 %v956, %v980
        %v989 = vmul.f32 %v957, %v980
        %v990 = vmul.f32 %v958, %v980
        %v991 = vmul.f32 %v959, %v980
        %v992 = vmul.f32 %v960, %v980
        %v993 = vmul.f32 %v961, %v980
        %v994 = vmul.f32 %v962, %v980
        %v995 = vmul.f32 %v963, %v980
        %v996 = vmul.f32 %v964, %v980
        %v997 = vmul.f32 %v965, %v980
        %v998 = vmul.f32 %v966, %v980
        %v999 = vmul.f32 %v967, %v980
        %v1000 = vmul.f32 %v968, %v980
        %v1001 = vmul.f32 %v969, %v980
        %v1002 = vmul.f32 %v970, %v980
        %v1003 = vmul.f32 %v971, %v980
        %v1004 = vmul.f32 %v972, %v980
        %v1005 = vmul.f32 %v973, %v980
        %v1006 = vmul.f32 %v974, %v980
        %v1007 = vmul.f32 %v975, %v980
        %v1008 = vmul.f32 %v976, %v980
        %v1009 = vadd.f32 %v920, %v981
        %v1010 = vadd.f32 %v921, %v982
        %v1011 = vadd.f32 %v922, %v983
        %v1012 = vadd.f32 %v923, %v984
        %v1013 = vadd.f32 %v924, %v985
        %v1014 = vadd.f32 %v925, %v986
        %v1015 = vadd.f32 %v926, %v987
        %v1016 = vadd.f32 %v927, %v988
        %v1017 = vadd.f32 %v928, %v989
        %v1018 = vadd.f32 %v929, %v990
        %v1019 = vadd.f32 %v930, %v991
        %v1020 = vadd.f32 %v931, %v992
        %v1021 = vadd.f32 %v932, %v993
        %v1022 = vadd.f32 %v933, %v994
        %v1023 = vadd.f32 %v934, %v995
        %v1024 = vadd.f32 %v935, %v996
        %v1025 = vadd.f32 %v936, %v997
        %v1026 = vadd.f32 %v937, %v998
        %v1027 = vadd.f32 %v938, %v999
        %v1028 = vadd.f32 %v939, %v1000
        %v1029 = vadd.f32 %v940, %v1001
        %v1030 = vadd.f32 %v941, %v1002
        %v1031 = vadd.f32 %v942, %v1003
        %v1032 = vadd.f32 %v943, %v1004
        %v1033 = vadd.f32 %v944, %v1005
        %v1034 = vadd.f32 %v945, %v1006
        %v1035 = vadd.f32 %v946, %v1007
        %v1036 = vadd.f32 %v947, %v1008
        %v1037 = vld [vmem:[%s948 + $0x1] sm:$0xff]
        %v1038 = vld [vmem:[%s948 + $0x9] sm:$0x3f]
        %v1039 = vld [vmem:[%s948 + $0x19] sm:$0xff]
        %v1040 = vld [vmem:[%s948 + $0x21] sm:$0x3f]
        %v1041 = vld [vmem:[%s948 + $0x31] sm:$0xff]
        %v1042 = vld [vmem:[%s948 + $0x39] sm:$0x3f]
        %v1043 = vld [vmem:[%s948 + $0x49] sm:$0xff]
        %v1044 = vld [vmem:[%s948 + $0x51] sm:$0x3f]
        %v1045 = vld [vmem:[%s948 + $0x61] sm:$0xff]
        %v1046 = vld [vmem:[%s948 + $0x69] sm:$0x3f]
        %v1047 = vld [vmem:[%s948 + $0x79] sm:$0xff]
        %v1048 = vld [vmem:[%s948 + $0x81] sm:$0x3f]
        %v1049 = vld [vmem:[%s948 + $0x91] sm:$0xff]
        %v1050 = vld [vmem:[%s948 + $0x99] sm:$0x3f]
        %v1051 = vld [vmem:[%s948 + $0xa9] sm:$0xff]
        %v1052 = vld [vmem:[%s948 + $0xb1] sm:$0x3f]
        %v1053 = vld [vmem:[%s948 + $0xc1] sm:$0xff]
        %v1054 = vld [vmem:[%s948 + $0xc9] sm:$0x3f]
        %v1055 = vld [vmem:[%s948 + $0xd9] sm:$0xff]
        %v1056 = vld [vmem:[%s948 + $0xe1] sm:$0x3f]
        %v1057 = vld [vmem:[%s948 + $0xf1] sm:$0xff]
        %v1058 = vld [vmem:[%s948 + $0xf9] sm:$0x3f]
        %v1059 = vld [vmem:[%s948 + $0x109] sm:$0xff]
        %v1060 = vld [vmem:[%s948 + $0x111] sm:$0x3f]
        %v1061 = vld [vmem:[%s948 + $0x121] sm:$0xff]
        %v1062 = vld [vmem:[%s948 + $0x129] sm:$0x3f]
        %v1063 = vld [vmem:[%s948 + $0x139] sm:$0xff]
        %v1064 = vld [vmem:[%s948 + $0x141] sm:$0x3f]
        %v1065 = vlaneseq
        %v1066 = vshrl.u32 %v1065, 7
        %v1067 = vsub.s32 6, %v1066
        %v1068 = vrot.slane %v532, %v1067
        %v1069 = vmul.f32 %v1037, %v1068
        %v1070 = vmul.f32 %v1038, %v1068
        %v1071 = vmul.f32 %v1039, %v1068
        %v1072 = vmul.f32 %v1040, %v1068
        %v1073 = vmul.f32 %v1041, %v1068
        %v1074 = vmul.f32 %v1042, %v1068
        %v1075 = vmul.f32 %v1043, %v1068
        %v1076 = vmul.f32 %v1044, %v1068
        %v1077 = vmul.f32 %v1045, %v1068
        %v1078 = vmul.f32 %v1046, %v1068
        %v1079 = vmul.f32 %v1047, %v1068
        %v1080 = vmul.f32 %v1048, %v1068
        %v1081 = vmul.f32 %v1049, %v1068
        %v1082 = vmul.f32 %v1050, %v1068
        %v1083 = vmul.f32 %v1051, %v1068
        %v1084 = vmul.f32 %v1052, %v1068
        %v1085 = vmul.f32 %v1053, %v1068
        %v1086 = vmul.f32 %v1054, %v1068
        %v1087 = vmul.f32 %v1055, %v1068
        %v1088 = vmul.f32 %v1056, %v1068
        %v1089 = vmul.f32 %v1057, %v1068
        %v1090 = vmul.f32 %v1058, %v1068
        %v1091 = vmul.f32 %v1059, %v1068
        %v1092 = vmul.f32 %v1060, %v1068
        %v1093 = vmul.f32 %v1061, %v1068
        %v1094 = vmul.f32 %v1062, %v1068
        %v1095 = vmul.f32 %v1063, %v1068
        %v1096 = vmul.f32 %v1064, %v1068
        %v1097 = vadd.f32 %v1009, %v1069
        %v1098 = vadd.f32 %v1010, %v1070
        %v1099 = vadd.f32 %v1011, %v1071
        %v1100 = vadd.f32 %v1012, %v1072
        %v1101 = vadd.f32 %v1013, %v1073
        %v1102 = vadd.f32 %v1014, %v1074
        %v1103 = vadd.f32 %v1015, %v1075
        %v1104 = vadd.f32 %v1016, %v1076
        %v1105 = vadd.f32 %v1017, %v1077
        %v1106 = vadd.f32 %v1018, %v1078
        %v1107 = vadd.f32 %v1019, %v1079
        %v1108 = vadd.f32 %v1020, %v1080
        %v1109 = vadd.f32 %v1021, %v1081
        %v1110 = vadd.f32 %v1022, %v1082
        %v1111 = vadd.f32 %v1023, %v1083
        %v1112 = vadd.f32 %v1024, %v1084
        %v1113 = vadd.f32 %v1025, %v1085
        %v1114 = vadd.f32 %v1026, %v1086
        %v1115 = vadd.f32 %v1027, %v1087
        %v1116 = vadd.f32 %v1028, %v1088
        %v1117 = vadd.f32 %v1029, %v1089
        %v1118 = vadd.f32 %v1030, %v1090
        %v1119 = vadd.f32 %v1031, %v1091
        %v1120 = vadd.f32 %v1032, %v1092
        %v1121 = vadd.f32 %v1033, %v1093
        %v1122 = vadd.f32 %v1034, %v1094
        %v1123 = vadd.f32 %v1035, %v1095
        %v1124 = vadd.f32 %v1036, %v1096
        %v1125 = vld [vmem:[%s948 + $0x2] sm:$0xff]
        %v1126 = vld [vmem:[%s948 + $0xa] sm:$0x3f]
        %v1127 = vld [vmem:[%s948 + $0x1a] sm:$0xff]
        %v1128 = vld [vmem:[%s948 + $0x22] sm:$0x3f]
        %v1129 = vld [vmem:[%s948 + $0x32] sm:$0xff]
        %v1130 = vld [vmem:[%s948 + $0x3a] sm:$0x3f]
        %v1131 = vld [vmem:[%s948 + $0x4a] sm:$0xff]
        %v1132 = vld [vmem:[%s948 + $0x52] sm:$0x3f]
        %v1133 = vld [vmem:[%s948 + $0x62] sm:$0xff]
        %v1134 = vld [vmem:[%s948 + $0x6a] sm:$0x3f]
        %v1135 = vld [vmem:[%s948 + $0x7a] sm:$0xff]
        %v1136 = vld [vmem:[%s948 + $0x82] sm:$0x3f]
        %v1137 = vld [vmem:[%s948 + $0x92] sm:$0xff]
        %v1138 = vld [vmem:[%s948 + $0x9a] sm:$0x3f]
        %v1139 = vld [vmem:[%s948 + $0xaa] sm:$0xff]
        %v1140 = vld [vmem:[%s948 + $0xb2] sm:$0x3f]
        %v1141 = vld [vmem:[%s948 + $0xc2] sm:$0xff]
        %v1142 = vld [vmem:[%s948 + $0xca] sm:$0x3f]
        %v1143 = vld [vmem:[%s948 + $0xda] sm:$0xff]
        %v1144 = vld [vmem:[%s948 + $0xe2] sm:$0x3f]
        %v1145 = vld [vmem:[%s948 + $0xf2] sm:$0xff]
        %v1146 = vld [vmem:[%s948 + $0xfa] sm:$0x3f]
        %v1147 = vld [vmem:[%s948 + $0x10a] sm:$0xff]
        %v1148 = vld [vmem:[%s948 + $0x112] sm:$0x3f]
        %v1149 = vld [vmem:[%s948 + $0x122] sm:$0xff]
        %v1150 = vld [vmem:[%s948 + $0x12a] sm:$0x3f]
        %v1151 = vld [vmem:[%s948 + $0x13a] sm:$0xff]
        %v1152 = vld [vmem:[%s948 + $0x142] sm:$0x3f]
        %v1153 = vlaneseq
        %v1154 = vshrl.u32 %v1153, 7
        %v1155 = vsub.s32 7, %v1154
        %v1156 = vrot.slane %v532, %v1155
        %v1157 = vmul.f32 %v1125, %v1156
        %v1158 = vmul.f32 %v1126, %v1156
        %v1159 = vmul.f32 %v1127, %v1156
        %v1160 = vmul.f32 %v1128, %v1156
        %v1161 = vmul.f32 %v1129, %v1156
        %v1162 = vmul.f32 %v1130, %v1156
        %v1163 = vmul.f32 %v1131, %v1156
        %v1164 = vmul.f32 %v1132, %v1156
        %v1165 = vmul.f32 %v1133, %v1156
        %v1166 = vmul.f32 %v1134, %v1156
        %v1167 = vmul.f32 %v1135, %v1156
        %v1168 = vmul.f32 %v1136, %v1156
        %v1169 = vmul.f32 %v1137, %v1156
        %v1170 = vmul.f32 %v1138, %v1156
        %v1171 = vmul.f32 %v1139, %v1156
        %v1172 = vmul.f32 %v1140, %v1156
        %v1173 = vmul.f32 %v1141, %v1156
        %v1174 = vmul.f32 %v1142, %v1156
        %v1175 = vmul.f32 %v1143, %v1156
        %v1176 = vmul.f32 %v1144, %v1156
        %v1177 = vmul.f32 %v1145, %v1156
        %v1178 = vmul.f32 %v1146, %v1156
        %v1179 = vmul.f32 %v1147, %v1156
        %v1180 = vmul.f32 %v1148, %v1156
        %v1181 = vmul.f32 %v1149, %v1156
        %v1182 = vmul.f32 %v1150, %v1156
        %v1183 = vmul.f32 %v1151, %v1156
        %v1184 = vmul.f32 %v1152, %v1156
        %v1185 = vadd.f32 %v1097, %v1157
        %v1186 = vadd.f32 %v1098, %v1158
        %v1187 = vadd.f32 %v1099, %v1159
        %v1188 = vadd.f32 %v1100, %v1160
        %v1189 = vadd.f32 %v1101, %v1161
        %v1190 = vadd.f32 %v1102, %v1162
        %v1191 = vadd.f32 %v1103, %v1163
        %v1192 = vadd.f32 %v1104, %v1164
        %v1193 = vadd.f32 %v1105, %v1165
        %v1194 = vadd.f32 %v1106, %v1166
        %v1195 = vadd.f32 %v1107, %v1167
        %v1196 = vadd.f32 %v1108, %v1168
        %v1197 = vadd.f32 %v1109, %v1169
        %v1198 = vadd.f32 %v1110, %v1170
        %v1199 = vadd.f32 %v1111, %v1171
        %v1200 = vadd.f32 %v1112, %v1172
        %v1201 = vadd.f32 %v1113, %v1173
        %v1202 = vadd.f32 %v1114, %v1174
        %v1203 = vadd.f32 %v1115, %v1175
        %v1204 = vadd.f32 %v1116, %v1176
        %v1205 = vadd.f32 %v1117, %v1177
        %v1206 = vadd.f32 %v1118, %v1178
        %v1207 = vadd.f32 %v1119, %v1179
        %v1208 = vadd.f32 %v1120, %v1180
        %v1209 = vadd.f32 %v1121, %v1181
        %v1210 = vadd.f32 %v1122, %v1182
        %v1211 = vadd.f32 %v1123, %v1183
        %v1212 = vadd.f32 %v1124, %v1184
        %v1213 = vld [vmem:[%s948 + $0x3] sm:$0xff]
        %v1214 = vld [vmem:[%s948 + $0xb] sm:$0x3f]
        %v1215 = vld [vmem:[%s948 + $0x1b] sm:$0xff]
        %v1216 = vld [vmem:[%s948 + $0x23] sm:$0x3f]
        %v1217 = vld [vmem:[%s948 + $0x33] sm:$0xff]
        %v1218 = vld [vmem:[%s948 + $0x3b] sm:$0x3f]
        %v1219 = vld [vmem:[%s948 + $0x4b] sm:$0xff]
        %v1220 = vld [vmem:[%s948 + $0x53] sm:$0x3f]
        %v1221 = vld [vmem:[%s948 + $0x63] sm:$0xff]
        %v1222 = vld [vmem:[%s948 + $0x6b] sm:$0x3f]
        %v1223 = vld [vmem:[%s948 + $0x7b] sm:$0xff]
        %v1224 = vld [vmem:[%s948 + $0x83] sm:$0x3f]
        %v1225 = vld [vmem:[%s948 + $0x93] sm:$0xff]
        %v1226 = vld [vmem:[%s948 + $0x9b] sm:$0x3f]
        %v1227 = vld [vmem:[%s948 + $0xab] sm:$0xff]
        %v1228 = vld [vmem:[%s948 + $0xb3] sm:$0x3f]
        %v1229 = vld [vmem:[%s948 + $0xc3] sm:$0xff]
        %v1230 = vld [vmem:[%s948 + $0xcb] sm:$0x3f]
        %v1231 = vld [vmem:[%s948 + $0xdb] sm:$0xff]
        %v1232 = vld [vmem:[%s948 + $0xe3] sm:$0x3f]
        %v1233 = vld [vmem:[%s948 + $0xf3] sm:$0xff]
        %v1234 = vld [vmem:[%s948 + $0xfb] sm:$0x3f]
        %v1235 = vld [vmem:[%s948 + $0x10b] sm:$0xff]
        %v1236 = vld [vmem:[%s948 + $0x113] sm:$0x3f]
        %v1237 = vld [vmem:[%s948 + $0x123] sm:$0xff]
        %v1238 = vld [vmem:[%s948 + $0x12b] sm:$0x3f]
        %v1239 = vld [vmem:[%s948 + $0x13b] sm:$0xff]
        %v1240 = vld [vmem:[%s948 + $0x143] sm:$0x3f]
        %v1241 = vlaneseq
        %v1242 = vshrl.u32 %v1241, 7
        %v1243 = vsub.s32 0, %v1242
        %v1244 = vrot.slane %v533, %v1243
        %v1245 = vmul.f32 %v1213, %v1244
        %v1246 = vmul.f32 %v1214, %v1244
        %v1247 = vmul.f32 %v1215, %v1244
        %v1248 = vmul.f32 %v1216, %v1244
        %v1249 = vmul.f32 %v1217, %v1244
        %v1250 = vmul.f32 %v1218, %v1244
        %v1251 = vmul.f32 %v1219, %v1244
        %v1252 = vmul.f32 %v1220, %v1244
        %v1253 = vmul.f32 %v1221, %v1244
        %v1254 = vmul.f32 %v1222, %v1244
        %v1255 = vmul.f32 %v1223, %v1244
        %v1256 = vmul.f32 %v1224, %v1244
        %v1257 = vmul.f32 %v1225, %v1244
        %v1258 = vmul.f32 %v1226, %v1244
        %v1259 = vmul.f32 %v1227, %v1244
        %v1260 = vmul.f32 %v1228, %v1244
        %v1261 = vmul.f32 %v1229, %v1244
        %v1262 = vmul.f32 %v1230, %v1244
        %v1263 = vmul.f32 %v1231, %v1244
        %v1264 = vmul.f32 %v1232, %v1244
        %v1265 = vmul.f32 %v1233, %v1244
        %v1266 = vmul.f32 %v1234, %v1244
        %v1267 = vmul.f32 %v1235, %v1244
        %v1268 = vmul.f32 %v1236, %v1244
        %v1269 = vmul.f32 %v1237, %v1244
        %v1270 = vmul.f32 %v1238, %v1244
        %v1271 = vmul.f32 %v1239, %v1244
        %v1272 = vmul.f32 %v1240, %v1244
        %v1273 = vadd.f32 %v1185, %v1245
        %v1274 = vadd.f32 %v1186, %v1246
        %v1275 = vadd.f32 %v1187, %v1247
        %v1276 = vadd.f32 %v1188, %v1248
        %v1277 = vadd.f32 %v1189, %v1249
        %v1278 = vadd.f32 %v1190, %v1250
        %v1279 = vadd.f32 %v1191, %v1251
        %v1280 = vadd.f32 %v1192, %v1252
        %v1281 = vadd.f32 %v1193, %v1253
        %v1282 = vadd.f32 %v1194, %v1254
        %v1283 = vadd.f32 %v1195, %v1255
        %v1284 = vadd.f32 %v1196, %v1256
        %v1285 = vadd.f32 %v1197, %v1257
        %v1286 = vadd.f32 %v1198, %v1258
        %v1287 = vadd.f32 %v1199, %v1259
        %v1288 = vadd.f32 %v1200, %v1260
        %v1289 = vadd.f32 %v1201, %v1261
        %v1290 = vadd.f32 %v1202, %v1262
        %v1291 = vadd.f32 %v1203, %v1263
        %v1292 = vadd.f32 %v1204, %v1264
        %v1293 = vadd.f32 %v1205, %v1265
        %v1294 = vadd.f32 %v1206, %v1266
        %v1295 = vadd.f32 %v1207, %v1267
        %v1296 = vadd.f32 %v1208, %v1268
        %v1297 = vadd.f32 %v1209, %v1269
        %v1298 = vadd.f32 %v1210, %v1270
        %v1299 = vadd.f32 %v1211, %v1271
        %v1300 = vadd.f32 %v1212, %v1272
        %v1301 = vld [vmem:[%s948 + $0x4] sm:$0xff]
        %v1302 = vld [vmem:[%s948 + $0xc] sm:$0x3f]
        %v1303 = vld [vmem:[%s948 + $0x1c] sm:$0xff]
        %v1304 = vld [vmem:[%s948 + $0x24] sm:$0x3f]
        %v1305 = vld [vmem:[%s948 + $0x34] sm:$0xff]
        %v1306 = vld [vmem:[%s948 + $0x3c] sm:$0x3f]
        %v1307 = vld [vmem:[%s948 + $0x4c] sm:$0xff]
        %v1308 = vld [vmem:[%s948 + $0x54] sm:$0x3f]
        %v1309 = vld [vmem:[%s948 + $0x64] sm:$0xff]
        %v1310 = vld [vmem:[%s948 + $0x6c] sm:$0x3f]
        %v1311 = vld [vmem:[%s948 + $0x7c] sm:$0xff]
        %v1312 = vld [vmem:[%s948 + $0x84] sm:$0x3f]
        %v1313 = vld [vmem:[%s948 + $0x94] sm:$0xff]
        %v1314 = vld [vmem:[%s948 + $0x9c] sm:$0x3f]
        %v1315 = vld [vmem:[%s948 + $0xac] sm:$0xff]
        %v1316 = vld [vmem:[%s948 + $0xb4] sm:$0x3f]
        %v1317 = vld [vmem:[%s948 + $0xc4] sm:$0xff]
        %v1318 = vld [vmem:[%s948 + $0xcc] sm:$0x3f]
        %v1319 = vld [vmem:[%s948 + $0xdc] sm:$0xff]
        %v1320 = vld [vmem:[%s948 + $0xe4] sm:$0x3f]
        %v1321 = vld [vmem:[%s948 + $0xf4] sm:$0xff]
        %v1322 = vld [vmem:[%s948 + $0xfc] sm:$0x3f]
        %v1323 = vld [vmem:[%s948 + $0x10c] sm:$0xff]
        %v1324 = vld [vmem:[%s948 + $0x114] sm:$0x3f]
        %v1325 = vld [vmem:[%s948 + $0x124] sm:$0xff]
        %v1326 = vld [vmem:[%s948 + $0x12c] sm:$0x3f]
        %v1327 = vld [vmem:[%s948 + $0x13c] sm:$0xff]
        %v1328 = vld [vmem:[%s948 + $0x144] sm:$0x3f]
        %v1329 = vlaneseq
        %v1330 = vshrl.u32 %v1329, 7
        %v1331 = vsub.s32 1, %v1330
        %v1332 = vrot.slane %v533, %v1331
        %v1333 = vmul.f32 %v1301, %v1332
        %v1334 = vmul.f32 %v1302, %v1332
        %v1335 = vmul.f32 %v1303, %v1332
        %v1336 = vmul.f32 %v1304, %v1332
        %v1337 = vmul.f32 %v1305, %v1332
        %v1338 = vmul.f32 %v1306, %v1332
        %v1339 = vmul.f32 %v1307, %v1332
        %v1340 = vmul.f32 %v1308, %v1332
        %v1341 = vmul.f32 %v1309, %v1332
        %v1342 = vmul.f32 %v1310, %v1332
        %v1343 = vmul.f32 %v1311, %v1332
        %v1344 = vmul.f32 %v1312, %v1332
        %v1345 = vmul.f32 %v1313, %v1332
        %v1346 = vmul.f32 %v1314, %v1332
        %v1347 = vmul.f32 %v1315, %v1332
        %v1348 = vmul.f32 %v1316, %v1332
        %v1349 = vmul.f32 %v1317, %v1332
        %v1350 = vmul.f32 %v1318, %v1332
        %v1351 = vmul.f32 %v1319, %v1332
        %v1352 = vmul.f32 %v1320, %v1332
        %v1353 = vmul.f32 %v1321, %v1332
        %v1354 = vmul.f32 %v1322, %v1332
        %v1355 = vmul.f32 %v1323, %v1332
        %v1356 = vmul.f32 %v1324, %v1332
        %v1357 = vmul.f32 %v1325, %v1332
        %v1358 = vmul.f32 %v1326, %v1332
        %v1359 = vmul.f32 %v1327, %v1332
        %v1360 = vmul.f32 %v1328, %v1332
        %v1361 = vadd.f32 %v1273, %v1333
        %v1362 = vadd.f32 %v1274, %v1334
        %v1363 = vadd.f32 %v1275, %v1335
        %v1364 = vadd.f32 %v1276, %v1336
        %v1365 = vadd.f32 %v1277, %v1337
        %v1366 = vadd.f32 %v1278, %v1338
        %v1367 = vadd.f32 %v1279, %v1339
        %v1368 = vadd.f32 %v1280, %v1340
        %v1369 = vadd.f32 %v1281, %v1341
        %v1370 = vadd.f32 %v1282, %v1342
        %v1371 = vadd.f32 %v1283, %v1343
        %v1372 = vadd.f32 %v1284, %v1344
        %v1373 = vadd.f32 %v1285, %v1345
        %v1374 = vadd.f32 %v1286, %v1346
        %v1375 = vadd.f32 %v1287, %v1347
        %v1376 = vadd.f32 %v1288, %v1348
        %v1377 = vadd.f32 %v1289, %v1349
        %v1378 = vadd.f32 %v1290, %v1350
        %v1379 = vadd.f32 %v1291, %v1351
        %v1380 = vadd.f32 %v1292, %v1352
        %v1381 = vadd.f32 %v1293, %v1353
        %v1382 = vadd.f32 %v1294, %v1354
        %v1383 = vadd.f32 %v1295, %v1355
        %v1384 = vadd.f32 %v1296, %v1356
        %v1385 = vadd.f32 %v1297, %v1357
        %v1386 = vadd.f32 %v1298, %v1358
        %v1387 = vadd.f32 %v1299, %v1359
        %v1388 = vadd.f32 %v1300, %v1360
        %s1389 = scalar_lea.vmem %s487, 48 [#allocation2]
        %v1390 = vld [vmem:[%s1389] sm:$0xff]
        %v1391 = vld [vmem:[%s1389 + $0x8] sm:$0x3f]
        %v1392 = vld [vmem:[%s1389 + $0x18] sm:$0xff]
        %v1393 = vld [vmem:[%s1389 + $0x20] sm:$0x3f]
        %v1394 = vld [vmem:[%s1389 + $0x30] sm:$0xff]
        %v1395 = vld [vmem:[%s1389 + $0x38] sm:$0x3f]
        %v1396 = vld [vmem:[%s1389 + $0x48] sm:$0xff]
        %v1397 = vld [vmem:[%s1389 + $0x50] sm:$0x3f]
        %v1398 = vld [vmem:[%s1389 + $0x60] sm:$0xff]
        %v1399 = vld [vmem:[%s1389 + $0x68] sm:$0x3f]
        %v1400 = vld [vmem:[%s1389 + $0x78] sm:$0xff]
        %v1401 = vld [vmem:[%s1389 + $0x80] sm:$0x3f]
        %v1402 = vld [vmem:[%s1389 + $0x90] sm:$0xff]
        %v1403 = vld [vmem:[%s1389 + $0x98] sm:$0x3f]
        %v1404 = vld [vmem:[%s1389 + $0xa8] sm:$0xff]
        %v1405 = vld [vmem:[%s1389 + $0xb0] sm:$0x3f]
        %v1406 = vld [vmem:[%s1389 + $0xc0] sm:$0xff]
        %v1407 = vld [vmem:[%s1389 + $0xc8] sm:$0x3f]
        %v1408 = vld [vmem:[%s1389 + $0xd8] sm:$0xff]
        %v1409 = vld [vmem:[%s1389 + $0xe0] sm:$0x3f]
        %v1410 = vld [vmem:[%s1389 + $0xf0] sm:$0xff]
        %v1411 = vld [vmem:[%s1389 + $0xf8] sm:$0x3f]
        %v1412 = vld [vmem:[%s1389 + $0x108] sm:$0xff]
        %v1413 = vld [vmem:[%s1389 + $0x110] sm:$0x3f]
        %v1414 = vld [vmem:[%s1389 + $0x120] sm:$0xff]
        %v1415 = vld [vmem:[%s1389 + $0x128] sm:$0x3f]
        %v1416 = vld [vmem:[%s1389 + $0x138] sm:$0xff]
        %v1417 = vld [vmem:[%s1389 + $0x140] sm:$0x3f]
        %v1418 = vlaneseq
        %v1419 = vshrl.u32 %v1418, 7
        %v1420 = vsub.s32 2, %v1419
        %v1421 = vrot.slane %v533, %v1420
        %v1422 = vmul.f32 %v1390, %v1421
        %v1423 = vmul.f32 %v1391, %v1421
        %v1424 = vmul.f32 %v1392, %v1421
        %v1425 = vmul.f32 %v1393, %v1421
        %v1426 = vmul.f32 %v1394, %v1421
        %v1427 = vmul.f32 %v1395, %v1421
        %v1428 = vmul.f32 %v1396, %v1421
        %v1429 = vmul.f32 %v1397, %v1421
        %v1430 = vmul.f32 %v1398, %v1421
        %v1431 = vmul.f32 %v1399, %v1421
        %v1432 = vmul.f32 %v1400, %v1421
        %v1433 = vmul.f32 %v1401, %v1421
        %v1434 = vmul.f32 %v1402, %v1421
        %v1435 = vmul.f32 %v1403, %v1421
        %v1436 = vmul.f32 %v1404, %v1421
        %v1437 = vmul.f32 %v1405, %v1421
        %v1438 = vmul.f32 %v1406, %v1421
        %v1439 = vmul.f32 %v1407, %v1421
        %v1440 = vmul.f32 %v1408, %v1421
        %v1441 = vmul.f32 %v1409, %v1421
        %v1442 = vmul.f32 %v1410, %v1421
        %v1443 = vmul.f32 %v1411, %v1421
        %v1444 = vmul.f32 %v1412, %v1421
        %v1445 = vmul.f32 %v1413, %v1421
        %v1446 = vmul.f32 %v1414, %v1421
        %v1447 = vmul.f32 %v1415, %v1421
        %v1448 = vmul.f32 %v1416, %v1421
        %v1449 = vmul.f32 %v1417, %v1421
        %v1450 = vadd.f32 %v1361, %v1422
        %v1451 = vadd.f32 %v1362, %v1423
        %v1452 = vadd.f32 %v1363, %v1424
        %v1453 = vadd.f32 %v1364, %v1425
        %v1454 = vadd.f32 %v1365, %v1426
        %v1455 = vadd.f32 %v1366, %v1427
        %v1456 = vadd.f32 %v1367, %v1428
        %v1457 = vadd.f32 %v1368, %v1429
        %v1458 = vadd.f32 %v1369, %v1430
        %v1459 = vadd.f32 %v1370, %v1431
        %v1460 = vadd.f32 %v1371, %v1432
        %v1461 = vadd.f32 %v1372, %v1433
        %v1462 = vadd.f32 %v1373, %v1434
        %v1463 = vadd.f32 %v1374, %v1435
        %v1464 = vadd.f32 %v1375, %v1436
        %v1465 = vadd.f32 %v1376, %v1437
        %v1466 = vadd.f32 %v1377, %v1438
        %v1467 = vadd.f32 %v1378, %v1439
        %v1468 = vadd.f32 %v1379, %v1440
        %v1469 = vadd.f32 %v1380, %v1441
        %v1470 = vadd.f32 %v1381, %v1442
        %v1471 = vadd.f32 %v1382, %v1443
        %v1472 = vadd.f32 %v1383, %v1444
        %v1473 = vadd.f32 %v1384, %v1445
        %v1474 = vadd.f32 %v1385, %v1446
        %v1475 = vadd.f32 %v1386, %v1447
        %v1476 = vadd.f32 %v1387, %v1448
        %v1477 = vadd.f32 %v1388, %v1449
        %v1478 = vld [vmem:[%s1389 + $0x1] sm:$0xff]
        %v1479 = vld [vmem:[%s1389 + $0x9] sm:$0x3f]
        %v1480 = vld [vmem:[%s1389 + $0x19] sm:$0xff]
        %v1481 = vld [vmem:[%s1389 + $0x21] sm:$0x3f]
        %v1482 = vld [vmem:[%s1389 + $0x31] sm:$0xff]
        %v1483 = vld [vmem:[%s1389 + $0x39] sm:$0x3f]
        %v1484 = vld [vmem:[%s1389 + $0x49] sm:$0xff]
        %v1485 = vld [vmem:[%s1389 + $0x51] sm:$0x3f]
        %v1486 = vld [vmem:[%s1389 + $0x61] sm:$0xff]
        %v1487 = vld [vmem:[%s1389 + $0x69] sm:$0x3f]
        %v1488 = vld [vmem:[%s1389 + $0x79] sm:$0xff]
        %v1489 = vld [vmem:[%s1389 + $0x81] sm:$0x3f]
        %v1490 = vld [vmem:[%s1389 + $0x91] sm:$0xff]
        %v1491 = vld [vmem:[%s1389 + $0x99] sm:$0x3f]
        %v1492 = vld [vmem:[%s1389 + $0xa9] sm:$0xff]
        %v1493 = vld [vmem:[%s1389 + $0xb1] sm:$0x3f]
        %v1494 = vld [vmem:[%s1389 + $0xc1] sm:$0xff]
        %v1495 = vld [vmem:[%s1389 + $0xc9] sm:$0x3f]
        %v1496 = vld [vmem:[%s1389 + $0xd9] sm:$0xff]
        %v1497 = vld [vmem:[%s1389 + $0xe1] sm:$0x3f]
        %v1498 = vld [vmem:[%s1389 + $0xf1] sm:$0xff]
        %v1499 = vld [vmem:[%s1389 + $0xf9] sm:$0x3f]
        %v1500 = vld [vmem:[%s1389 + $0x109] sm:$0xff]
        %v1501 = vld [vmem:[%s1389 + $0x111] sm:$0x3f]
        %v1502 = vld [vmem:[%s1389 + $0x121] sm:$0xff]
        %v1503 = vld [vmem:[%s1389 + $0x129] sm:$0x3f]
        %v1504 = vld [vmem:[%s1389 + $0x139] sm:$0xff]
        %v1505 = vld [vmem:[%s1389 + $0x141] sm:$0x3f]
        %v1506 = vlaneseq
        %v1507 = vshrl.u32 %v1506, 7
        %v1508 = vsub.s32 3, %v1507
        %v1509 = vrot.slane %v533, %v1508
        %v1510 = vmul.f32 %v1478, %v1509
        %v1511 = vmul.f32 %v1479, %v1509
        %v1512 = vmul.f32 %v1480, %v1509
        %v1513 = vmul.f32 %v1481, %v1509
        %v1514 = vmul.f32 %v1482, %v1509
        %v1515 = vmul.f32 %v1483, %v1509
        %v1516 = vmul.f32 %v1484, %v1509
        %v1517 = vmul.f32 %v1485, %v1509
        %v1518 = vmul.f32 %v1486, %v1509
        %v1519 = vmul.f32 %v1487, %v1509
        %v1520 = vmul.f32 %v1488, %v1509
        %v1521 = vmul.f32 %v1489, %v1509
        %v1522 = vmul.f32 %v1490, %v1509
        %v1523 = vmul.f32 %v1491, %v1509
        %v1524 = vmul.f32 %v1492, %v1509
        %v1525 = vmul.f32 %v1493, %v1509
        %v1526 = vmul.f32 %v1494, %v1509
        %v1527 = vmul.f32 %v1495, %v1509
        %v1528 = vmul.f32 %v1496, %v1509
        %v1529 = vmul.f32 %v1497, %v1509
        %v1530 = vmul.f32 %v1498, %v1509
        %v1531 = vmul.f32 %v1499, %v1509
        %v1532 = vmul.f32 %v1500, %v1509
        %v1533 = vmul.f32 %v1501, %v1509
        %v1534 = vmul.f32 %v1502, %v1509
        %v1535 = vmul.f32 %v1503, %v1509
        %v1536 = vmul.f32 %v1504, %v1509
        %v1537 = vmul.f32 %v1505, %v1509
        %v1538 = vadd.f32 %v1450, %v1510
        %v1539 = vadd.f32 %v1451, %v1511
        %v1540 = vadd.f32 %v1452, %v1512
        %v1541 = vadd.f32 %v1453, %v1513
        %v1542 = vadd.f32 %v1454, %v1514
        %v1543 = vadd.f32 %v1455, %v1515
        %v1544 = vadd.f32 %v1456, %v1516
        %v1545 = vadd.f32 %v1457, %v1517
        %v1546 = vadd.f32 %v1458, %v1518
        %v1547 = vadd.f32 %v1459, %v1519
        %v1548 = vadd.f32 %v1460, %v1520
        %v1549 = vadd.f32 %v1461, %v1521
        %v1550 = vadd.f32 %v1462, %v1522
        %v1551 = vadd.f32 %v1463, %v1523
        %v1552 = vadd.f32 %v1464, %v1524
        %v1553 = vadd.f32 %v1465, %v1525
        %v1554 = vadd.f32 %v1466, %v1526
        %v1555 = vadd.f32 %v1467, %v1527
        %v1556 = vadd.f32 %v1468, %v1528
        %v1557 = vadd.f32 %v1469, %v1529
        %v1558 = vadd.f32 %v1470, %v1530
        %v1559 = vadd.f32 %v1471, %v1531
        %v1560 = vadd.f32 %v1472, %v1532
        %v1561 = vadd.f32 %v1473, %v1533
        %v1562 = vadd.f32 %v1474, %v1534
        %v1563 = vadd.f32 %v1475, %v1535
        %v1564 = vadd.f32 %v1476, %v1536
        %v1565 = vadd.f32 %v1477, %v1537
        %v1566 = vld [vmem:[%s1389 + $0x2] sm:$0xff]
        %v1567 = vld [vmem:[%s1389 + $0xa] sm:$0x3f]
        %v1568 = vld [vmem:[%s1389 + $0x1a] sm:$0xff]
        %v1569 = vld [vmem:[%s1389 + $0x22] sm:$0x3f]
        %v1570 = vld [vmem:[%s1389 + $0x32] sm:$0xff]
        %v1571 = vld [vmem:[%s1389 + $0x3a] sm:$0x3f]
        %v1572 = vld [vmem:[%s1389 + $0x4a] sm:$0xff]
        %v1573 = vld [vmem:[%s1389 + $0x52] sm:$0x3f]
        %v1574 = vld [vmem:[%s1389 + $0x62] sm:$0xff]
        %v1575 = vld [vmem:[%s1389 + $0x6a] sm:$0x3f]
        %v1576 = vld [vmem:[%s1389 + $0x7a] sm:$0xff]
        %v1577 = vld [vmem:[%s1389 + $0x82] sm:$0x3f]
        %v1578 = vld [vmem:[%s1389 + $0x92] sm:$0xff]
        %v1579 = vld [vmem:[%s1389 + $0x9a] sm:$0x3f]
        %v1580 = vld [vmem:[%s1389 + $0xaa] sm:$0xff]
        %v1581 = vld [vmem:[%s1389 + $0xb2] sm:$0x3f]
        %v1582 = vld [vmem:[%s1389 + $0xc2] sm:$0xff]
        %v1583 = vld [vmem:[%s1389 + $0xca] sm:$0x3f]
        %v1584 = vld [vmem:[%s1389 + $0xda] sm:$0xff]
        %v1585 = vld [vmem:[%s1389 + $0xe2] sm:$0x3f]
        %v1586 = vld [vmem:[%s1389 + $0xf2] sm:$0xff]
        %v1587 = vld [vmem:[%s1389 + $0xfa] sm:$0x3f]
        %v1588 = vld [vmem:[%s1389 + $0x10a] sm:$0xff]
        %v1589 = vld [vmem:[%s1389 + $0x112] sm:$0x3f]
        %v1590 = vld [vmem:[%s1389 + $0x122] sm:$0xff]
        %v1591 = vld [vmem:[%s1389 + $0x12a] sm:$0x3f]
        %v1592 = vld [vmem:[%s1389 + $0x13a] sm:$0xff]
        %v1593 = vld [vmem:[%s1389 + $0x142] sm:$0x3f]
        %v1594 = vlaneseq
        %v1595 = vshrl.u32 %v1594, 7
        %v1596 = vsub.s32 4, %v1595
        %v1597 = vrot.slane %v533, %v1596
        %v1598 = vmul.f32 %v1566, %v1597
        %v1599 = vmul.f32 %v1567, %v1597
        %v1600 = vmul.f32 %v1568, %v1597
        %v1601 = vmul.f32 %v1569, %v1597
        %v1602 = vmul.f32 %v1570, %v1597
        %v1603 = vmul.f32 %v1571, %v1597
        %v1604 = vmul.f32 %v1572, %v1597
        %v1605 = vmul.f32 %v1573, %v1597
        %v1606 = vmul.f32 %v1574, %v1597
        %v1607 = vmul.f32 %v1575, %v1597
        %v1608 = vmul.f32 %v1576, %v1597
        %v1609 = vmul.f32 %v1577, %v1597
        %v1610 = vmul.f32 %v1578, %v1597
        %v1611 = vmul.f32 %v1579, %v1597
        %v1612 = vmul.f32 %v1580, %v1597
        %v1613 = vmul.f32 %v1581, %v1597
        %v1614 = vmul.f32 %v1582, %v1597
        %v1615 = vmul.f32 %v1583, %v1597
        %v1616 = vmul.f32 %v1584, %v1597
        %v1617 = vmul.f32 %v1585, %v1597
        %v1618 = vmul.f32 %v1586, %v1597
        %v1619 = vmul.f32 %v1587, %v1597
        %v1620 = vmul.f32 %v1588, %v1597
        %v1621 = vmul.f32 %v1589, %v1597
        %v1622 = vmul.f32 %v1590, %v1597
        %v1623 = vmul.f32 %v1591, %v1597
        %v1624 = vmul.f32 %v1592, %v1597
        %v1625 = vmul.f32 %v1593, %v1597
        %v1626 = vadd.f32 %v1538, %v1598
        %v1627 = vadd.f32 %v1539, %v1599
        %v1628 = vadd.f32 %v1540, %v1600
        %v1629 = vadd.f32 %v1541, %v1601
        %v1630 = vadd.f32 %v1542, %v1602
        %v1631 = vadd.f32 %v1543, %v1603
        %v1632 = vadd.f32 %v1544, %v1604
        %v1633 = vadd.f32 %v1545, %v1605
        %v1634 = vadd.f32 %v1546, %v1606
        %v1635 = vadd.f32 %v1547, %v1607
        %v1636 = vadd.f32 %v1548, %v1608
        %v1637 = vadd.f32 %v1549, %v1609
        %v1638 = vadd.f32 %v1550, %v1610
        %v1639 = vadd.f32 %v1551, %v1611
        %v1640 = vadd.f32 %v1552, %v1612
        %v1641 = vadd.f32 %v1553, %v1613
        %v1642 = vadd.f32 %v1554, %v1614
        %v1643 = vadd.f32 %v1555, %v1615
        %v1644 = vadd.f32 %v1556, %v1616
        %v1645 = vadd.f32 %v1557, %v1617
        %v1646 = vadd.f32 %v1558, %v1618
        %v1647 = vadd.f32 %v1559, %v1619
        %v1648 = vadd.f32 %v1560, %v1620
        %v1649 = vadd.f32 %v1561, %v1621
        %v1650 = vadd.f32 %v1562, %v1622
        %v1651 = vadd.f32 %v1563, %v1623
        %v1652 = vadd.f32 %v1564, %v1624
        %v1653 = vadd.f32 %v1565, %v1625
        %v1654 = vld [vmem:[%s1389 + $0x3] sm:$0xff]
        %v1655 = vld [vmem:[%s1389 + $0xb] sm:$0x3f]
        %v1656 = vld [vmem:[%s1389 + $0x1b] sm:$0xff]
        %v1657 = vld [vmem:[%s1389 + $0x23] sm:$0x3f]
        %v1658 = vld [vmem:[%s1389 + $0x33] sm:$0xff]
        %v1659 = vld [vmem:[%s1389 + $0x3b] sm:$0x3f]
        %v1660 = vld [vmem:[%s1389 + $0x4b] sm:$0xff]
        %v1661 = vld [vmem:[%s1389 + $0x53] sm:$0x3f]
        %v1662 = vld [vmem:[%s1389 + $0x63] sm:$0xff]
        %v1663 = vld [vmem:[%s1389 + $0x6b] sm:$0x3f]
        %v1664 = vld [vmem:[%s1389 + $0x7b] sm:$0xff]
        %v1665 = vld [vmem:[%s1389 + $0x83] sm:$0x3f]
        %v1666 = vld [vmem:[%s1389 + $0x93] sm:$0xff]
        %v1667 = vld [vmem:[%s1389 + $0x9b] sm:$0x3f]
        %v1668 = vld [vmem:[%s1389 + $0xab] sm:$0xff]
        %v1669 = vld [vmem:[%s1389 + $0xb3] sm:$0x3f]
        %v1670 = vld [vmem:[%s1389 + $0xc3] sm:$0xff]
        %v1671 = vld [vmem:[%s1389 + $0xcb] sm:$0x3f]
        %v1672 = vld [vmem:[%s1389 + $0xdb] sm:$0xff]
        %v1673 = vld [vmem:[%s1389 + $0xe3] sm:$0x3f]
        %v1674 = vld [vmem:[%s1389 + $0xf3] sm:$0xff]
        %v1675 = vld [vmem:[%s1389 + $0xfb] sm:$0x3f]
        %v1676 = vld [vmem:[%s1389 + $0x10b] sm:$0xff]
        %v1677 = vld [vmem:[%s1389 + $0x113] sm:$0x3f]
        %v1678 = vld [vmem:[%s1389 + $0x123] sm:$0xff]
        %v1679 = vld [vmem:[%s1389 + $0x12b] sm:$0x3f]
        %v1680 = vld [vmem:[%s1389 + $0x13b] sm:$0xff]
        %v1681 = vld [vmem:[%s1389 + $0x143] sm:$0x3f]
        %v1682 = vlaneseq
        %v1683 = vshrl.u32 %v1682, 7
        %v1684 = vsub.s32 5, %v1683
        %v1685 = vrot.slane %v533, %v1684
        %v1686 = vmul.f32 %v1654, %v1685
        %v1687 = vmul.f32 %v1655, %v1685
        %v1688 = vmul.f32 %v1656, %v1685
        %v1689 = vmul.f32 %v1657, %v1685
        %v1690 = vmul.f32 %v1658, %v1685
        %v1691 = vmul.f32 %v1659, %v1685
        %v1692 = vmul.f32 %v1660, %v1685
        %v1693 = vmul.f32 %v1661, %v1685
        %v1694 = vmul.f32 %v1662, %v1685
        %v1695 = vmul.f32 %v1663, %v1685
        %v1696 = vmul.f32 %v1664, %v1685
        %v1697 = vmul.f32 %v1665, %v1685
        %v1698 = vmul.f32 %v1666, %v1685
        %v1699 = vmul.f32 %v1667, %v1685
        %v1700 = vmul.f32 %v1668, %v1685
        %v1701 = vmul.f32 %v1669, %v1685
        %v1702 = vmul.f32 %v1670, %v1685
        %v1703 = vmul.f32 %v1671, %v1685
        %v1704 = vmul.f32 %v1672, %v1685
        %v1705 = vmul.f32 %v1673, %v1685
        %v1706 = vmul.f32 %v1674, %v1685
        %v1707 = vmul.f32 %v1675, %v1685
        %v1708 = vmul.f32 %v1676, %v1685
        %v1709 = vmul.f32 %v1677, %v1685
        %v1710 = vmul.f32 %v1678, %v1685
        %v1711 = vmul.f32 %v1679, %v1685
        %v1712 = vmul.f32 %v1680, %v1685
        %v1713 = vmul.f32 %v1681, %v1685
        %v1714 = vadd.f32 %v1626, %v1686
        %v1715 = vadd.f32 %v1627, %v1687
        %v1716 = vadd.f32 %v1628, %v1688
        %v1717 = vadd.f32 %v1629, %v1689
        %v1718 = vadd.f32 %v1630, %v1690
        %v1719 = vadd.f32 %v1631, %v1691
        %v1720 = vadd.f32 %v1632, %v1692
        %v1721 = vadd.f32 %v1633, %v1693
        %v1722 = vadd.f32 %v1634, %v1694
        %v1723 = vadd.f32 %v1635, %v1695
        %v1724 = vadd.f32 %v1636, %v1696
        %v1725 = vadd.f32 %v1637, %v1697
        %v1726 = vadd.f32 %v1638, %v1698
        %v1727 = vadd.f32 %v1639, %v1699
        %v1728 = vadd.f32 %v1640, %v1700
        %v1729 = vadd.f32 %v1641, %v1701
        %v1730 = vadd.f32 %v1642, %v1702
        %v1731 = vadd.f32 %v1643, %v1703
        %v1732 = vadd.f32 %v1644, %v1704
        %v1733 = vadd.f32 %v1645, %v1705
        %v1734 = vadd.f32 %v1646, %v1706
        %v1735 = vadd.f32 %v1647, %v1707
        %v1736 = vadd.f32 %v1648, %v1708
        %v1737 = vadd.f32 %v1649, %v1709
        %v1738 = vadd.f32 %v1650, %v1710
        %v1739 = vadd.f32 %v1651, %v1711
        %v1740 = vadd.f32 %v1652, %v1712
        %v1741 = vadd.f32 %v1653, %v1713
        %v1742 = vld [vmem:[%s1389 + $0x4] sm:$0xff]
        %v1743 = vld [vmem:[%s1389 + $0xc] sm:$0x3f]
        %v1744 = vld [vmem:[%s1389 + $0x1c] sm:$0xff]
        %v1745 = vld [vmem:[%s1389 + $0x24] sm:$0x3f]
        %v1746 = vld [vmem:[%s1389 + $0x34] sm:$0xff]
        %v1747 = vld [vmem:[%s1389 + $0x3c] sm:$0x3f]
        %v1748 = vld [vmem:[%s1389 + $0x4c] sm:$0xff]
        %v1749 = vld [vmem:[%s1389 + $0x54] sm:$0x3f]
        %v1750 = vld [vmem:[%s1389 + $0x64] sm:$0xff]
        %v1751 = vld [vmem:[%s1389 + $0x6c] sm:$0x3f]
        %v1752 = vld [vmem:[%s1389 + $0x7c] sm:$0xff]
        %v1753 = vld [vmem:[%s1389 + $0x84] sm:$0x3f]
        %v1754 = vld [vmem:[%s1389 + $0x94] sm:$0xff]
        %v1755 = vld [vmem:[%s1389 + $0x9c] sm:$0x3f]
        %v1756 = vld [vmem:[%s1389 + $0xac] sm:$0xff]
        %v1757 = vld [vmem:[%s1389 + $0xb4] sm:$0x3f]
        %v1758 = vld [vmem:[%s1389 + $0xc4] sm:$0xff]
        %v1759 = vld [vmem:[%s1389 + $0xcc] sm:$0x3f]
        %v1760 = vld [vmem:[%s1389 + $0xdc] sm:$0xff]
        %v1761 = vld [vmem:[%s1389 + $0xe4] sm:$0x3f]
        %v1762 = vld [vmem:[%s1389 + $0xf4] sm:$0xff]
        %v1763 = vld [vmem:[%s1389 + $0xfc] sm:$0x3f]
        %v1764 = vld [vmem:[%s1389 + $0x10c] sm:$0xff]
        %v1765 = vld [vmem:[%s1389 + $0x114] sm:$0x3f]
        %v1766 = vld [vmem:[%s1389 + $0x124] sm:$0xff]
        %v1767 = vld [vmem:[%s1389 + $0x12c] sm:$0x3f]
        %v1768 = vld [vmem:[%s1389 + $0x13c] sm:$0xff]
        %v1769 = vld [vmem:[%s1389 + $0x144] sm:$0x3f]
        %v1770 = vlaneseq
        %v1771 = vshrl.u32 %v1770, 7
        %v1772 = vsub.s32 6, %v1771
        %v1773 = vrot.slane %v533, %v1772
        %v1774 = vmul.f32 %v1742, %v1773
        %v1775 = vmul.f32 %v1743, %v1773
        %v1776 = vmul.f32 %v1744, %v1773
        %v1777 = vmul.f32 %v1745, %v1773
        %v1778 = vmul.f32 %v1746, %v1773
        %v1779 = vmul.f32 %v1747, %v1773
        %v1780 = vmul.f32 %v1748, %v1773
        %v1781 = vmul.f32 %v1749, %v1773
        %v1782 = vmul.f32 %v1750, %v1773
        %v1783 = vmul.f32 %v1751, %v1773
        %v1784 = vmul.f32 %v1752, %v1773
        %v1785 = vmul.f32 %v1753, %v1773
        %v1786 = vmul.f32 %v1754, %v1773
        %v1787 = vmul.f32 %v1755, %v1773
        %v1788 = vmul.f32 %v1756, %v1773
        %v1789 = vmul.f32 %v1757, %v1773
        %v1790 = vmul.f32 %v1758, %v1773
        %v1791 = vmul.f32 %v1759, %v1773
        %v1792 = vmul.f32 %v1760, %v1773
        %v1793 = vmul.f32 %v1761, %v1773
        %v1794 = vmul.f32 %v1762, %v1773
        %v1795 = vmul.f32 %v1763, %v1773
        %v1796 = vmul.f32 %v1764, %v1773
        %v1797 = vmul.f32 %v1765, %v1773
        %v1798 = vmul.f32 %v1766, %v1773
        %v1799 = vmul.f32 %v1767, %v1773
        %v1800 = vmul.f32 %v1768, %v1773
        %v1801 = vmul.f32 %v1769, %v1773
        %v1802 = vadd.f32 %v1714, %v1774
        %v1803 = vadd.f32 %v1715, %v1775
        %v1804 = vadd.f32 %v1716, %v1776
        %v1805 = vadd.f32 %v1717, %v1777
        %v1806 = vadd.f32 %v1718, %v1778
        %v1807 = vadd.f32 %v1719, %v1779
        %v1808 = vadd.f32 %v1720, %v1780
        %v1809 = vadd.f32 %v1721, %v1781
        %v1810 = vadd.f32 %v1722, %v1782
        %v1811 = vadd.f32 %v1723, %v1783
        %v1812 = vadd.f32 %v1724, %v1784
        %v1813 = vadd.f32 %v1725, %v1785
        %v1814 = vadd.f32 %v1726, %v1786
        %v1815 = vadd.f32 %v1727, %v1787
        %v1816 = vadd.f32 %v1728, %v1788
        %v1817 = vadd.f32 %v1729, %v1789
        %v1818 = vadd.f32 %v1730, %v1790
        %v1819 = vadd.f32 %v1731, %v1791
        %v1820 = vadd.f32 %v1732, %v1792
        %v1821 = vadd.f32 %v1733, %v1793
        %v1822 = vadd.f32 %v1734, %v1794
        %v1823 = vadd.f32 %v1735, %v1795
        %v1824 = vadd.f32 %v1736, %v1796
        %v1825 = vadd.f32 %v1737, %v1797
        %v1826 = vadd.f32 %v1738, %v1798
        %v1827 = vadd.f32 %v1739, %v1799
        %v1828 = vadd.f32 %v1740, %v1800
        %v1829 = vadd.f32 %v1741, %v1801
        %s1830 = scalar_lea.vmem %s487, 72 [#allocation2]
        %v1831 = vld [vmem:[%s1830] sm:$0xff]
        %v1832 = vld [vmem:[%s1830 + $0x8] sm:$0x3f]
        %v1833 = vld [vmem:[%s1830 + $0x18] sm:$0xff]
        %v1834 = vld [vmem:[%s1830 + $0x20] sm:$0x3f]
        %v1835 = vld [vmem:[%s1830 + $0x30] sm:$0xff]
        %v1836 = vld [vmem:[%s1830 + $0x38] sm:$0x3f]
        %v1837 = vld [vmem:[%s1830 + $0x48] sm:$0xff]
        %v1838 = vld [vmem:[%s1830 + $0x50] sm:$0x3f]
        %v1839 = vld [vmem:[%s1830 + $0x60] sm:$0xff]
        %v1840 = vld [vmem:[%s1830 + $0x68] sm:$0x3f]
        %v1841 = vld [vmem:[%s1830 + $0x78] sm:$0xff]
        %v1842 = vld [vmem:[%s1830 + $0x80] sm:$0x3f]
        %v1843 = vld [vmem:[%s1830 + $0x90] sm:$0xff]
        %v1844 = vld [vmem:[%s1830 + $0x98] sm:$0x3f]
        %v1845 = vld [vmem:[%s1830 + $0xa8] sm:$0xff]
        %v1846 = vld [vmem:[%s1830 + $0xb0] sm:$0x3f]
        %v1847 = vld [vmem:[%s1830 + $0xc0] sm:$0xff]
        %v1848 = vld [vmem:[%s1830 + $0xc8] sm:$0x3f]
        %v1849 = vld [vmem:[%s1830 + $0xd8] sm:$0xff]
        %v1850 = vld [vmem:[%s1830 + $0xe0] sm:$0x3f]
        %v1851 = vld [vmem:[%s1830 + $0xf0] sm:$0xff]
        %v1852 = vld [vmem:[%s1830 + $0xf8] sm:$0x3f]
        %v1853 = vld [vmem:[%s1830 + $0x108] sm:$0xff]
        %v1854 = vld [vmem:[%s1830 + $0x110] sm:$0x3f]
        %v1855 = vld [vmem:[%s1830 + $0x120] sm:$0xff]
        %v1856 = vld [vmem:[%s1830 + $0x128] sm:$0x3f]
        %v1857 = vld [vmem:[%s1830 + $0x138] sm:$0xff]
        %v1858 = vld [vmem:[%s1830 + $0x140] sm:$0x3f]
        %v1859 = vlaneseq
        %v1860 = vshrl.u32 %v1859, 7
        %v1861 = vsub.s32 7, %v1860
        %v1862 = vrot.slane %v533, %v1861
        %v1863 = vmul.f32 %v1831, %v1862
        %v1864 = vmul.f32 %v1832, %v1862
        %v1865 = vmul.f32 %v1833, %v1862
        %v1866 = vmul.f32 %v1834, %v1862
        %v1867 = vmul.f32 %v1835, %v1862
        %v1868 = vmul.f32 %v1836, %v1862
        %v1869 = vmul.f32 %v1837, %v1862
        %v1870 = vmul.f32 %v1838, %v1862
        %v1871 = vmul.f32 %v1839, %v1862
        %v1872 = vmul.f32 %v1840, %v1862
        %v1873 = vmul.f32 %v1841, %v1862
        %v1874 = vmul.f32 %v1842, %v1862
        %v1875 = vmul.f32 %v1843, %v1862
        %v1876 = vmul.f32 %v1844, %v1862
        %v1877 = vmul.f32 %v1845, %v1862
        %v1878 = vmul.f32 %v1846, %v1862
        %v1879 = vmul.f32 %v1847, %v1862
        %v1880 = vmul.f32 %v1848, %v1862
        %v1881 = vmul.f32 %v1849, %v1862
        %v1882 = vmul.f32 %v1850, %v1862
        %v1883 = vmul.f32 %v1851, %v1862
        %v1884 = vmul.f32 %v1852, %v1862
        %v1885 = vmul.f32 %v1853, %v1862
        %v1886 = vmul.f32 %v1854, %v1862
        %v1887 = vmul.f32 %v1855, %v1862
        %v1888 = vmul.f32 %v1856, %v1862
        %v1889 = vmul.f32 %v1857, %v1862
        %v1890 = vmul.f32 %v1858, %v1862
        %v1891 = vadd.f32 %v1802, %v1863
        %v1892 = vadd.f32 %v1803, %v1864
        %v1893 = vadd.f32 %v1804, %v1865
        %v1894 = vadd.f32 %v1805, %v1866
        %v1895 = vadd.f32 %v1806, %v1867
        %v1896 = vadd.f32 %v1807, %v1868
        %v1897 = vadd.f32 %v1808, %v1869
        %v1898 = vadd.f32 %v1809, %v1870
        %v1899 = vadd.f32 %v1810, %v1871
        %v1900 = vadd.f32 %v1811, %v1872
        %v1901 = vadd.f32 %v1812, %v1873
        %v1902 = vadd.f32 %v1813, %v1874
        %v1903 = vadd.f32 %v1814, %v1875
        %v1904 = vadd.f32 %v1815, %v1876
        %v1905 = vadd.f32 %v1816, %v1877
        %v1906 = vadd.f32 %v1817, %v1878
        %v1907 = vadd.f32 %v1818, %v1879
        %v1908 = vadd.f32 %v1819, %v1880
        %v1909 = vadd.f32 %v1820, %v1881
        %v1910 = vadd.f32 %v1821, %v1882
        %v1911 = vadd.f32 %v1822, %v1883
        %v1912 = vadd.f32 %v1823, %v1884
        %v1913 = vadd.f32 %v1824, %v1885
        %v1914 = vadd.f32 %v1825, %v1886
        %v1915 = vadd.f32 %v1826, %v1887
        %v1916 = vadd.f32 %v1827, %v1888
        %v1917 = vadd.f32 %v1828, %v1889
        %v1918 = vadd.f32 %v1829, %v1890
        %v1919 = vld [vmem:[%s1830 + $0x1] sm:$0xff]
        %v1920 = vld [vmem:[%s1830 + $0x9] sm:$0x3f]
        %v1921 = vld [vmem:[%s1830 + $0x19] sm:$0xff]
        %v1922 = vld [vmem:[%s1830 + $0x21] sm:$0x3f]
        %v1923 = vld [vmem:[%s1830 + $0x31] sm:$0xff]
        %v1924 = vld [vmem:[%s1830 + $0x39] sm:$0x3f]
        %v1925 = vld [vmem:[%s1830 + $0x49] sm:$0xff]
        %v1926 = vld [vmem:[%s1830 + $0x51] sm:$0x3f]
        %v1927 = vld [vmem:[%s1830 + $0x61] sm:$0xff]
        %v1928 = vld [vmem:[%s1830 + $0x69] sm:$0x3f]
        %v1929 = vld [vmem:[%s1830 + $0x79] sm:$0xff]
        %v1930 = vld [vmem:[%s1830 + $0x81] sm:$0x3f]
        %v1931 = vld [vmem:[%s1830 + $0x91] sm:$0xff]
        %v1932 = vld [vmem:[%s1830 + $0x99] sm:$0x3f]
        %v1933 = vld [vmem:[%s1830 + $0xa9] sm:$0xff]
        %v1934 = vld [vmem:[%s1830 + $0xb1] sm:$0x3f]
        %v1935 = vld [vmem:[%s1830 + $0xc1] sm:$0xff]
        %v1936 = vld [vmem:[%s1830 + $0xc9] sm:$0x3f]
        %v1937 = vld [vmem:[%s1830 + $0xd9] sm:$0xff]
        %v1938 = vld [vmem:[%s1830 + $0xe1] sm:$0x3f]
        %v1939 = vld [vmem:[%s1830 + $0xf1] sm:$0xff]
        %v1940 = vld [vmem:[%s1830 + $0xf9] sm:$0x3f]
        %v1941 = vld [vmem:[%s1830 + $0x109] sm:$0xff]
        %v1942 = vld [vmem:[%s1830 + $0x111] sm:$0x3f]
        %v1943 = vld [vmem:[%s1830 + $0x121] sm:$0xff]
        %v1944 = vld [vmem:[%s1830 + $0x129] sm:$0x3f]
        %v1945 = vld [vmem:[%s1830 + $0x139] sm:$0xff]
        %v1946 = vld [vmem:[%s1830 + $0x141] sm:$0x3f]
        %v1947 = vlaneseq
        %v1948 = vshrl.u32 %v1947, 7
        %v1949 = vsub.s32 0, %v1948
        %v1950 = vrot.slane %v534, %v1949
        %v1951 = vmul.f32 %v1919, %v1950
        %v1952 = vmul.f32 %v1920, %v1950
        %v1953 = vmul.f32 %v1921, %v1950
        %v1954 = vmul.f32 %v1922, %v1950
        %v1955 = vmul.f32 %v1923, %v1950
        %v1956 = vmul.f32 %v1924, %v1950
        %v1957 = vmul.f32 %v1925, %v1950
        %v1958 = vmul.f32 %v1926, %v1950
        %v1959 = vmul.f32 %v1927, %v1950
        %v1960 = vmul.f32 %v1928, %v1950
        %v1961 = vmul.f32 %v1929, %v1950
        %v1962 = vmul.f32 %v1930, %v1950
        %v1963 = vmul.f32 %v1931, %v1950
        %v1964 = vmul.f32 %v1932, %v1950
        %v1965 = vmul.f32 %v1933, %v1950
        %v1966 = vmul.f32 %v1934, %v1950
        %v1967 = vmul.f32 %v1935, %v1950
        %v1968 = vmul.f32 %v1936, %v1950
        %v1969 = vmul.f32 %v1937, %v1950
        %v1970 = vmul.f32 %v1938, %v1950
        %v1971 = vmul.f32 %v1939, %v1950
        %v1972 = vmul.f32 %v1940, %v1950
        %v1973 = vmul.f32 %v1941, %v1950
        %v1974 = vmul.f32 %v1942, %v1950
        %v1975 = vmul.f32 %v1943, %v1950
        %v1976 = vmul.f32 %v1944, %v1950
        %v1977 = vmul.f32 %v1945, %v1950
        %v1978 = vmul.f32 %v1946, %v1950
        %v1979 = vadd.f32 %v1891, %v1951
        %v1980 = vadd.f32 %v1892, %v1952
        %v1981 = vadd.f32 %v1893, %v1953
        %v1982 = vadd.f32 %v1894, %v1954
        %v1983 = vadd.f32 %v1895, %v1955
        %v1984 = vadd.f32 %v1896, %v1956
        %v1985 = vadd.f32 %v1897, %v1957
        %v1986 = vadd.f32 %v1898, %v1958
        %v1987 = vadd.f32 %v1899, %v1959
        %v1988 = vadd.f32 %v1900, %v1960
        %v1989 = vadd.f32 %v1901, %v1961
        %v1990 = vadd.f32 %v1902, %v1962
        %v1991 = vadd.f32 %v1903, %v1963
        %v1992 = vadd.f32 %v1904, %v1964
        %v1993 = vadd.f32 %v1905, %v1965
        %v1994 = vadd.f32 %v1906, %v1966
        %v1995 = vadd.f32 %v1907, %v1967
        %v1996 = vadd.f32 %v1908, %v1968
        %v1997 = vadd.f32 %v1909, %v1969
        %v1998 = vadd.f32 %v1910, %v1970
        %v1999 = vadd.f32 %v1911, %v1971
        %v2000 = vadd.f32 %v1912, %v1972
        %v2001 = vadd.f32 %v1913, %v1973
        %v2002 = vadd.f32 %v1914, %v1974
        %v2003 = vadd.f32 %v1915, %v1975
        %v2004 = vadd.f32 %v1916, %v1976
        %v2005 = vadd.f32 %v1917, %v1977
        %v2006 = vadd.f32 %v1918, %v1978
        %v2007 = vld [vmem:[%s1830 + $0x2] sm:$0xff]
        %v2008 = vld [vmem:[%s1830 + $0xa] sm:$0x3f]
        %v2009 = vld [vmem:[%s1830 + $0x1a] sm:$0xff]
        %v2010 = vld [vmem:[%s1830 + $0x22] sm:$0x3f]
        %v2011 = vld [vmem:[%s1830 + $0x32] sm:$0xff]
        %v2012 = vld [vmem:[%s1830 + $0x3a] sm:$0x3f]
        %v2013 = vld [vmem:[%s1830 + $0x4a] sm:$0xff]
        %v2014 = vld [vmem:[%s1830 + $0x52] sm:$0x3f]
        %v2015 = vld [vmem:[%s1830 + $0x62] sm:$0xff]
        %v2016 = vld [vmem:[%s1830 + $0x6a] sm:$0x3f]
        %v2017 = vld [vmem:[%s1830 + $0x7a] sm:$0xff]
        %v2018 = vld [vmem:[%s1830 + $0x82] sm:$0x3f]
        %v2019 = vld [vmem:[%s1830 + $0x92] sm:$0xff]
        %v2020 = vld [vmem:[%s1830 + $0x9a] sm:$0x3f]
        %v2021 = vld [vmem:[%s1830 + $0xaa] sm:$0xff]
        %v2022 = vld [vmem:[%s1830 + $0xb2] sm:$0x3f]
        %v2023 = vld [vmem:[%s1830 + $0xc2] sm:$0xff]
        %v2024 = vld [vmem:[%s1830 + $0xca] sm:$0x3f]
        %v2025 = vld [vmem:[%s1830 + $0xda] sm:$0xff]
        %v2026 = vld [vmem:[%s1830 + $0xe2] sm:$0x3f]
        %v2027 = vld [vmem:[%s1830 + $0xf2] sm:$0xff]
        %v2028 = vld [vmem:[%s1830 + $0xfa] sm:$0x3f]
        %v2029 = vld [vmem:[%s1830 + $0x10a] sm:$0xff]
        %v2030 = vld [vmem:[%s1830 + $0x112] sm:$0x3f]
        %v2031 = vld [vmem:[%s1830 + $0x122] sm:$0xff]
        %v2032 = vld [vmem:[%s1830 + $0x12a] sm:$0x3f]
        %v2033 = vld [vmem:[%s1830 + $0x13a] sm:$0xff]
        %v2034 = vld [vmem:[%s1830 + $0x142] sm:$0x3f]
        %v2035 = vlaneseq
        %v2036 = vshrl.u32 %v2035, 7
        %v2037 = vsub.s32 1, %v2036
        %v2038 = vrot.slane %v534, %v2037
        %v2039 = vmul.f32 %v2007, %v2038
        %v2040 = vmul.f32 %v2008, %v2038
        %v2041 = vmul.f32 %v2009, %v2038
        %v2042 = vmul.f32 %v2010, %v2038
        %v2043 = vmul.f32 %v2011, %v2038
        %v2044 = vmul.f32 %v2012, %v2038
        %v2045 = vmul.f32 %v2013, %v2038
        %v2046 = vmul.f32 %v2014, %v2038
        %v2047 = vmul.f32 %v2015, %v2038
        %v2048 = vmul.f32 %v2016, %v2038
        %v2049 = vmul.f32 %v2017, %v2038
        %v2050 = vmul.f32 %v2018, %v2038
        %v2051 = vmul.f32 %v2019, %v2038
        %v2052 = vmul.f32 %v2020, %v2038
        %v2053 = vmul.f32 %v2021, %v2038
        %v2054 = vmul.f32 %v2022, %v2038
        %v2055 = vmul.f32 %v2023, %v2038
        %v2056 = vmul.f32 %v2024, %v2038
        %v2057 = vmul.f32 %v2025, %v2038
        %v2058 = vmul.f32 %v2026, %v2038
        %v2059 = vmul.f32 %v2027, %v2038
        %v2060 = vmul.f32 %v2028, %v2038
        %v2061 = vmul.f32 %v2029, %v2038
        %v2062 = vmul.f32 %v2030, %v2038
        %v2063 = vmul.f32 %v2031, %v2038
        %v2064 = vmul.f32 %v2032, %v2038
        %v2065 = vmul.f32 %v2033, %v2038
        %v2066 = vmul.f32 %v2034, %v2038
        %v2067 = vadd.f32 %v1979, %v2039
        %v2068 = vadd.f32 %v1980, %v2040
        %v2069 = vadd.f32 %v1981, %v2041
        %v2070 = vadd.f32 %v1982, %v2042
        %v2071 = vadd.f32 %v1983, %v2043
        %v2072 = vadd.f32 %v1984, %v2044
        %v2073 = vadd.f32 %v1985, %v2045
        %v2074 = vadd.f32 %v1986, %v2046
        %v2075 = vadd.f32 %v1987, %v2047
        %v2076 = vadd.f32 %v1988, %v2048
        %v2077 = vadd.f32 %v1989, %v2049
        %v2078 = vadd.f32 %v1990, %v2050
        %v2079 = vadd.f32 %v1991, %v2051
        %v2080 = vadd.f32 %v1992, %v2052
        %v2081 = vadd.f32 %v1993, %v2053
        %v2082 = vadd.f32 %v1994, %v2054
        %v2083 = vadd.f32 %v1995, %v2055
        %v2084 = vadd.f32 %v1996, %v2056
        %v2085 = vadd.f32 %v1997, %v2057
        %v2086 = vadd.f32 %v1998, %v2058
        %v2087 = vadd.f32 %v1999, %v2059
        %v2088 = vadd.f32 %v2000, %v2060
        %v2089 = vadd.f32 %v2001, %v2061
        %v2090 = vadd.f32 %v2002, %v2062
        %v2091 = vadd.f32 %v2003, %v2063
        %v2092 = vadd.f32 %v2004, %v2064
        %v2093 = vadd.f32 %v2005, %v2065
        %v2094 = vadd.f32 %v2006, %v2066
        %v2095 = vld [vmem:[%s1830 + $0x3] sm:$0xff]
        %v2096 = vld [vmem:[%s1830 + $0xb] sm:$0x3f]
        %v2097 = vld [vmem:[%s1830 + $0x1b] sm:$0xff]
        %v2098 = vld [vmem:[%s1830 + $0x23] sm:$0x3f]
        %v2099 = vld [vmem:[%s1830 + $0x33] sm:$0xff]
        %v2100 = vld [vmem:[%s1830 + $0x3b] sm:$0x3f]
        %v2101 = vld [vmem:[%s1830 + $0x4b] sm:$0xff]
        %v2102 = vld [vmem:[%s1830 + $0x53] sm:$0x3f]
        %v2103 = vld [vmem:[%s1830 + $0x63] sm:$0xff]
        %v2104 = vld [vmem:[%s1830 + $0x6b] sm:$0x3f]
        %v2105 = vld [vmem:[%s1830 + $0x7b] sm:$0xff]
        %v2106 = vld [vmem:[%s1830 + $0x83] sm:$0x3f]
        %v2107 = vld [vmem:[%s1830 + $0x93] sm:$0xff]
        %v2108 = vld [vmem:[%s1830 + $0x9b] sm:$0x3f]
        %v2109 = vld [vmem:[%s1830 + $0xab] sm:$0xff]
        %v2110 = vld [vmem:[%s1830 + $0xb3] sm:$0x3f]
        %v2111 = vld [vmem:[%s1830 + $0xc3] sm:$0xff]
        %v2112 = vld [vmem:[%s1830 + $0xcb] sm:$0x3f]
        %v2113 = vld [vmem:[%s1830 + $0xdb] sm:$0xff]
        %v2114 = vld [vmem:[%s1830 + $0xe3] sm:$0x3f]
        %v2115 = vld [vmem:[%s1830 + $0xf3] sm:$0xff]
        %v2116 = vld [vmem:[%s1830 + $0xfb] sm:$0x3f]
        %v2117 = vld [vmem:[%s1830 + $0x10b] sm:$0xff]
        %v2118 = vld [vmem:[%s1830 + $0x113] sm:$0x3f]
        %v2119 = vld [vmem:[%s1830 + $0x123] sm:$0xff]
        %v2120 = vld [vmem:[%s1830 + $0x12b] sm:$0x3f]
        %v2121 = vld [vmem:[%s1830 + $0x13b] sm:$0xff]
        %v2122 = vld [vmem:[%s1830 + $0x143] sm:$0x3f]
        %v2123 = vlaneseq
        %v2124 = vshrl.u32 %v2123, 7
        %v2125 = vsub.s32 2, %v2124
        %v2126 = vrot.slane %v534, %v2125
        %v2127 = vmul.f32 %v2095, %v2126
        %v2128 = vmul.f32 %v2096, %v2126
        %v2129 = vmul.f32 %v2097, %v2126
        %v2130 = vmul.f32 %v2098, %v2126
        %v2131 = vmul.f32 %v2099, %v2126
        %v2132 = vmul.f32 %v2100, %v2126
        %v2133 = vmul.f32 %v2101, %v2126
        %v2134 = vmul.f32 %v2102, %v2126
        %v2135 = vmul.f32 %v2103, %v2126
        %v2136 = vmul.f32 %v2104, %v2126
        %v2137 = vmul.f32 %v2105, %v2126
        %v2138 = vmul.f32 %v2106, %v2126
        %v2139 = vmul.f32 %v2107, %v2126
        %v2140 = vmul.f32 %v2108, %v2126
        %v2141 = vmul.f32 %v2109, %v2126
        %v2142 = vmul.f32 %v2110, %v2126
        %v2143 = vmul.f32 %v2111, %v2126
        %v2144 = vmul.f32 %v2112, %v2126
        %v2145 = vmul.f32 %v2113, %v2126
        %v2146 = vmul.f32 %v2114, %v2126
        %v2147 = vmul.f32 %v2115, %v2126
        %v2148 = vmul.f32 %v2116, %v2126
        %v2149 = vmul.f32 %v2117, %v2126
        %v2150 = vmul.f32 %v2118, %v2126
        %v2151 = vmul.f32 %v2119, %v2126
        %v2152 = vmul.f32 %v2120, %v2126
        %v2153 = vmul.f32 %v2121, %v2126
        %v2154 = vmul.f32 %v2122, %v2126
        %v2155 = vadd.f32 %v2067, %v2127
        %v2156 = vadd.f32 %v2068, %v2128
        %v2157 = vadd.f32 %v2069, %v2129
        %v2158 = vadd.f32 %v2070, %v2130
        %v2159 = vadd.f32 %v2071, %v2131
        %v2160 = vadd.f32 %v2072, %v2132
        %v2161 = vadd.f32 %v2073, %v2133
        %v2162 = vadd.f32 %v2074, %v2134
        %v2163 = vadd.f32 %v2075, %v2135
        %v2164 = vadd.f32 %v2076, %v2136
        %v2165 = vadd.f32 %v2077, %v2137
        %v2166 = vadd.f32 %v2078, %v2138
        %v2167 = vadd.f32 %v2079, %v2139
        %v2168 = vadd.f32 %v2080, %v2140
        %v2169 = vadd.f32 %v2081, %v2141
        %v2170 = vadd.f32 %v2082, %v2142
        %v2171 = vadd.f32 %v2083, %v2143
        %v2172 = vadd.f32 %v2084, %v2144
        %v2173 = vadd.f32 %v2085, %v2145
        %v2174 = vadd.f32 %v2086, %v2146
        %v2175 = vadd.f32 %v2087, %v2147
        %v2176 = vadd.f32 %v2088, %v2148
        %v2177 = vadd.f32 %v2089, %v2149
        %v2178 = vadd.f32 %v2090, %v2150
        %v2179 = vadd.f32 %v2091, %v2151
        %v2180 = vadd.f32 %v2092, %v2152
        %v2181 = vadd.f32 %v2093, %v2153
        %v2182 = vadd.f32 %v2094, %v2154
        %v2183 = vld [vmem:[%s1830 + $0x4] sm:$0xff]
        %v2184 = vld [vmem:[%s1830 + $0xc] sm:$0x3f]
        %v2185 = vld [vmem:[%s1830 + $0x1c] sm:$0xff]
        %v2186 = vld [vmem:[%s1830 + $0x24] sm:$0x3f]
        %v2187 = vld [vmem:[%s1830 + $0x34] sm:$0xff]
        %v2188 = vld [vmem:[%s1830 + $0x3c] sm:$0x3f]
        %v2189 = vld [vmem:[%s1830 + $0x4c] sm:$0xff]
        %v2190 = vld [vmem:[%s1830 + $0x54] sm:$0x3f]
        %v2191 = vld [vmem:[%s1830 + $0x64] sm:$0xff]
        %v2192 = vld [vmem:[%s1830 + $0x6c] sm:$0x3f]
        %v2193 = vld [vmem:[%s1830 + $0x7c] sm:$0xff]
        %v2194 = vld [vmem:[%s1830 + $0x84] sm:$0x3f]
        %v2195 = vld [vmem:[%s1830 + $0x94] sm:$0xff]
        %v2196 = vld [vmem:[%s1830 + $0x9c] sm:$0x3f]
        %v2197 = vld [vmem:[%s1830 + $0xac] sm:$0xff]
        %v2198 = vld [vmem:[%s1830 + $0xb4] sm:$0x3f]
        %v2199 = vld [vmem:[%s1830 + $0xc4] sm:$0xff]
        %v2200 = vld [vmem:[%s1830 + $0xcc] sm:$0x3f]
        %v2201 = vld [vmem:[%s1830 + $0xdc] sm:$0xff]
        %v2202 = vld [vmem:[%s1830 + $0xe4] sm:$0x3f]
        %v2203 = vld [vmem:[%s1830 + $0xf4] sm:$0xff]
        %v2204 = vld [vmem:[%s1830 + $0xfc] sm:$0x3f]
        %v2205 = vld [vmem:[%s1830 + $0x10c] sm:$0xff]
        %v2206 = vld [vmem:[%s1830 + $0x114] sm:$0x3f]
        %v2207 = vld [vmem:[%s1830 + $0x124] sm:$0xff]
        %v2208 = vld [vmem:[%s1830 + $0x12c] sm:$0x3f]
        %v2209 = vld [vmem:[%s1830 + $0x13c] sm:$0xff]
        %v2210 = vld [vmem:[%s1830 + $0x144] sm:$0x3f]
        %v2211 = vlaneseq
        %v2212 = vshrl.u32 %v2211, 7
        %v2213 = vsub.s32 3, %v2212
        %v2214 = vrot.slane %v534, %v2213
        %v2215 = vmul.f32 %v2183, %v2214
        %v2216 = vmul.f32 %v2184, %v2214
        %v2217 = vmul.f32 %v2185, %v2214
        %v2218 = vmul.f32 %v2186, %v2214
        %v2219 = vmul.f32 %v2187, %v2214
        %v2220 = vmul.f32 %v2188, %v2214
        %v2221 = vmul.f32 %v2189, %v2214
        %v2222 = vmul.f32 %v2190, %v2214
        %v2223 = vmul.f32 %v2191, %v2214
        %v2224 = vmul.f32 %v2192, %v2214
        %v2225 = vmul.f32 %v2193, %v2214
        %v2226 = vmul.f32 %v2194, %v2214
        %v2227 = vmul.f32 %v2195, %v2214
        %v2228 = vmul.f32 %v2196, %v2214
        %v2229 = vmul.f32 %v2197, %v2214
        %v2230 = vmul.f32 %v2198, %v2214
        %v2231 = vmul.f32 %v2199, %v2214
        %v2232 = vmul.f32 %v2200, %v2214
        %v2233 = vmul.f32 %v2201, %v2214
        %v2234 = vmul.f32 %v2202, %v2214
        %v2235 = vmul.f32 %v2203, %v2214
        %v2236 = vmul.f32 %v2204, %v2214
        %v2237 = vmul.f32 %v2205, %v2214
        %v2238 = vmul.f32 %v2206, %v2214
        %v2239 = vmul.f32 %v2207, %v2214
        %v2240 = vmul.f32 %v2208, %v2214
        %v2241 = vmul.f32 %v2209, %v2214
        %v2242 = vmul.f32 %v2210, %v2214
        %v2243 = vadd.f32 %v2155, %v2215
        %v2244 = vadd.f32 %v2156, %v2216
        %v2245 = vadd.f32 %v2157, %v2217
        %v2246 = vadd.f32 %v2158, %v2218
        %v2247 = vadd.f32 %v2159, %v2219
        %v2248 = vadd.f32 %v2160, %v2220
        %v2249 = vadd.f32 %v2161, %v2221
        %v2250 = vadd.f32 %v2162, %v2222
        %v2251 = vadd.f32 %v2163, %v2223
        %v2252 = vadd.f32 %v2164, %v2224
        %v2253 = vadd.f32 %v2165, %v2225
        %v2254 = vadd.f32 %v2166, %v2226
        %v2255 = vadd.f32 %v2167, %v2227
        %v2256 = vadd.f32 %v2168, %v2228
        %v2257 = vadd.f32 %v2169, %v2229
        %v2258 = vadd.f32 %v2170, %v2230
        %v2259 = vadd.f32 %v2171, %v2231
        %v2260 = vadd.f32 %v2172, %v2232
        %v2261 = vadd.f32 %v2173, %v2233
        %v2262 = vadd.f32 %v2174, %v2234
        %v2263 = vadd.f32 %v2175, %v2235
        %v2264 = vadd.f32 %v2176, %v2236
        %v2265 = vadd.f32 %v2177, %v2237
        %v2266 = vadd.f32 %v2178, %v2238
        %v2267 = vadd.f32 %v2179, %v2239
        %v2268 = vadd.f32 %v2180, %v2240
        %v2269 = vadd.f32 %v2181, %v2241
        %v2270 = vadd.f32 %v2182, %v2242
        %s2271 = scalar_lea.vmem %s487, 96 [#allocation2]
        %v2272 = vld [vmem:[%s2271] sm:$0xff]
        %v2273 = vld [vmem:[%s2271 + $0x8] sm:$0x3f]
        %v2274 = vld [vmem:[%s2271 + $0x18] sm:$0xff]
        %v2275 = vld [vmem:[%s2271 + $0x20] sm:$0x3f]
        %v2276 = vld [vmem:[%s2271 + $0x30] sm:$0xff]
        %v2277 = vld [vmem:[%s2271 + $0x38] sm:$0x3f]
        %v2278 = vld [vmem:[%s2271 + $0x48] sm:$0xff]
        %v2279 = vld [vmem:[%s2271 + $0x50] sm:$0x3f]
        %v2280 = vld [vmem:[%s2271 + $0x60] sm:$0xff]
        %v2281 = vld [vmem:[%s2271 + $0x68] sm:$0x3f]
        %v2282 = vld [vmem:[%s2271 + $0x78] sm:$0xff]
        %v2283 = vld [vmem:[%s2271 + $0x80] sm:$0x3f]
        %v2284 = vld [vmem:[%s2271 + $0x90] sm:$0xff]
        %v2285 = vld [vmem:[%s2271 + $0x98] sm:$0x3f]
        %v2286 = vld [vmem:[%s2271 + $0xa8] sm:$0xff]
        %v2287 = vld [vmem:[%s2271 + $0xb0] sm:$0x3f]
        %v2288 = vld [vmem:[%s2271 + $0xc0] sm:$0xff]
        %v2289 = vld [vmem:[%s2271 + $0xc8] sm:$0x3f]
        %v2290 = vld [vmem:[%s2271 + $0xd8] sm:$0xff]
        %v2291 = vld [vmem:[%s2271 + $0xe0] sm:$0x3f]
        %v2292 = vld [vmem:[%s2271 + $0xf0] sm:$0xff]
        %v2293 = vld [vmem:[%s2271 + $0xf8] sm:$0x3f]
        %v2294 = vld [vmem:[%s2271 + $0x108] sm:$0xff]
        %v2295 = vld [vmem:[%s2271 + $0x110] sm:$0x3f]
        %v2296 = vld [vmem:[%s2271 + $0x120] sm:$0xff]
        %v2297 = vld [vmem:[%s2271 + $0x128] sm:$0x3f]
        %v2298 = vld [vmem:[%s2271 + $0x138] sm:$0xff]
        %v2299 = vld [vmem:[%s2271 + $0x140] sm:$0x3f]
        %v2300 = vlaneseq
        %v2301 = vshrl.u32 %v2300, 7
        %v2302 = vsub.s32 4, %v2301
        %v2303 = vrot.slane %v534, %v2302
        %v2304 = vmul.f32 %v2272, %v2303
        %v2305 = vmul.f32 %v2273, %v2303
        %v2306 = vmul.f32 %v2274, %v2303
        %v2307 = vmul.f32 %v2275, %v2303
        %v2308 = vmul.f32 %v2276, %v2303
        %v2309 = vmul.f32 %v2277, %v2303
        %v2310 = vmul.f32 %v2278, %v2303
        %v2311 = vmul.f32 %v2279, %v2303
        %v2312 = vmul.f32 %v2280, %v2303
        %v2313 = vmul.f32 %v2281, %v2303
        %v2314 = vmul.f32 %v2282, %v2303
        %v2315 = vmul.f32 %v2283, %v2303
        %v2316 = vmul.f32 %v2284, %v2303
        %v2317 = vmul.f32 %v2285, %v2303
        %v2318 = vmul.f32 %v2286, %v2303
        %v2319 = vmul.f32 %v2287, %v2303
        %v2320 = vmul.f32 %v2288, %v2303
        %v2321 = vmul.f32 %v2289, %v2303
        %v2322 = vmul.f32 %v2290, %v2303
        %v2323 = vmul.f32 %v2291, %v2303
        %v2324 = vmul.f32 %v2292, %v2303
        %v2325 = vmul.f32 %v2293, %v2303
        %v2326 = vmul.f32 %v2294, %v2303
        %v2327 = vmul.f32 %v2295, %v2303
        %v2328 = vmul.f32 %v2296, %v2303
        %v2329 = vmul.f32 %v2297, %v2303
        %v2330 = vmul.f32 %v2298, %v2303
        %v2331 = vmul.f32 %v2299, %v2303
        %v2332 = vadd.f32 %v2243, %v2304
        %v2333 = vadd.f32 %v2244, %v2305
        %v2334 = vadd.f32 %v2245, %v2306
        %v2335 = vadd.f32 %v2246, %v2307
        %v2336 = vadd.f32 %v2247, %v2308
        %v2337 = vadd.f32 %v2248, %v2309
        %v2338 = vadd.f32 %v2249, %v2310
        %v2339 = vadd.f32 %v2250, %v2311
        %v2340 = vadd.f32 %v2251, %v2312
        %v2341 = vadd.f32 %v2252, %v2313
        %v2342 = vadd.f32 %v2253, %v2314
        %v2343 = vadd.f32 %v2254, %v2315
        %v2344 = vadd.f32 %v2255, %v2316
        %v2345 = vadd.f32 %v2256, %v2317
        %v2346 = vadd.f32 %v2257, %v2318
        %v2347 = vadd.f32 %v2258, %v2319
        %v2348 = vadd.f32 %v2259, %v2320
        %v2349 = vadd.f32 %v2260, %v2321
        %v2350 = vadd.f32 %v2261, %v2322
        %v2351 = vadd.f32 %v2262, %v2323
        %v2352 = vadd.f32 %v2263, %v2324
        %v2353 = vadd.f32 %v2264, %v2325
        %v2354 = vadd.f32 %v2265, %v2326
        %v2355 = vadd.f32 %v2266, %v2327
        %v2356 = vadd.f32 %v2267, %v2328
        %v2357 = vadd.f32 %v2268, %v2329
        %v2358 = vadd.f32 %v2269, %v2330
        %v2359 = vadd.f32 %v2270, %v2331
        %v2360 = vld [vmem:[%s2271 + $0x1] sm:$0xff]
        %v2361 = vld [vmem:[%s2271 + $0x9] sm:$0x3f]
        %v2362 = vld [vmem:[%s2271 + $0x19] sm:$0xff]
        %v2363 = vld [vmem:[%s2271 + $0x21] sm:$0x3f]
        %v2364 = vld [vmem:[%s2271 + $0x31] sm:$0xff]
        %v2365 = vld [vmem:[%s2271 + $0x39] sm:$0x3f]
        %v2366 = vld [vmem:[%s2271 + $0x49] sm:$0xff]
        %v2367 = vld [vmem:[%s2271 + $0x51] sm:$0x3f]
        %v2368 = vld [vmem:[%s2271 + $0x61] sm:$0xff]
        %v2369 = vld [vmem:[%s2271 + $0x69] sm:$0x3f]
        %v2370 = vld [vmem:[%s2271 + $0x79] sm:$0xff]
        %v2371 = vld [vmem:[%s2271 + $0x81] sm:$0x3f]
        %v2372 = vld [vmem:[%s2271 + $0x91] sm:$0xff]
        %v2373 = vld [vmem:[%s2271 + $0x99] sm:$0x3f]
        %v2374 = vld [vmem:[%s2271 + $0xa9] sm:$0xff]
        %v2375 = vld [vmem:[%s2271 + $0xb1] sm:$0x3f]
        %v2376 = vld [vmem:[%s2271 + $0xc1] sm:$0xff]
        %v2377 = vld [vmem:[%s2271 + $0xc9] sm:$0x3f]
        %v2378 = vld [vmem:[%s2271 + $0xd9] sm:$0xff]
        %v2379 = vld [vmem:[%s2271 + $0xe1] sm:$0x3f]
        %v2380 = vld [vmem:[%s2271 + $0xf1] sm:$0xff]
        %v2381 = vld [vmem:[%s2271 + $0xf9] sm:$0x3f]
        %v2382 = vld [vmem:[%s2271 + $0x109] sm:$0xff]
        %v2383 = vld [vmem:[%s2271 + $0x111] sm:$0x3f]
        %v2384 = vld [vmem:[%s2271 + $0x121] sm:$0xff]
        %v2385 = vld [vmem:[%s2271 + $0x129] sm:$0x3f]
        %v2386 = vld [vmem:[%s2271 + $0x139] sm:$0xff]
        %v2387 = vld [vmem:[%s2271 + $0x141] sm:$0x3f]
        %v2388 = vlaneseq
        %v2389 = vshrl.u32 %v2388, 7
        %v2390 = vsub.s32 5, %v2389
        %v2391 = vrot.slane %v534, %v2390
        %v2392 = vmul.f32 %v2360, %v2391
        %v2393 = vmul.f32 %v2361, %v2391
        %v2394 = vmul.f32 %v2362, %v2391
        %v2395 = vmul.f32 %v2363, %v2391
        %v2396 = vmul.f32 %v2364, %v2391
        %v2397 = vmul.f32 %v2365, %v2391
        %v2398 = vmul.f32 %v2366, %v2391
        %v2399 = vmul.f32 %v2367, %v2391
        %v2400 = vmul.f32 %v2368, %v2391
        %v2401 = vmul.f32 %v2369, %v2391
        %v2402 = vmul.f32 %v2370, %v2391
        %v2403 = vmul.f32 %v2371, %v2391
        %v2404 = vmul.f32 %v2372, %v2391
        %v2405 = vmul.f32 %v2373, %v2391
        %v2406 = vmul.f32 %v2374, %v2391
        %v2407 = vmul.f32 %v2375, %v2391
        %v2408 = vmul.f32 %v2376, %v2391
        %v2409 = vmul.f32 %v2377, %v2391
        %v2410 = vmul.f32 %v2378, %v2391
        %v2411 = vmul.f32 %v2379, %v2391
        %v2412 = vmul.f32 %v2380, %v2391
        %v2413 = vmul.f32 %v2381, %v2391
        %v2414 = vmul.f32 %v2382, %v2391
        %v2415 = vmul.f32 %v2383, %v2391
        %v2416 = vmul.f32 %v2384, %v2391
        %v2417 = vmul.f32 %v2385, %v2391
        %v2418 = vmul.f32 %v2386, %v2391
        %v2419 = vmul.f32 %v2387, %v2391
        %v2420 = vadd.f32 %v2332, %v2392
        %v2421 = vadd.f32 %v2333, %v2393
        %v2422 = vadd.f32 %v2334, %v2394
        %v2423 = vadd.f32 %v2335, %v2395
        %v2424 = vadd.f32 %v2336, %v2396
        %v2425 = vadd.f32 %v2337, %v2397
        %v2426 = vadd.f32 %v2338, %v2398
        %v2427 = vadd.f32 %v2339, %v2399
        %v2428 = vadd.f32 %v2340, %v2400
        %v2429 = vadd.f32 %v2341, %v2401
        %v2430 = vadd.f32 %v2342, %v2402
        %v2431 = vadd.f32 %v2343, %v2403
        %v2432 = vadd.f32 %v2344, %v2404
        %v2433 = vadd.f32 %v2345, %v2405
        %v2434 = vadd.f32 %v2346, %v2406
        %v2435 = vadd.f32 %v2347, %v2407
        %v2436 = vadd.f32 %v2348, %v2408
        %v2437 = vadd.f32 %v2349, %v2409
        %v2438 = vadd.f32 %v2350, %v2410
        %v2439 = vadd.f32 %v2351, %v2411
        %v2440 = vadd.f32 %v2352, %v2412
        %v2441 = vadd.f32 %v2353, %v2413
        %v2442 = vadd.f32 %v2354, %v2414
        %v2443 = vadd.f32 %v2355, %v2415
        %v2444 = vadd.f32 %v2356, %v2416
        %v2445 = vadd.f32 %v2357, %v2417
        %v2446 = vadd.f32 %v2358, %v2418
        %v2447 = vadd.f32 %v2359, %v2419
        %v2448 = vld [vmem:[%s2271 + $0x2] sm:$0xff]
        %v2449 = vld [vmem:[%s2271 + $0xa] sm:$0x3f]
        %v2450 = vld [vmem:[%s2271 + $0x1a] sm:$0xff]
        %v2451 = vld [vmem:[%s2271 + $0x22] sm:$0x3f]
        %v2452 = vld [vmem:[%s2271 + $0x32] sm:$0xff]
        %v2453 = vld [vmem:[%s2271 + $0x3a] sm:$0x3f]
        %v2454 = vld [vmem:[%s2271 + $0x4a] sm:$0xff]
        %v2455 = vld [vmem:[%s2271 + $0x52] sm:$0x3f]
        %v2456 = vld [vmem:[%s2271 + $0x62] sm:$0xff]
        %v2457 = vld [vmem:[%s2271 + $0x6a] sm:$0x3f]
        %v2458 = vld [vmem:[%s2271 + $0x7a] sm:$0xff]
        %v2459 = vld [vmem:[%s2271 + $0x82] sm:$0x3f]
        %v2460 = vld [vmem:[%s2271 + $0x92] sm:$0xff]
        %v2461 = vld [vmem:[%s2271 + $0x9a] sm:$0x3f]
        %v2462 = vld [vmem:[%s2271 + $0xaa] sm:$0xff]
        %v2463 = vld [vmem:[%s2271 + $0xb2] sm:$0x3f]
        %v2464 = vld [vmem:[%s2271 + $0xc2] sm:$0xff]
        %v2465 = vld [vmem:[%s2271 + $0xca] sm:$0x3f]
        %v2466 = vld [vmem:[%s2271 + $0xda] sm:$0xff]
        %v2467 = vld [vmem:[%s2271 + $0xe2] sm:$0x3f]
        %v2468 = vld [vmem:[%s2271 + $0xf2] sm:$0xff]
        %v2469 = vld [vmem:[%s2271 + $0xfa] sm:$0x3f]
        %v2470 = vld [vmem:[%s2271 + $0x10a] sm:$0xff]
        %v2471 = vld [vmem:[%s2271 + $0x112] sm:$0x3f]
        %v2472 = vld [vmem:[%s2271 + $0x122] sm:$0xff]
        %v2473 = vld [vmem:[%s2271 + $0x12a] sm:$0x3f]
        %v2474 = vld [vmem:[%s2271 + $0x13a] sm:$0xff]
        %v2475 = vld [vmem:[%s2271 + $0x142] sm:$0x3f]
        %v2476 = vlaneseq
        %v2477 = vshrl.u32 %v2476, 7
        %v2478 = vsub.s32 6, %v2477
        %v2479 = vrot.slane %v534, %v2478
        %v2480 = vmul.f32 %v2448, %v2479
        %v2481 = vmul.f32 %v2449, %v2479
        %v2482 = vmul.f32 %v2450, %v2479
        %v2483 = vmul.f32 %v2451, %v2479
        %v2484 = vmul.f32 %v2452, %v2479
        %v2485 = vmul.f32 %v2453, %v2479
        %v2486 = vmul.f32 %v2454, %v2479
        %v2487 = vmul.f32 %v2455, %v2479
        %v2488 = vmul.f32 %v2456, %v2479
        %v2489 = vmul.f32 %v2457, %v2479
        %v2490 = vmul.f32 %v2458, %v2479
        %v2491 = vmul.f32 %v2459, %v2479
        %v2492 = vmul.f32 %v2460, %v2479
        %v2493 = vmul.f32 %v2461, %v2479
        %v2494 = vmul.f32 %v2462, %v2479
        %v2495 = vmul.f32 %v2463, %v2479
        %v2496 = vmul.f32 %v2464, %v2479
        %v2497 = vmul.f32 %v2465, %v2479
        %v2498 = vmul.f32 %v2466, %v2479
        %v2499 = vmul.f32 %v2467, %v2479
        %v2500 = vmul.f32 %v2468, %v2479
        %v2501 = vmul.f32 %v2469, %v2479
        %v2502 = vmul.f32 %v2470, %v2479
        %v2503 = vmul.f32 %v2471, %v2479
        %v2504 = vmul.f32 %v2472, %v2479
        %v2505 = vmul.f32 %v2473, %v2479
        %v2506 = vmul.f32 %v2474, %v2479
        %v2507 = vmul.f32 %v2475, %v2479
        %v2508 = vadd.f32 %v2420, %v2480
        %v2509 = vadd.f32 %v2421, %v2481
        %v2510 = vadd.f32 %v2422, %v2482
        %v2511 = vadd.f32 %v2423, %v2483
        %v2512 = vadd.f32 %v2424, %v2484
        %v2513 = vadd.f32 %v2425, %v2485
        %v2514 = vadd.f32 %v2426, %v2486
        %v2515 = vadd.f32 %v2427, %v2487
        %v2516 = vadd.f32 %v2428, %v2488
        %v2517 = vadd.f32 %v2429, %v2489
        %v2518 = vadd.f32 %v2430, %v2490
        %v2519 = vadd.f32 %v2431, %v2491
        %v2520 = vadd.f32 %v2432, %v2492
        %v2521 = vadd.f32 %v2433, %v2493
        %v2522 = vadd.f32 %v2434, %v2494
        %v2523 = vadd.f32 %v2435, %v2495
        %v2524 = vadd.f32 %v2436, %v2496
        %v2525 = vadd.f32 %v2437, %v2497
        %v2526 = vadd.f32 %v2438, %v2498
        %v2527 = vadd.f32 %v2439, %v2499
        %v2528 = vadd.f32 %v2440, %v2500
        %v2529 = vadd.f32 %v2441, %v2501
        %v2530 = vadd.f32 %v2442, %v2502
        %v2531 = vadd.f32 %v2443, %v2503
        %v2532 = vadd.f32 %v2444, %v2504
        %v2533 = vadd.f32 %v2445, %v2505
        %v2534 = vadd.f32 %v2446, %v2506
        %v2535 = vadd.f32 %v2447, %v2507
        %v2536 = vld [vmem:[%s2271 + $0x3] sm:$0xff]
        %v2537 = vld [vmem:[%s2271 + $0xb] sm:$0x3f]
        %v2538 = vld [vmem:[%s2271 + $0x1b] sm:$0xff]
        %v2539 = vld [vmem:[%s2271 + $0x23] sm:$0x3f]
        %v2540 = vld [vmem:[%s2271 + $0x33] sm:$0xff]
        %v2541 = vld [vmem:[%s2271 + $0x3b] sm:$0x3f]
        %v2542 = vld [vmem:[%s2271 + $0x4b] sm:$0xff]
        %v2543 = vld [vmem:[%s2271 + $0x53] sm:$0x3f]
        %v2544 = vld [vmem:[%s2271 + $0x63] sm:$0xff]
        %v2545 = vld [vmem:[%s2271 + $0x6b] sm:$0x3f]
        %v2546 = vld [vmem:[%s2271 + $0x7b] sm:$0xff]
        %v2547 = vld [vmem:[%s2271 + $0x83] sm:$0x3f]
        %v2548 = vld [vmem:[%s2271 + $0x93] sm:$0xff]
        %v2549 = vld [vmem:[%s2271 + $0x9b] sm:$0x3f]
        %v2550 = vld [vmem:[%s2271 + $0xab] sm:$0xff]
        %v2551 = vld [vmem:[%s2271 + $0xb3] sm:$0x3f]
        %v2552 = vld [vmem:[%s2271 + $0xc3] sm:$0xff]
        %v2553 = vld [vmem:[%s2271 + $0xcb] sm:$0x3f]
        %v2554 = vld [vmem:[%s2271 + $0xdb] sm:$0xff]
        %v2555 = vld [vmem:[%s2271 + $0xe3] sm:$0x3f]
        %v2556 = vld [vmem:[%s2271 + $0xf3] sm:$0xff]
        %v2557 = vld [vmem:[%s2271 + $0xfb] sm:$0x3f]
        %v2558 = vld [vmem:[%s2271 + $0x10b] sm:$0xff]
        %v2559 = vld [vmem:[%s2271 + $0x113] sm:$0x3f]
        %v2560 = vld [vmem:[%s2271 + $0x123] sm:$0xff]
        %v2561 = vld [vmem:[%s2271 + $0x12b] sm:$0x3f]
        %v2562 = vld [vmem:[%s2271 + $0x13b] sm:$0xff]
        %v2563 = vld [vmem:[%s2271 + $0x143] sm:$0x3f]
        %v2564 = vlaneseq
        %v2565 = vshrl.u32 %v2564, 7
        %v2566 = vsub.s32 7, %v2565
        %v2567 = vrot.slane %v534, %v2566
        %v2568 = vmul.f32 %v2536, %v2567
        %v2569 = vmul.f32 %v2537, %v2567
        %v2570 = vmul.f32 %v2538, %v2567
        %v2571 = vmul.f32 %v2539, %v2567
        %v2572 = vmul.f32 %v2540, %v2567
        %v2573 = vmul.f32 %v2541, %v2567
        %v2574 = vmul.f32 %v2542, %v2567
        %v2575 = vmul.f32 %v2543, %v2567
        %v2576 = vmul.f32 %v2544, %v2567
        %v2577 = vmul.f32 %v2545, %v2567
        %v2578 = vmul.f32 %v2546, %v2567
        %v2579 = vmul.f32 %v2547, %v2567
        %v2580 = vmul.f32 %v2548, %v2567
        %v2581 = vmul.f32 %v2549, %v2567
        %v2582 = vmul.f32 %v2550, %v2567
        %v2583 = vmul.f32 %v2551, %v2567
        %v2584 = vmul.f32 %v2552, %v2567
        %v2585 = vmul.f32 %v2553, %v2567
        %v2586 = vmul.f32 %v2554, %v2567
        %v2587 = vmul.f32 %v2555, %v2567
        %v2588 = vmul.f32 %v2556, %v2567
        %v2589 = vmul.f32 %v2557, %v2567
        %v2590 = vmul.f32 %v2558, %v2567
        %v2591 = vmul.f32 %v2559, %v2567
        %v2592 = vmul.f32 %v2560, %v2567
        %v2593 = vmul.f32 %v2561, %v2567
        %v2594 = vmul.f32 %v2562, %v2567
        %v2595 = vmul.f32 %v2563, %v2567
        %v2596 = vadd.f32 %v2508, %v2568
        %v2597 = vadd.f32 %v2509, %v2569
        %v2598 = vadd.f32 %v2510, %v2570
        %v2599 = vadd.f32 %v2511, %v2571
        %v2600 = vadd.f32 %v2512, %v2572
        %v2601 = vadd.f32 %v2513, %v2573
        %v2602 = vadd.f32 %v2514, %v2574
        %v2603 = vadd.f32 %v2515, %v2575
        %v2604 = vadd.f32 %v2516, %v2576
        %v2605 = vadd.f32 %v2517, %v2577
        %v2606 = vadd.f32 %v2518, %v2578
        %v2607 = vadd.f32 %v2519, %v2579
        %v2608 = vadd.f32 %v2520, %v2580
        %v2609 = vadd.f32 %v2521, %v2581
        %v2610 = vadd.f32 %v2522, %v2582
        %v2611 = vadd.f32 %v2523, %v2583
        %v2612 = vadd.f32 %v2524, %v2584
        %v2613 = vadd.f32 %v2525, %v2585
        %v2614 = vadd.f32 %v2526, %v2586
        %v2615 = vadd.f32 %v2527, %v2587
        %v2616 = vadd.f32 %v2528, %v2588
        %v2617 = vadd.f32 %v2529, %v2589
        %v2618 = vadd.f32 %v2530, %v2590
        %v2619 = vadd.f32 %v2531, %v2591
        %v2620 = vadd.f32 %v2532, %v2592
        %v2621 = vadd.f32 %v2533, %v2593
        %v2622 = vadd.f32 %v2534, %v2594
        %v2623 = vadd.f32 %v2535, %v2595
        %v2624 = vld [vmem:[%s2271 + $0x4] sm:$0xff]
        %v2625 = vld [vmem:[%s2271 + $0xc] sm:$0x3f]
        %v2626 = vld [vmem:[%s2271 + $0x1c] sm:$0xff]
        %v2627 = vld [vmem:[%s2271 + $0x24] sm:$0x3f]
        %v2628 = vld [vmem:[%s2271 + $0x34] sm:$0xff]
        %v2629 = vld [vmem:[%s2271 + $0x3c] sm:$0x3f]
        %v2630 = vld [vmem:[%s2271 + $0x4c] sm:$0xff]
        %v2631 = vld [vmem:[%s2271 + $0x54] sm:$0x3f]
        %v2632 = vld [vmem:[%s2271 + $0x64] sm:$0xff]
        %v2633 = vld [vmem:[%s2271 + $0x6c] sm:$0x3f]
        %v2634 = vld [vmem:[%s2271 + $0x7c] sm:$0xff]
        %v2635 = vld [vmem:[%s2271 + $0x84] sm:$0x3f]
        %v2636 = vld [vmem:[%s2271 + $0x94] sm:$0xff]
        %v2637 = vld [vmem:[%s2271 + $0x9c] sm:$0x3f]
        %v2638 = vld [vmem:[%s2271 + $0xac] sm:$0xff]
        %v2639 = vld [vmem:[%s2271 + $0xb4] sm:$0x3f]
        %v2640 = vld [vmem:[%s2271 + $0xc4] sm:$0xff]
        %v2641 = vld [vmem:[%s2271 + $0xcc] sm:$0x3f]
        %v2642 = vld [vmem:[%s2271 + $0xdc] sm:$0xff]
        %v2643 = vld [vmem:[%s2271 + $0xe4] sm:$0x3f]
        %v2644 = vld [vmem:[%s2271 + $0xf4] sm:$0xff]
        %v2645 = vld [vmem:[%s2271 + $0xfc] sm:$0x3f]
        %v2646 = vld [vmem:[%s2271 + $0x10c] sm:$0xff]
        %v2647 = vld [vmem:[%s2271 + $0x114] sm:$0x3f]
        %v2648 = vld [vmem:[%s2271 + $0x124] sm:$0xff]
        %v2649 = vld [vmem:[%s2271 + $0x12c] sm:$0x3f]
        %v2650 = vld [vmem:[%s2271 + $0x13c] sm:$0xff]
        %v2651 = vld [vmem:[%s2271 + $0x144] sm:$0x3f]
        %v2652 = vlaneseq
        %v2653 = vshrl.u32 %v2652, 7
        %v2654 = vsub.s32 0, %v2653
        %v2655 = vrot.slane %v535, %v2654
        %v2656 = vmul.f32 %v2624, %v2655
        %v2657 = vmul.f32 %v2625, %v2655
        %v2658 = vmul.f32 %v2626, %v2655
        %v2659 = vmul.f32 %v2627, %v2655
        %v2660 = vmul.f32 %v2628, %v2655
        %v2661 = vmul.f32 %v2629, %v2655
        %v2662 = vmul.f32 %v2630, %v2655
        %v2663 = vmul.f32 %v2631, %v2655
        %v2664 = vmul.f32 %v2632, %v2655
        %v2665 = vmul.f32 %v2633, %v2655
        %v2666 = vmul.f32 %v2634, %v2655
        %v2667 = vmul.f32 %v2635, %v2655
        %v2668 = vmul.f32 %v2636, %v2655
        %v2669 = vmul.f32 %v2637, %v2655
        %v2670 = vmul.f32 %v2638, %v2655
        %v2671 = vmul.f32 %v2639, %v2655
        %v2672 = vmul.f32 %v2640, %v2655
        %v2673 = vmul.f32 %v2641, %v2655
        %v2674 = vmul.f32 %v2642, %v2655
        %v2675 = vmul.f32 %v2643, %v2655
        %v2676 = vmul.f32 %v2644, %v2655
        %v2677 = vmul.f32 %v2645, %v2655
        %v2678 = vmul.f32 %v2646, %v2655
        %v2679 = vmul.f32 %v2647, %v2655
        %v2680 = vmul.f32 %v2648, %v2655
        %v2681 = vmul.f32 %v2649, %v2655
        %v2682 = vmul.f32 %v2650, %v2655
        %v2683 = vmul.f32 %v2651, %v2655
        %v2684 = vadd.f32 %v2596, %v2656
        %v2685 = vadd.f32 %v2597, %v2657
        %v2686 = vadd.f32 %v2598, %v2658
        %v2687 = vadd.f32 %v2599, %v2659
        %v2688 = vadd.f32 %v2600, %v2660
        %v2689 = vadd.f32 %v2601, %v2661
        %v2690 = vadd.f32 %v2602, %v2662
        %v2691 = vadd.f32 %v2603, %v2663
        %v2692 = vadd.f32 %v2604, %v2664
        %v2693 = vadd.f32 %v2605, %v2665
        %v2694 = vadd.f32 %v2606, %v2666
        %v2695 = vadd.f32 %v2607, %v2667
        %v2696 = vadd.f32 %v2608, %v2668
        %v2697 = vadd.f32 %v2609, %v2669
        %v2698 = vadd.f32 %v2610, %v2670
        %v2699 = vadd.f32 %v2611, %v2671
        %v2700 = vadd.f32 %v2612, %v2672
        %v2701 = vadd.f32 %v2613, %v2673
        %v2702 = vadd.f32 %v2614, %v2674
        %v2703 = vadd.f32 %v2615, %v2675
        %v2704 = vadd.f32 %v2616, %v2676
        %v2705 = vadd.f32 %v2617, %v2677
        %v2706 = vadd.f32 %v2618, %v2678
        %v2707 = vadd.f32 %v2619, %v2679
        %v2708 = vadd.f32 %v2620, %v2680
        %v2709 = vadd.f32 %v2621, %v2681
        %v2710 = vadd.f32 %v2622, %v2682
        %v2711 = vadd.f32 %v2623, %v2683
        %vm2712 = vcmask 1045504
        %v2713 = vsel %vm2712, %v2685, 0.0
        %v2714 = vadd.f32 %v2684, %v2713
        %v2715 = vadd.f32 %v2714, %v2686
        %v2716 = vsel %vm2712, %v2687, 0.0
        %v2717 = vadd.f32 %v2715, %v2716
        %v2718 = vadd.f32 %v2717, %v2688
        %v2719 = vsel %vm2712, %v2689, 0.0
        %v2720 = vadd.f32 %v2718, %v2719
        %v2721 = vadd.f32 %v2720, %v2690
        %v2722 = vsel %vm2712, %v2691, 0.0
        %v2723 = vadd.f32 %v2721, %v2722
        %v2724 = vadd.f32 %v2723, %v2692
        %v2725 = vsel %vm2712, %v2693, 0.0
        %v2726 = vadd.f32 %v2724, %v2725
        %v2727 = vadd.f32 %v2726, %v2694
        %v2728 = vsel %vm2712, %v2695, 0.0
        %v2729 = vadd.f32 %v2727, %v2728
        %v2730 = vadd.f32 %v2729, %v2696
        %v2731 = vsel %vm2712, %v2697, 0.0
        %v2732 = vadd.f32 %v2730, %v2731
        %v2733 = vadd.f32 %v2732, %v2698
        %v2734 = vsel %vm2712, %v2699, 0.0
        %v2735 = vadd.f32 %v2733, %v2734
        %v2736 = vadd.f32 %v2735, %v2700
        %v2737 = vsel %vm2712, %v2701, 0.0
        %v2738 = vadd.f32 %v2736, %v2737
        %v2739 = vadd.f32 %v2738, %v2702
        %v2740 = vsel %vm2712, %v2703, 0.0
        %v2741 = vadd.f32 %v2739, %v2740
        %v2742 = vadd.f32 %v2741, %v2704
        %v2743 = vsel %vm2712, %v2705, 0.0
        %v2744 = vadd.f32 %v2742, %v2743
        %v2745 = vadd.f32 %v2744, %v2706
        %v2746 = vsel %vm2712, %v2707, 0.0
        %v2747 = vadd.f32 %v2745, %v2746
        %v2748 = vadd.f32 %v2747, %v2708
        %v2749 = vsel %vm2712, %v2709, 0.0
        %v2750 = vadd.f32 %v2748, %v2749
        %v2751 = vadd.f32 %v2750, %v2710
        %v2752 = vsel %vm2712, %v2711, 0.0
        %v2753 = vadd.f32 %v2751, %v2752
        %v2754 = vrot.slane %v2753, 4
        %v2755 = vadd.f32 %v2753, %v2754
        %v2756 = vrot.slane %v2755, 2
        %v2757 = vadd.f32 %v2755, %v2756
        %v2758 = vrot.slane %v2757, 1
        %v2759 = vadd.f32 %v2757, %v2758
        %v2760 = vrcp.pop 196.0
        %v2761 = vmul.f32 %v2759, %v2760
        %v2762 = vsub.f32 %v2684, %v2761
        %v2763 = vsub.f32 %v2685, %v2761
        %v2764 = vsub.f32 %v2686, %v2761
        %v2765 = vsub.f32 %v2687, %v2761
        %v2766 = vsub.f32 %v2688, %v2761
        %v2767 = vsub.f32 %v2689, %v2761
        %v2768 = vsub.f32 %v2690, %v2761
        %v2769 = vsub.f32 %v2691, %v2761
        %v2770 = vsub.f32 %v2692, %v2761
        %v2771 = vsub.f32 %v2693, %v2761
        %v2772 = vsub.f32 %v2694, %v2761
        %v2773 = vsub.f32 %v2695, %v2761
        %v2774 = vsub.f32 %v2696, %v2761
        %v2775 = vsub.f32 %v2697, %v2761
        %v2776 = vsub.f32 %v2698, %v2761
        %v2777 = vsub.f32 %v2699, %v2761
        %v2778 = vsub.f32 %v2700, %v2761
        %v2779 = vsub.f32 %v2701, %v2761
        %v2780 = vsub.f32 %v2702, %v2761
        %v2781 = vsub.f32 %v2703, %v2761
        %v2782 = vsub.f32 %v2704, %v2761
        %v2783 = vsub.f32 %v2705, %v2761
        %v2784 = vsub.f32 %v2706, %v2761
        %v2785 = vsub.f32 %v2707, %v2761
        %v2786 = vsub.f32 %v2708, %v2761
        %v2787 = vsub.f32 %v2709, %v2761
        %v2788 = vsub.f32 %v2710, %v2761
        %v2789 = vsub.f32 %v2711, %v2761
        %v2790 = vmul.f32 %v2762, %v2762
        %v2791 = vmul.f32 %v2763, %v2763
        %v2792 = vmul.f32 %v2764, %v2764
        %v2793 = vmul.f32 %v2765, %v2765
        %v2794 = vmul.f32 %v2766, %v2766
        %v2795 = vmul.f32 %v2767, %v2767
        %v2796 = vmul.f32 %v2768, %v2768
        %v2797 = vmul.f32 %v2769, %v2769
        %v2798 = vmul.f32 %v2770, %v2770
        %v2799 = vmul.f32 %v2771, %v2771
        %v2800 = vmul.f32 %v2772, %v2772
        %v2801 = vmul.f32 %v2773, %v2773
        %v2802 = vmul.f32 %v2774, %v2774
        %v2803 = vmul.f32 %v2775, %v2775
        %v2804 = vmul.f32 %v2776, %v2776
        %v2805 = vmul.f32 %v2777, %v2777
        %v2806 = vmul.f32 %v2778, %v2778
        %v2807 = vmul.f32 %v2779, %v2779
        %v2808 = vmul.f32 %v2780, %v2780
        %v2809 = vmul.f32 %v2781, %v2781
        %v2810 = vmul.f32 %v2782, %v2782
        %v2811 = vmul.f32 %v2783, %v2783
        %v2812 = vmul.f32 %v2784, %v2784
        %v2813 = vmul.f32 %v2785, %v2785
        %v2814 = vmul.f32 %v2786, %v2786
        %v2815 = vmul.f32 %v2787, %v2787
        %v2816 = vmul.f32 %v2788, %v2788
        %v2817 = vmul.f32 %v2789, %v2789
        %v2818 = vsel %vm2712, %v2791, 0.0
        %v2819 = vadd.f32 %v2790, %v2818
        %v2820 = vadd.f32 %v2819, %v2792
        %v2821 = vsel %vm2712, %v2793, 0.0
        %v2822 = vadd.f32 %v2820, %v2821
        %v2823 = vadd.f32 %v2822, %v2794
        %v2824 = vsel %vm2712, %v2795, 0.0
        %v2825 = vadd.f32 %v2823, %v2824
        %v2826 = vadd.f32 %v2825, %v2796
        %v2827 = vsel %vm2712, %v2797, 0.0
        %v2828 = vadd.f32 %v2826, %v2827
        %v2829 = vadd.f32 %v2828, %v2798
        %v2830 = vsel %vm2712, %v2799, 0.0
        %v2831 = vadd.f32 %v2829, %v2830
        %v2832 = vadd.f32 %v2831, %v2800
        %v2833 = vsel %vm2712, %v2801, 0.0
        %v2834 = vadd.f32 %v2832, %v2833
        %v2835 = vadd.f32 %v2834, %v2802
        %v2836 = vsel %vm2712, %v2803, 0.0
        %v2837 = vadd.f32 %v2835, %v2836
        %v2838 = vadd.f32 %v2837, %v2804
        %v2839 = vsel %vm2712, %v2805, 0.0
        %v2840 = vadd.f32 %v2838, %v2839
        %v2841 = vadd.f32 %v2840, %v2806
        %v2842 = vsel %vm2712, %v2807, 0.0
        %v2843 = vadd.f32 %v2841, %v2842
        %v2844 = vadd.f32 %v2843, %v2808
        %v2845 = vsel %vm2712, %v2809, 0.0
        %v2846 = vadd.f32 %v2844, %v2845
        %v2847 = vadd.f32 %v2846, %v2810
        %v2848 = vsel %vm2712, %v2811, 0.0
        %v2849 = vadd.f32 %v2847, %v2848
        %v2850 = vadd.f32 %v2849, %v2812
        %v2851 = vsel %vm2712, %v2813, 0.0
        %v2852 = vadd.f32 %v2850, %v2851
        %v2853 = vadd.f32 %v2852, %v2814
        %v2854 = vsel %vm2712, %v2815, 0.0
        %v2855 = vadd.f32 %v2853, %v2854
        %v2856 = vadd.f32 %v2855, %v2816
        %v2857 = vsel %vm2712, %v2817, 0.0
        %v2858 = vadd.f32 %v2856, %v2857
        %v2859 = vrot.slane %v2858, 4
        %v2860 = vadd.f32 %v2858, %v2859
        %v2861 = vrot.slane %v2860, 2
        %v2862 = vadd.f32 %v2860, %v2861
        %v2863 = vrot.slane %v2862, 1
        %v2864 = vadd.f32 %v2862, %v2863
        %v2865 = vmul.f32 %v2864, %v2760
        %v2866 = vadd.f32 %v2865, 0.001
        %v2867 = vrsqrt.pop %v2866
        %v2868 = vld [vmem:[%s528] sm:$0x1]
        %v2869 = vld [vmem:[%s531] sm:$0x1]
        %v2870 = vmul.f32 %v2868, %v2867
        %v2872 = vlaneseq
        %v2873 = vshrl.u32 %v2872, 7
        %v2874 = vsub.s32 0, %v2873
        %v2875 = vrot.slane %v2870, %v2874
        %v2877 = vmul.f32 %v2762, %v2875
        %v2878 = vmul.f32 %v2763, %v2875
        %v2879 = vmul.f32 %v2764, %v2875
        %v2880 = vmul.f32 %v2765, %v2875
        %v2881 = vmul.f32 %v2766, %v2875
        %v2882 = vmul.f32 %v2767, %v2875
        %v2883 = vmul.f32 %v2768, %v2875
        %v2884 = vmul.f32 %v2769, %v2875
        %v2885 = vmul.f32 %v2770, %v2875
        %v2886 = vmul.f32 %v2771, %v2875
        %v2887 = vmul.f32 %v2772, %v2875
        %v2888 = vmul.f32 %v2773, %v2875
        %v2889 = vmul.f32 %v2774, %v2875
        %v2890 = vmul.f32 %v2775, %v2875
        %v2891 = vmul.f32 %v2776, %v2875
        %v2892 = vmul.f32 %v2777, %v2875
        %v2893 = vmul.f32 %v2778, %v2875
        %v2894 = vmul.f32 %v2779, %v2875
        %v2895 = vmul.f32 %v2780, %v2875
        %v2896 = vmul.f32 %v2781, %v2875
        %v2897 = vmul.f32 %v2782, %v2875
        %v2898 = vmul.f32 %v2783, %v2875
        %v2899 = vmul.f32 %v2784, %v2875
        %v2900 = vmul.f32 %v2785, %v2875
        %v2901 = vmul.f32 %v2786, %v2875
        %v2902 = vmul.f32 %v2787, %v2875
        %v2903 = vmul.f32 %v2788, %v2875
        %v2904 = vmul.f32 %v2789, %v2875
        %v2906 = vlaneseq
        %v2907 = vshrl.u32 %v2906, 7
        %v2908 = vsub.s32 0, %v2907
        %v2909 = vrot.slane %v2869, %v2908
        %v2911 = vadd.f32 %v2877, %v2909
        %v2912 = vadd.f32 %v2878, %v2909
        %v2913 = vadd.f32 %v2879, %v2909
        %v2914 = vadd.f32 %v2880, %v2909
        %v2915 = vadd.f32 %v2881, %v2909
        %v2916 = vadd.f32 %v2882, %v2909
        %v2917 = vadd.f32 %v2883, %v2909
        %v2918 = vadd.f32 %v2884, %v2909
        %v2919 = vadd.f32 %v2885, %v2909
        %v2920 = vadd.f32 %v2886, %v2909
        %v2921 = vadd.f32 %v2887, %v2909
        %v2922 = vadd.f32 %v2888, %v2909
        %v2923 = vadd.f32 %v2889, %v2909
        %v2924 = vadd.f32 %v2890, %v2909
        %v2925 = vadd.f32 %v2891, %v2909
        %v2926 = vadd.f32 %v2892, %v2909
        %v2927 = vadd.f32 %v2893, %v2909
        %v2928 = vadd.f32 %v2894, %v2909
        %v2929 = vadd.f32 %v2895, %v2909
        %v2930 = vadd.f32 %v2896, %v2909
        %v2931 = vadd.f32 %v2897, %v2909
        %v2932 = vadd.f32 %v2898, %v2909
        %v2933 = vadd.f32 %v2899, %v2909
        %v2934 = vadd.f32 %v2900, %v2909
        %v2935 = vadd.f32 %v2901, %v2909
        %v2936 = vadd.f32 %v2902, %v2909
        %v2937 = vadd.f32 %v2903, %v2909
        %v2938 = vadd.f32 %v2904, %v2909
        %2939 = vst [vmem:[%s525] sm:$0xff] %v2911
        %2940 = vst [vmem:[%s525 + $0x8] sm:$0x3f] %v2912
        %2941 = vst [vmem:[%s525 + $0x10] sm:$0xff] %v2913
        %2942 = vst [vmem:[%s525 + $0x18] sm:$0x3f] %v2914
        %2943 = vst [vmem:[%s525 + $0x20] sm:$0xff] %v2915
        %2944 = vst [vmem:[%s525 + $0x28] sm:$0x3f] %v2916
        %2945 = vst [vmem:[%s525 + $0x30] sm:$0xff] %v2917
        %2946 = vst [vmem:[%s525 + $0x38] sm:$0x3f] %v2918
        %2947 = vst [vmem:[%s525 + $0x40] sm:$0xff] %v2919
        %2948 = vst [vmem:[%s525 + $0x48] sm:$0x3f] %v2920
        %2949 = vst [vmem:[%s525 + $0x50] sm:$0xff] %v2921
        %2950 = vst [vmem:[%s525 + $0x58] sm:$0x3f] %v2922
        %2951 = vst [vmem:[%s525 + $0x60] sm:$0xff] %v2923
        %2952 = vst [vmem:[%s525 + $0x68] sm:$0x3f] %v2924
        %2953 = vst [vmem:[%s525 + $0x70] sm:$0xff] %v2925
        %2954 = vst [vmem:[%s525 + $0x78] sm:$0x3f] %v2926
        %2955 = vst [vmem:[%s525 + $0x80] sm:$0xff] %v2927
        %2956 = vst [vmem:[%s525 + $0x88] sm:$0x3f] %v2928
        %2957 = vst [vmem:[%s525 + $0x90] sm:$0xff] %v2929
        %2958 = vst [vmem:[%s525 + $0x98] sm:$0x3f] %v2930
        %2959 = vst [vmem:[%s525 + $0xa0] sm:$0xff] %v2931
        %2960 = vst [vmem:[%s525 + $0xa8] sm:$0x3f] %v2932
        %2961 = vst [vmem:[%s525 + $0xb0] sm:$0xff] %v2933
        %2962 = vst [vmem:[%s525 + $0xb8] sm:$0x3f] %v2934
        %2963 = vst [vmem:[%s525 + $0xc0] sm:$0xff] %v2935
        %2964 = vst [vmem:[%s525 + $0xc8] sm:$0x3f] %v2936
        %2965 = vst [vmem:[%s525 + $0xd0] sm:$0xff] %v2937
        %2966 = vst [vmem:[%s525 + $0xd8] sm:$0x3f] %v2938
        %s2967 = sand.u32 %s127, 1
        %s2968 = sand.u32 %s127, 1
        %s2969 = smul.addr %s2968, 224
        %s2970 = scalar_lea.vmem [#allocation4], %s2969
        // Predicated region
        $region113: #{dwconv_bn.1} parent=103 // pred_check
          %p2971 = pneg %p137
        $region114: #{dwconv_bn.1} parent=103 // pred_check_branch
          %2973 = sbr.rel (%p2971) target = $region116
        $region115: #{dwconv_bn.1} parent=103 // pred_region
          %s2974 = smul.addr %s15, 8
          %s2975 = scalar_lea.vmem %s4, %s2974
          // Predicated region
          $region117: #{dwconv_bn.1} parent=115 // pred_check
            _
          $region118: #{dwconv_bn.1} parent=115 // pred_check_branch
            %2977 = sbr.rel (0) target = $region120
          $region119: #{dwconv_bn.1} parent=115 // pred_region
            // Predicated region
            $region121: #{dwconv_bn.1} parent=119 // pred_check
              _
            $region122: #{dwconv_bn.1} parent=119 // pred_check_branch
              %2979 = sbr.rel (0) target = $region124
            $region123: #{dwconv_bn.1} parent=119 // pred_region
              // Predicated region
              $region136: #{dwconv_bn.1} parent=123 // pred_check
                _
              $region137: #{dwconv_bn.1} parent=123 // pred_check_branch
                %3048 = sbr.rel (0) target = $region139
              $region138: #{dwconv_bn.1} parent=123 // pred_region
                loop: start=0, step=1, limit=1
                $region140: #{dwconv_bn.1} parent=138 // loop_pre_header
                  _
                $region141: #{dwconv_bn.1} parent=138 // loop_header
                  %s3050 = sphi 0, %s3054
                  %p3051 = scmp.ge.s32.totalorder %s3050, 1
                  %s3055 = sphi %s2970, %s2970
                  %s3056 = sphi %s2975, %s2975
                $region142: #{dwconv_bn.1} parent=138 // loop_header_branch
                  %3053 = sbr.rel (%p3051) target = $region146
                $region143: #{dwconv_bn.1} parent=138 // loop_body
                  %v3057 = vld [vmem:[%s3055] sm:$0xff]
                  %3058 = vst [vmem:[%s3056] sm:$0xff] %v3057
                  %v3059 = vld [vmem:[%s3055 + $0x8] sm:$0xff]
                  %3060 = vst [vmem:[%s3056 + $0x60] sm:$0xff] %v3059
                  %v3061 = vld [vmem:[%s3055 + $0x10] sm:$0xff]
                  %3062 = vst [vmem:[%s3056 + $0xc0] sm:$0xff] %v3061
                  %v3063 = vld [vmem:[%s3055 + $0x18] sm:$0xff]
                  %3064 = vst [vmem:[%s3056 + $0x120] sm:$0xff] %v3063
                  %v3065 = vld [vmem:[%s3055 + $0x20] sm:$0xff]
                  %3066 = vst [vmem:[%s3056 + $0x180] sm:$0xff] %v3065
                  %v3067 = vld [vmem:[%s3055 + $0x28] sm:$0xff]
                  %3068 = vst [vmem:[%s3056 + $0x1e0] sm:$0xff] %v3067
                  %v3069 = vld [vmem:[%s3055 + $0x30] sm:$0xff]
                  %3070 = vst [vmem:[%s3056 + $0x240] sm:$0xff] %v3069
                  %v3071 = vld [vmem:[%s3055 + $0x38] sm:$0xff]
                  %3072 = vst [vmem:[%s3056 + $0x2a0] sm:$0xff] %v3071
                  %v3073 = vld [vmem:[%s3055 + $0x40] sm:$0xff]
                  %3074 = vst [vmem:[%s3056 + $0x300] sm:$0xff] %v3073
                  %v3075 = vld [vmem:[%s3055 + $0x48] sm:$0xff]
                  %3076 = vst [vmem:[%s3056 + $0x360] sm:$0xff] %v3075
                  %v3077 = vld [vmem:[%s3055 + $0x50] sm:$0xff]
                  %3078 = vst [vmem:[%s3056 + $0x3c0] sm:$0xff] %v3077
                  %v3079 = vld [vmem:[%s3055 + $0x58] sm:$0xff]
                  %3080 = vst [vmem:[%s3056 + $0x420] sm:$0xff] %v3079
                  %v3081 = vld [vmem:[%s3055 + $0x60] sm:$0xff]
                  %3082 = vst [vmem:[%s3056 + $0x480] sm:$0xff] %v3081
                  %v3083 = vld [vmem:[%s3055 + $0x68] sm:$0xff]
                  %3084 = vst [vmem:[%s3056 + $0x4e0] sm:$0xff] %v3083
                  %v3085 = vld [vmem:[%s3055 + $0x70] sm:$0xff]
                  %3086 = vst [vmem:[%s3056 + $0x540] sm:$0xff] %v3085
                  %v3087 = vld [vmem:[%s3055 + $0x78] sm:$0xff]
                  %3088 = vst [vmem:[%s3056 + $0x5a0] sm:$0xff] %v3087
                  %v3089 = vld [vmem:[%s3055 + $0x80] sm:$0xff]
                  %3090 = vst [vmem:[%s3056 + $0x600] sm:$0xff] %v3089
                  %v3091 = vld [vmem:[%s3055 + $0x88] sm:$0xff]
                  %3092 = vst [vmem:[%s3056 + $0x660] sm:$0xff] %v3091
                  %v3093 = vld [vmem:[%s3055 + $0x90] sm:$0xff]
                  %3094 = vst [vmem:[%s3056 + $0x6c0] sm:$0xff] %v3093
                  %v3095 = vld [vmem:[%s3055 + $0x98] sm:$0xff]
                  %3096 = vst [vmem:[%s3056 + $0x720] sm:$0xff] %v3095
                  %v3097 = vld [vmem:[%s3055 + $0xa0] sm:$0xff]
                  %3098 = vst [vmem:[%s3056 + $0x780] sm:$0xff] %v3097
                  %v3099 = vld [vmem:[%s3055 + $0xa8] sm:$0xff]
                  %3100 = vst [vmem:[%s3056 + $0x7e0] sm:$0xff] %v3099
                  %v3101 = vld [vmem:[%s3055 + $0xb0] sm:$0xff]
                  %3102 = vst [vmem:[%s3056 + $0x840] sm:$0xff] %v3101
                  %v3103 = vld [vmem:[%s3055 + $0xb8] sm:$0xff]
                  %3104 = vst [vmem:[%s3056 + $0x8a0] sm:$0xff] %v3103
                  %v3105 = vld [vmem:[%s3055 + $0xc0] sm:$0xff]
                  %3106 = vst [vmem:[%s3056 + $0x900] sm:$0xff] %v3105
                  %v3107 = vld [vmem:[%s3055 + $0xc8] sm:$0xff]
                  %3108 = vst [vmem:[%s3056 + $0x960] sm:$0xff] %v3107
                  %v3109 = vld [vmem:[%s3055 + $0xd0] sm:$0xff]
                  %3110 = vst [vmem:[%s3056 + $0x9c0] sm:$0xff] %v3109
                  %v3111 = vld [vmem:[%s3055 + $0xd8] sm:$0xff]
                  %3112 = vst [vmem:[%s3056 + $0xa20] sm:$0xff] %v3111
                $region144: #{dwconv_bn.1} parent=138 // loop_footer
                  %s3054 = sadd.s32 1, %s3050
                $region145: #{dwconv_bn.1} parent=138 // loop_footer_branch
                  %3049 = sbr.rel target = $region141
                $region146: #{dwconv_bn.1} parent=138 // loop_exit
                  _
              $region139: #{dwconv_bn.1} parent=123 // pred_fallthru
                _
              // Predicated region
              $region147: #{dwconv_bn.1} parent=123 // pred_check
                _
              $region148: #{dwconv_bn.1} parent=123 // pred_check_branch
                %3114 = sbr.rel target = $region150
              $region149: #{dwconv_bn.1} parent=123 // pred_region
                _
              $region150: #{dwconv_bn.1} parent=123 // pred_fallthru
                _
            $region124: #{dwconv_bn.1} parent=119 // pred_fallthru
              _
            // Predicated region
            $region125: #{dwconv_bn.1} parent=119 // pred_check
              _
            $region126: #{dwconv_bn.1} parent=119 // pred_check_branch
              %2981 = sbr.rel target = $region128
            $region127: #{dwconv_bn.1} parent=119 // pred_region
              loop: start=0, step=1, limit=1
              $region129: #{dwconv_bn.1} parent=127 // loop_pre_header
                _
              $region130: #{dwconv_bn.1} parent=127 // loop_header
                %s2984 = sphi 0, %s2988
                %p2985 = scmp.ge.s32.totalorder %s2984, 1
                %s2989 = sphi %s2970, %s2970
                %s2990 = sphi %s2975, %s2975
              $region131: #{dwconv_bn.1} parent=127 // loop_header_branch
                %2987 = sbr.rel (%p2985) target = $region135
              $region132: #{dwconv_bn.1} parent=127 // loop_body
                %v2991 = vld [vmem:[%s2989] sm:$0xff]
                %2992 = vst [vmem:[%s2990] sm:$0xff] %v2991
                %v2993 = vld [vmem:[%s2989 + $0x8] sm:$0xff]
                %2994 = vst [vmem:[%s2990 + $0x60] sm:$0xff] %v2993
                %v2995 = vld [vmem:[%s2989 + $0x10] sm:$0xff]
                %2996 = vst [vmem:[%s2990 + $0xc0] sm:$0xff] %v2995
                %v2997 = vld [vmem:[%s2989 + $0x18] sm:$0xff]
                %2998 = vst [vmem:[%s2990 + $0x120] sm:$0xff] %v2997
                %v2999 = vld [vmem:[%s2989 + $0x20] sm:$0xff]
                %3000 = vst [vmem:[%s2990 + $0x180] sm:$0xff] %v2999
                %v3001 = vld [vmem:[%s2989 + $0x28] sm:$0xff]
                %3002 = vst [vmem:[%s2990 + $0x1e0] sm:$0xff] %v3001
                %v3003 = vld [vmem:[%s2989 + $0x30] sm:$0xff]
                %3004 = vst [vmem:[%s2990 + $0x240] sm:$0xff] %v3003
                %v3005 = vld [vmem:[%s2989 + $0x38] sm:$0xff]
                %3006 = vst [vmem:[%s2990 + $0x2a0] sm:$0xff] %v3005
                %v3007 = vld [vmem:[%s2989 + $0x40] sm:$0xff]
                %3008 = vst [vmem:[%s2990 + $0x300] sm:$0xff] %v3007
                %v3009 = vld [vmem:[%s2989 + $0x48] sm:$0xff]
                %3010 = vst [vmem:[%s2990 + $0x360] sm:$0xff] %v3009
                %v3011 = vld [vmem:[%s2989 + $0x50] sm:$0xff]
                %3012 = vst [vmem:[%s2990 + $0x3c0] sm:$0xff] %v3011
                %v3013 = vld [vmem:[%s2989 + $0x58] sm:$0xff]
                %3014 = vst [vmem:[%s2990 + $0x420] sm:$0xff] %v3013
                %v3015 = vld [vmem:[%s2989 + $0x60] sm:$0xff]
                %3016 = vst [vmem:[%s2990 + $0x480] sm:$0xff] %v3015
                %v3017 = vld [vmem:[%s2989 + $0x68] sm:$0xff]
                %3018 = vst [vmem:[%s2990 + $0x4e0] sm:$0xff] %v3017
                %v3019 = vld [vmem:[%s2989 + $0x70] sm:$0xff]
                %3020 = vst [vmem:[%s2990 + $0x540] sm:$0xff] %v3019
                %v3021 = vld [vmem:[%s2989 + $0x78] sm:$0xff]
                %3022 = vst [vmem:[%s2990 + $0x5a0] sm:$0xff] %v3021
                %v3023 = vld [vmem:[%s2989 + $0x80] sm:$0xff]
                %3024 = vst [vmem:[%s2990 + $0x600] sm:$0xff] %v3023
                %v3025 = vld [vmem:[%s2989 + $0x88] sm:$0xff]
                %3026 = vst [vmem:[%s2990 + $0x660] sm:$0xff] %v3025
                %v3027 = vld [vmem:[%s2989 + $0x90] sm:$0xff]
                %3028 = vst [vmem:[%s2990 + $0x6c0] sm:$0xff] %v3027
                %v3029 = vld [vmem:[%s2989 + $0x98] sm:$0xff]
                %3030 = vst [vmem:[%s2990 + $0x720] sm:$0xff] %v3029
                %v3031 = vld [vmem:[%s2989 + $0xa0] sm:$0xff]
                %3032 = vst [vmem:[%s2990 + $0x780] sm:$0xff] %v3031
                %v3033 = vld [vmem:[%s2989 + $0xa8] sm:$0xff]
                %3034 = vst [vmem:[%s2990 + $0x7e0] sm:$0xff] %v3033
                %v3035 = vld [vmem:[%s2989 + $0xb0] sm:$0xff]
                %3036 = vst [vmem:[%s2990 + $0x840] sm:$0xff] %v3035
                %v3037 = vld [vmem:[%s2989 + $0xb8] sm:$0xff]
                %3038 = vst [vmem:[%s2990 + $0x8a0] sm:$0xff] %v3037
                %v3039 = vld [vmem:[%s2989 + $0xc0] sm:$0xff]
                %3040 = vst [vmem:[%s2990 + $0x900] sm:$0xff] %v3039
                %v3041 = vld [vmem:[%s2989 + $0xc8] sm:$0xff]
                %3042 = vst [vmem:[%s2990 + $0x960] sm:$0xff] %v3041
                %v3043 = vld [vmem:[%s2989 + $0xd0] sm:$0xff]
                %3044 = vst [vmem:[%s2990 + $0x9c0] sm:$0xff] %v3043
                %v3045 = vld [vmem:[%s2989 + $0xd8] sm:$0xff]
                %3046 = vst [vmem:[%s2990 + $0xa20] sm:$0xff] %v3045
              $region133: #{dwconv_bn.1} parent=127 // loop_footer
                %s2988 = sadd.s32 1, %s2984
              $region134: #{dwconv_bn.1} parent=127 // loop_footer_branch
                %2983 = sbr.rel target = $region130
              $region135: #{dwconv_bn.1} parent=127 // loop_exit
                _
            $region128: #{dwconv_bn.1} parent=119 // pred_fallthru
              _
          $region120: #{dwconv_bn.1} parent=115 // pred_fallthru
            _
          %3115 = vnop
        $region116: #{dwconv_bn.1} parent=103 // pred_fallthru
          _
      $region104: #{dwconv_bn.1} parent=5 // pred_fallthru
        _
      %p3116 = scmp.le.s32.totalorder 2, %s10
      // Predicated region
      $region151: #{dwconv_bn.1} parent=5 // pred_check
        %p3117 = pneg %p3116
      $region152: #{dwconv_bn.1} parent=5 // pred_check_branch
        %3119 = sbr.rel (%p3117) target = $region154
      $region153: #{dwconv_bn.1} parent=5 // pred_region
        %s3120 = ssub.s32 %s10, 2
        // Predicated region
        $region155: #{dwconv_bn.1} parent=153 // pred_check
          %p3121 = pneg %p143
        $region156: #{dwconv_bn.1} parent=153 // pred_check_branch
          %3123 = sbr.rel (%p3121) target = $region158
        $region157: #{dwconv_bn.1} parent=153 // pred_region
          %s3124 = sand.u32 %s128, 1
          %s3125 = sand.u32 %s128, 1
          %s3126 = smul.addr %s3125, 224
          %s3127 = scalar_lea.vmem [#allocation4], %s3126
        $region158: #{dwconv_bn.1} parent=153 // pred_fallthru
          _
      $region154: #{dwconv_bn.1} parent=5 // pred_fallthru
        _
    $region6: #{dwconv_bn.1} parent=1 // loop_footer
      %s14 = sadd.s32 1, %s10
    $region7: #{dwconv_bn.1} parent=1 // loop_footer_branch
      %9 = sbr.rel target = $region3
    $region8: #{dwconv_bn.1} parent=1 // loop_exit
      _

</llo_original>
